<compile_context>
chip_gen: v5e
topology: v5e:2x2
jax: 0.10.0
libtpu: 0.0.40
codegen_flags: <defaults>
</compile_context>

<pallas_src>
import functools

import jax
import jax.numpy as jnp
import numpy as np
from jax.experimental import pallas as pl
from jax.experimental.pallas import tpu as pltpu


def get_conv_output_dim(I, K, P, S):
    return int((I - K + 2 * P) / float(S) + 1)


def gen_32_conv_output_dim(s):
    for _ in range(3):
        s = get_conv_output_dim(s, 2, 0, 2)
    return s


def _resident(shape):
    """BlockSpec for a weight that stays resident in VMEM across all grid steps."""
    nd = len(shape)
    return pl.BlockSpec(shape, lambda b: (0,) * nd)


# ---------------------------------------------------------------------------
# Kernel 1: encoder (3 convs) + fc_latents + reparametrize + decoder fc
# ---------------------------------------------------------------------------

def _encoder_latents_kernel(p1_ref, eps_ref,
                            w1_ref, b1_ref, w2_ref, b2_ref, w3_ref, b3_ref,
                            wl_ref, bl_ref, wd_ref, bd_ref,
                            zp_ref, z_ref, d0_ref,
                            *, z_dim):
    f32 = jnp.float32
    bf16 = jnp.bfloat16

    x = p1_ref[0]                                     # (R1, 4*Cin) bf16 patches
    n1 = w1_ref.shape[1]                              # nf
    n2 = w2_ref.shape[1]                              # 2*nf
    n3 = w3_ref.shape[1]                              # 4*nf
    R1 = x.shape[0]
    R2 = R1 // 4
    R3 = R2 // 4                                      # == cout**2

    # conv1 (2x2 / stride 2) + ReLU: one matmul over pre-gathered patches.
    a1 = jnp.dot(x, w1_ref[...], preferred_element_type=f32) + b1_ref[...]
    a1 = jnp.maximum(a1, 0.0)                         # (R1, n1) f32

    # conv2 + ReLU: rows are pre-grouped by spatial parity, so tap t of the 2x2
    # kernel is exactly the t-th row block -> 4 matmuls summed, no gather.
    w2 = w2_ref[...]
    acc2 = jnp.dot(a1[0:R2, :].astype(bf16), w2[0:n1, :], preferred_element_type=f32)
    for t in range(1, 4):
        acc2 = acc2 + jnp.dot(a1[t * R2:(t + 1) * R2, :].astype(bf16),
                              w2[t * n1:(t + 1) * n1, :],
                              preferred_element_type=f32)
    a2 = jnp.maximum(acc2 + b2_ref[...], 0.0)         # (R2, n2) f32

    # conv3 + ReLU (same tap-block trick); matches F.relu(conv(x)).
    w3 = w3_ref[...]
    acc3 = jnp.dot(a2[0:R3, :].astype(bf16), w3[0:n2, :], preferred_element_type=f32)
    for t in range(1, 4):
        acc3 = acc3 + jnp.dot(a2[t * R3:(t + 1) * R3, :].astype(bf16),
                              w3[t * n2:(t + 1) * n2, :],
                              preferred_element_type=f32)
    a3 = jnp.maximum(acc3 + b3_ref[...], 0.0)         # (R3, n3) = (cout^2, 4*nf) f32

    # fc_latents: contraction over both (row, channel) dims of a3 done as R3
    # row-dots, which avoids any in-kernel (rows -> lanes) relayout.
    zp = jnp.dot(a3[0:1, :].astype(bf16), wl_ref[0:n3, :], preferred_element_type=f32)
    for r in range(1, R3):
        zp = zp + jnp.dot(a3[r:r + 1, :].astype(bf16),
                          wl_ref[r * n3:(r + 1) * n3, :],
                          preferred_element_type=f32)
    zp = zp + bl_ref[...]                             # (1, 2*z_dim) f32
    zp_ref[0] = zp

    z_mu = zp[:, 0:z_dim]
    z_logvar = zp[:, z_dim:2 * z_dim]
    # Normal(mu, exp(0.5*logvar)).rsample() -- f32, exp goes to the EUP slot.
    z = z_mu + jnp.exp(0.5 * z_logvar) * eps_ref[0]
    z_ref[0] = z

    # decoder fc + ReLU fused here so z never round-trips through HBM.
    d0 = jnp.dot(z.astype(bf16), wd_ref[...], preferred_element_type=f32) + bd_ref[...]
    d0_ref[0] = jnp.maximum(d0, 0.0)                  # (1, flat) f32


# ---------------------------------------------------------------------------
# Kernel 2: decoder convT1-3 + 1x1 conv + sigmoid (tap-tree, no shuffles)
# ---------------------------------------------------------------------------

def _decoder_kernel(d0_ref,
                    w1_ref, b1_ref, w2_ref, b2_ref, w3_ref, b3_ref,
                    wo_ref, bo_ref,
                    out_ref):
    f32 = jnp.float32
    bf16 = jnp.bfloat16

    x0 = d0_ref[0]                                    # (R0, 4*nf) bf16
    n1 = w1_ref.shape[1] // 4                         # convT1 C_out
    n2 = w2_ref.shape[1] // 4                         # convT2 C_out

    w2 = w2_ref[...]
    w3 = w3_ref[...]
    wo = wo_ref[...]

    # convT1 (2x2 / stride 2) + ReLU: one matmul; the 4 spatial taps live in lanes.
    p1 = jnp.dot(x0, w1_ref[...], preferred_element_type=f32) + b1_ref[...]
    p1 = jnp.maximum(p1, 0.0)                         # (R0, 4*n1)

    blocks = []
    for t1 in range(4):
        a = p1[:, t1 * n1:(t1 + 1) * n1].astype(bf16)
        # convT2 + ReLU on this tap's slab (row order never matters for convT).
        q = jnp.dot(a, w2, preferred_element_type=f32) + b2_ref[...]
        q = jnp.maximum(q, 0.0)                       # (R0, 4*n2)
        for t2 in range(4):
            b = q[:, t2 * n2:(t2 + 1) * n2].astype(bf16)
            # convT3 + ReLU.
            r = jnp.dot(b, w3, preferred_element_type=f32) + b3_ref[...]
            r = jnp.maximum(r, 0.0)                   # (R0, 4*nf)
            # fused 1x1 conv (block-diagonal over the 4 convT3 taps) + sigmoid.
            y = jnp.dot(r.astype(bf16), wo, preferred_element_type=f32) + bo_ref[...]
            blocks.append(jax.nn.sigmoid(y))          # (R0, 4*Cout)

    # single lane-packed store: (R0, 16 * 4 * Cout)
    out_ref[0] = jnp.concatenate(blocks, axis=-1)


# ---------------------------------------------------------------------------
# Parameter re-layouts (weight-sized, done once per call in XLA)
# ---------------------------------------------------------------------------

def _prep_encoder_weights(params, *, input_channels, z_dim, n_filters, cout):
    nf = n_filters
    C0 = 4 * nf
    R0 = cout * cout
    flat = C0 * R0
    bf16, f32 = jnp.bfloat16, jnp.float32

    # conv weights (O, C, 2, 2) -> ((kh, kw, c), O) matmul layout; taps stacked on rows.
    w1 = params["enc_c1_w"].transpose(2, 3, 1, 0).reshape(4 * input_channels, nf).astype(bf16)
    w2 = params["enc_c2_w"].transpose(2, 3, 1, 0).reshape(4 * nf, 2 * nf).astype(bf16)
    w3 = params["enc_c3_w"].transpose(2, 3, 1, 0).reshape(4 * 2 * nf, 4 * nf).astype(bf16)
    b1 = params["enc_c1_b"].reshape(1, nf).astype(f32)
    b2 = params["enc_c2_b"].reshape(1, 2 * nf).astype(f32)
    b3 = params["enc_c3_b"].reshape(1, 4 * nf).astype(f32)
    # fc_latents rows: torch flattens NCHW (c, h, w); kernel consumes (h, w, c) rows.
    wl = params["fc_lat_w"].reshape(C0, R0, 2 * z_dim).transpose(1, 0, 2) \
                           .reshape(flat, 2 * z_dim).astype(bf16)
    bl = params["fc_lat_b"].reshape(1, 2 * z_dim).astype(f32)
    # decoder fc columns permuted so its output is already in (h, w, c) slab order.
    wd = params["dec_fc_w"].reshape(z_dim, C0, R0).transpose(0, 2, 1) \
                           .reshape(z_dim, flat).astype(bf16)
    bd = params["dec_fc_b"].reshape(C0, R0).transpose(1, 0).reshape(1, flat).astype(f32)
    return w1, b1, w2, b2, w3, b3, wl, bl, wd, bd


def _prep_decoder_weights(params, *, n_filters):
    bf16, f32 = jnp.bfloat16, jnp.float32

    def convt(w):  # (Cin, Cout, 2, 2) -> (Cin, (kh, kw, Cout))
        ci, co = w.shape[0], w.shape[1]
        return w.transpose(0, 2, 3, 1).reshape(ci, 4 * co).astype(bf16)

    w1 = convt(params["dec_t1_w"])
    b1 = jnp.tile(params["dec_t1_b"], 4).reshape(1, -1).astype(f32)
    w2 = convt(params["dec_t2_w"])
    b2 = jnp.tile(params["dec_t2_b"], 4).reshape(1, -1).astype(f32)
    w3 = convt(params["dec_t3_w"])
    b3 = jnp.tile(params["dec_t3_b"], 4).reshape(1, -1).astype(f32)
    # 1x1 conv made block-diagonal over the 4 convT3 taps so it fuses with convT3.
    wo = jnp.kron(jnp.eye(4, dtype=jnp.float32), params["dec_out_w"]).astype(bf16)
    bo = jnp.tile(params["dec_out_b"], 4).reshape(1, -1).astype(f32)
    return w1, b1, w2, b2, w3, b3, wo, bo


# ---------------------------------------------------------------------------
# MixtureVAE (n_mixtures=1, prior='gaussian') forward
# ---------------------------------------------------------------------------

def mixture_vae_forward(params, x_nchw, eps, *, z_dim, n_filters, image_size):
    """Returns (x_mu, z, z_mu, z_logvar, logits) matching MixtureVAE.forward
    for n_mixtures=1 / prior='gaussian' (logits is None)."""
    B, Cin, S, _ = x_nchw.shape
    assert S == image_size
    nf = n_filters
    cout = gen_32_conv_output_dim(S)
    assert S == 8 * cout, "image_size must be divisible by 8 (three 2x2/stride-2 convs)"
    # TODO(synk): odd image sizes (PyTorch silently drops edge rows/cols) not supported.
    R1 = (S // 2) ** 2
    R0 = cout * cout
    C0 = 4 * nf
    flat = C0 * R0
    Cout = Cin
    f32, bf16 = jnp.float32, jnp.bfloat16

    # ---- boundary layout: gather NCHW input into hierarchical (tap-tree) patch order ----
    # rows ordered (r2, s2, r3, s3, h3, w3); lanes ordered (r1, s1, c); input pixel is
    # (8*h3 + 4*r3 + 2*r2 + r1, 8*w3 + 4*s3 + 2*s2 + s1).
    xp = x_nchw.reshape(B, Cin, cout, 2, 2, 2, cout, 2, 2, 2)
    #          dims:    b  c    h3   r3 r2 r1  w3   s3 s2 s1
    xp = xp.transpose(0, 4, 8, 3, 7, 2, 6, 5, 9, 1)
    patches1 = xp.reshape(B, R1, 4 * Cin).astype(bf16)
    eps3 = eps.reshape(B, 1, z_dim).astype(f32)

    w1, b1, w2, b2, w3, b3, wl, bl, wd, bd = _prep_encoder_weights(
        params, input_channels=Cin, z_dim=z_dim, n_filters=nf, cout=cout)

    comp_params = pltpu.CompilerParams(
        dimension_semantics=("parallel",),        # shard batch over TCs (v7x megacore)
        vmem_limit_bytes=32 * 1024 * 1024,        # headroom for larger configs
    )

    zp_out, z_out, d0_out = pl.pallas_call(
        functools.partial(_encoder_latents_kernel, z_dim=z_dim),
        grid=(B,),
        in_specs=[
            pl.BlockSpec((1, R1, 4 * Cin), lambda b: (b, 0, 0)),
            pl.BlockSpec((1, 1, z_dim), lambda b: (b, 0, 0)),
            _resident(w1.shape), _resident(b1.shape),
            _resident(w2.shape), _resident(b2.shape),
            _resident(w3.shape), _resident(b3.shape),
            _resident(wl.shape), _resident(bl.shape),
            _resident(wd.shape), _resident(bd.shape),
        ],
        out_specs=[
            pl.BlockSpec((1, 1, 2 * z_dim), lambda b: (b, 0, 0)),
            pl.BlockSpec((1, 1, z_dim), lambda b: (b, 0, 0)),
            pl.BlockSpec((1, 1, flat), lambda b: (b, 0, 0)),
        ],
        out_shape=[
            jax.ShapeDtypeStruct((B, 1, 2 * z_dim), f32),
            jax.ShapeDtypeStruct((B, 1, z_dim), f32),
            jax.ShapeDtypeStruct((B, 1, flat), f32),
        ],
        compiler_params=comp_params,
    )(patches1, eps3, w1, b1, w2, b2, w3, b3, wl, bl, wd, bd)

    z_mu = zp_out[:, :, 0:z_dim]                  # (B, 1, z_dim)
    z_logvar = zp_out[:, :, z_dim:2 * z_dim]      # (B, 1, z_dim)
    z = z_out[:, 0, :]                            # (B, z_dim)
    logits = None  # n_mixtures == 1

    # d0 handoff: already emitted in (h, w, c) order -> free reshape into a row slab.
    d0_slab = d0_out.reshape(B, R0, C0).astype(bf16)
    dw1, db1, dw2, db2, dw3, db3, dwo, dbo = _prep_decoder_weights(params, n_filters=nf)

    out_packed = pl.pallas_call(
        _decoder_kernel,
        grid=(B,),
        in_specs=[
            pl.BlockSpec((1, R0, C0), lambda b: (b, 0, 0)),
            _resident(dw1.shape), _resident(db1.shape),
            _resident(dw2.shape), _resident(db2.shape),
            _resident(dw3.shape), _resident(db3.shape),
            _resident(dwo.shape), _resident(dbo.shape),
        ],
        out_specs=pl.BlockSpec((1, R0, 64 * Cout), lambda b: (b, 0, 0)),
        out_shape=jax.ShapeDtypeStruct((B, R0, 64 * Cout), f32),
        compiler_params=comp_params,
    )(d0_slab, dw1, db1, dw2, db2, dw3, db3, dwo, dbo)

    # ---- boundary layout: packed (h0, w0) x (kh1, kw1, kh2, kw2, kh3, kw3, c) -> NCHW ----
    o = out_packed.reshape(B, cout, cout, 2, 2, 2, 2, 2, 2, Cout)
    #          dims:       b  h0    w0   kh1 kw1 kh2 kw2 kh3 kw3 c
    o = o.transpose(0, 9, 1, 3, 5, 7, 2, 4, 6, 8)
    x_mu = o.reshape(B, Cout, S, S)

    return x_mu, z, z_mu, z_logvar, logits


# TODO(synk): n_mixtures > 1 path (pyro MixtureOfDiagNormals rsample / fc_logits head)
# and prior='mixture' are not implemented; this covers the n_mixtures=1 gaussian forward.


# ---------------------------------------------------------------------------
# Parameters (torch-like layouts) and a plain-JAX f32 reference for validation
# ---------------------------------------------------------------------------

def init_params(key, input_channels, image_size, z_dim, n_filters):
    cout = gen_32_conv_output_dim(image_size)
    nf = n_filters
    flat = nf * 4 * cout * cout
    ks = jax.random.split(key, 18)
    s = 0.1

    def n(k, shape):
        return jax.random.normal(k, shape, jnp.float32) * s

    return {
        "enc_c1_w": n(ks[0], (nf, input_channels, 2, 2)), "enc_c1_b": n(ks[1], (nf,)),
        "enc_c2_w": n(ks[2], (nf * 2, nf, 2, 2)),         "enc_c2_b": n(ks[3], (nf * 2,)),
        "enc_c3_w": n(ks[4], (nf * 4, nf * 2, 2, 2)),     "enc_c3_b": n(ks[5], (nf * 4,)),
        "fc_lat_w": n(ks[6], (flat, z_dim * 2)),          "fc_lat_b": n(ks[7], (z_dim * 2,)),
        "dec_fc_w": n(ks[8], (z_dim, flat)),              "dec_fc_b": n(ks[9], (flat,)),
        "dec_t1_w": n(ks[10], (nf * 4, nf * 4, 2, 2)),    "dec_t1_b": n(ks[11], (nf * 4,)),
        "dec_t2_w": n(ks[12], (nf * 4, nf * 2, 2, 2)),    "dec_t2_b": n(ks[13], (nf * 2,)),
        "dec_t3_w": n(ks[14], (nf * 2, nf, 2, 2)),        "dec_t3_b": n(ks[15], (nf,)),
        "dec_out_w": n(ks[16], (nf, input_channels)),     "dec_out_b": n(ks[17], (input_channels,)),
    }


def _ref_conv2x2_s2(x, w_t, b, relu):
    B, H, W, C = x.shape
    O = w_t.shape[0]
    p = x.reshape(B, H // 2, 2, W // 2, 2, C).transpose(0, 1, 3, 2, 4, 5)
    p = p.reshape(-1, 4 * C)
    y = p @ jnp.transpose(w_t, (2, 3, 1, 0)).reshape(4 * C, O) + b
    if relu:
        y = jnp.maximum(y, 0.0)
    return y.reshape(B, H // 2, W // 2, O)


def _ref_convT2x2_s2(x, w_t, b, relu):
    B, H, W, C = x.shape
    O = w_t.shape[1]
    wr = jnp.transpose(w_t, (0, 2, 3, 1)).reshape(C, 4 * O)
    y = x.reshape(-1, C) @ wr + jnp.broadcast_to(b, (2, 2, O)).reshape(-1)
    if relu:
        y = jnp.maximum(y, 0.0)
    y = y.reshape(B, H, W, 2, 2, O).transpose(0, 1, 3, 2, 4, 5)
    return y.reshape(B, 2 * H, 2 * W, O)


def reference_forward(params, x_nchw, eps, *, z_dim, n_filters, image_size):
    B = x_nchw.shape[0]
    nf = n_filters
    cout = gen_32_conv_output_dim(image_size)
    h = jnp.transpose(x_nchw, (0, 2, 3, 1))
    h = _ref_conv2x2_s2(h, params["enc_c1_w"], params["enc_c1_b"], True)
    h = _ref_conv2x2_s2(h, params["enc_c2_w"], params["enc_c2_b"], True)
    h = _ref_conv2x2_s2(h, params["enc_c3_w"], params["enc_c3_b"], True)
    h = jnp.transpose(h, (0, 3, 1, 2)).reshape(B, nf * 4 * cout * cout)
    zp = h @ params["fc_lat_w"] + params["fc_lat_b"]
    z_mu, z_logvar = jnp.split(zp, 2, axis=1)
    z = z_mu + jnp.exp(0.5 * z_logvar) * eps
    d = jnp.maximum(z @ params["dec_fc_w"] + params["dec_fc_b"], 0.0)
    d = d.reshape(B, nf * 4, cout, cout).transpose(0, 2, 3, 1)
    d = _ref_convT2x2_s2(d, params["dec_t1_w"], params["dec_t1_b"], True)
    d = _ref_convT2x2_s2(d, params["dec_t2_w"], params["dec_t2_b"], True)
    d = _ref_convT2x2_s2(d, params["dec_t3_w"], params["dec_t3_b"], True)
    Bc, Hc, Wc, Cc = d.shape
    y = jax.nn.sigmoid(d.reshape(-1, Cc) @ params["dec_out_w"] + params["dec_out_b"])
    x_mu = y.reshape(B, Hc, Wc, -1).transpose(0, 3, 1, 2)
    return x_mu, z, z_mu.reshape(B, 1, z_dim), z_logvar.reshape(B, 1, z_dim), None


if __name__ == "__main__":
    batch = 2
    input_channels = 3
    image_size = 16          # -> cout = 2 after three 2x2/stride-2 convs
    z_dim = 8
    n_filters = 8
    n_mixtures = 1

    key = jax.random.PRNGKey(0)
    kp, kx, ke = jax.random.split(key, 3)
    params = init_params(kp, input_channels, image_size, z_dim, n_filters)
    x = jax.random.uniform(kx, (batch, input_channels, image_size, image_size),
                           dtype=jnp.float32)                      # NCHW, like torch
    eps = jax.random.normal(ke, (batch, z_dim), dtype=jnp.float32)  # rsample noise

    fwd = jax.jit(functools.partial(mixture_vae_forward, z_dim=z_dim,
                                    n_filters=n_filters, image_size=image_size))
    x_mu, z, z_mu, z_logvar, logits = fwd(params, x, eps)
    jax.block_until_ready((x_mu, z, z_mu, z_logvar))

    assert x_mu.shape == (batch, input_channels, image_size, image_size)
    assert z.shape == (batch, z_dim)
    assert z_mu.shape == (batch, n_mixtures, z_dim)
    assert z_logvar.shape == (batch, n_mixtures, z_dim)
    assert logits is None

    # Validate against a plain-JAX f32 reference (tolerance accounts for bf16 MXU operands).
    r_x_mu, r_z, r_z_mu, r_z_logvar, _ = reference_forward(
        params, x, eps, z_dim=z_dim, n_filters=n_filters, image_size=image_size)
    for got, want in ((x_mu, r_x_mu), (z, r_z), (z_mu, r_z_mu), (z_logvar, r_z_logvar)):
        np.testing.assert_allclose(np.asarray(got), np.asarray(want), rtol=2e-2, atol=2e-2)

    print("KERNEL_OK")
</pallas_src>

<mosaic_0001>
module attributes {stable_mosaic.version = 11 : i64} {
  func.func @_encoder_latents_kernel(%arg0: i32, %arg1: memref<1x64x12xbf16, #tpu.memory_space<vmem>>, %arg2: memref<1x1x8xf32, #tpu.memory_space<vmem>>, %arg3: memref<12x8xbf16, #tpu.memory_space<vmem>>, %arg4: memref<1x8xf32, #tpu.memory_space<vmem>>, %arg5: memref<32x16xbf16, #tpu.memory_space<vmem>>, %arg6: memref<1x16xf32, #tpu.memory_space<vmem>>, %arg7: memref<64x32xbf16, #tpu.memory_space<vmem>>, %arg8: memref<1x32xf32, #tpu.memory_space<vmem>>, %arg9: memref<128x16xbf16, #tpu.memory_space<vmem>>, %arg10: memref<1x16xf32, #tpu.memory_space<vmem>>, %arg11: memref<8x128xbf16, #tpu.memory_space<vmem>>, %arg12: memref<1x128xf32, #tpu.memory_space<vmem>>, %arg13: memref<1x1x16xf32, #tpu.memory_space<vmem>>, %arg14: memref<1x1x8xf32, #tpu.memory_space<vmem>>, %arg15: memref<1x1x128xf32, #tpu.memory_space<vmem>>) attributes {dimension_semantics = [#tpu.dimension_semantics<parallel>], iteration_bounds = array<i64: 2>, scalar_prefetch = 0 : i64, scratch_operands = 0 : i64, tpu.core_type = #tpu.core_type<tc>, window_params = [{transform_indices = @transform_0, window_bounds = array<i64: 1, 64, 12>}, {transform_indices = @transform_1, window_bounds = array<i64: 1, 1, 8>}, {pipeline_mode = #tpu.pipeline_mode<synchronous>, transform_indices = @transform_2, window_bounds = array<i64: 12, 8>}, {pipeline_mode = #tpu.pipeline_mode<synchronous>, transform_indices = @transform_3, window_bounds = array<i64: 1, 8>}, {pipeline_mode = #tpu.pipeline_mode<synchronous>, transform_indices = @transform_4, window_bounds = array<i64: 32, 16>}, {pipeline_mode = #tpu.pipeline_mode<synchronous>, transform_indices = @transform_5, window_bounds = array<i64: 1, 16>}, {pipeline_mode = #tpu.pipeline_mode<synchronous>, transform_indices = @transform_6, window_bounds = array<i64: 64, 32>}, {pipeline_mode = #tpu.pipeline_mode<synchronous>, transform_indices = @transform_7, window_bounds = array<i64: 1, 32>}, {pipeline_mode = #tpu.pipeline_mode<synchronous>, transform_indices = @transform_8, window_bounds = array<i64: 128, 16>}, {pipeline_mode = #tpu.pipeline_mode<synchronous>, transform_indices = @transform_9, window_bounds = array<i64: 1, 16>}, {pipeline_mode = #tpu.pipeline_mode<synchronous>, transform_indices = @transform_10, window_bounds = array<i64: 8, 128>}, {pipeline_mode = #tpu.pipeline_mode<synchronous>, transform_indices = @transform_11, window_bounds = array<i64: 1, 128>}, {transform_indices = @transform_12, window_bounds = array<i64: 1, 1, 16>}, {transform_indices = @transform_13, window_bounds = array<i64: 1, 1, 8>}, {transform_indices = @transform_14, window_bounds = array<i64: 1, 1, 128>}]} {
    %c0 = arith.constant 0 : index
    %c0_0 = arith.constant 0 : index
    %c0_1 = arith.constant 0 : index
    %0 = vector.load %arg1[%c0, %c0_0, %c0_1] : memref<1x64x12xbf16, #tpu.memory_space<vmem>>, vector<1x64x12xbf16>
    %1 = vector.shape_cast %0 : vector<1x64x12xbf16> to vector<64x12xbf16>
    %c0_2 = arith.constant 0 : index
    %c0_3 = arith.constant 0 : index
    %2 = vector.load %arg3[%c0_2, %c0_3] : memref<12x8xbf16, #tpu.memory_space<vmem>>, vector<12x8xbf16>
    %cst = arith.constant dense<0.000000e+00> : vector<64x8xf32>
    %3 = tpu.matmul %1, %2, %cst {dimension_numbers = #tpu.dot_dimension_numbers<[1], [0], [0], [1], [0, 0, 1, 1], [], []>} : vector<64x12xbf16>, vector<12x8xbf16>, vector<64x8xf32> -> vector<64x8xf32>
    %c0_4 = arith.constant 0 : index
    %c0_5 = arith.constant 0 : index
    %4 = vector.load %arg4[%c0_4, %c0_5] : memref<1x8xf32, #tpu.memory_space<vmem>>, vector<1x8xf32>
    %5 = vector.broadcast %4 : vector<1x8xf32> to vector<64x8xf32>
    %6 = arith.addf %3, %5 : vector<64x8xf32>
    %cst_6 = arith.constant 0.000000e+00 : f32
    %7 = vector.broadcast %cst_6 : f32 to vector<64x8xf32>
    %8 = arith.maximumf %6, %7 : vector<64x8xf32>
    %c0_7 = arith.constant 0 : index
    %c0_8 = arith.constant 0 : index
    %9 = vector.load %arg5[%c0_7, %c0_8] : memref<32x16xbf16, #tpu.memory_space<vmem>>, vector<32x16xbf16>
    %10 = vector.extract_strided_slice %8 {offsets = [0, 0], sizes = [16, 8], strides = [1, 1]} : vector<64x8xf32> to vector<16x8xf32>
    %11 = arith.truncf %10 : vector<16x8xf32> to vector<16x8xbf16>
    %12 = vector.extract_strided_slice %9 {offsets = [0, 0], sizes = [8, 16], strides = [1, 1]} : vector<32x16xbf16> to vector<8x16xbf16>
    %cst_9 = arith.constant dense<0.000000e+00> : vector<16x16xf32>
    %13 = tpu.matmul %11, %12, %cst_9 {dimension_numbers = #tpu.dot_dimension_numbers<[1], [0], [0], [1], [0, 0, 1, 1], [], []>} : vector<16x8xbf16>, vector<8x16xbf16>, vector<16x16xf32> -> vector<16x16xf32>
    %14 = vector.extract_strided_slice %8 {offsets = [16, 0], sizes = [16, 8], strides = [1, 1]} : vector<64x8xf32> to vector<16x8xf32>
    %15 = arith.truncf %14 : vector<16x8xf32> to vector<16x8xbf16>
    %16 = vector.extract_strided_slice %9 {offsets = [8, 0], sizes = [8, 16], strides = [1, 1]} : vector<32x16xbf16> to vector<8x16xbf16>
    %cst_10 = arith.constant dense<0.000000e+00> : vector<16x16xf32>
    %17 = tpu.matmul %15, %16, %cst_10 {dimension_numbers = #tpu.dot_dimension_numbers<[1], [0], [0], [1], [0, 0, 1, 1], [], []>} : vector<16x8xbf16>, vector<8x16xbf16>, vector<16x16xf32> -> vector<16x16xf32>
    %18 = arith.addf %13, %17 : vector<16x16xf32>
    %19 = vector.extract_strided_slice %8 {offsets = [32, 0], sizes = [16, 8], strides = [1, 1]} : vector<64x8xf32> to vector<16x8xf32>
    %20 = arith.truncf %19 : vector<16x8xf32> to vector<16x8xbf16>
    %21 = vector.extract_strided_slice %9 {offsets = [16, 0], sizes = [8, 16], strides = [1, 1]} : vector<32x16xbf16> to vector<8x16xbf16>
    %cst_11 = arith.constant dense<0.000000e+00> : vector<16x16xf32>
    %22 = tpu.matmul %20, %21, %cst_11 {dimension_numbers = #tpu.dot_dimension_numbers<[1], [0], [0], [1], [0, 0, 1, 1], [], []>} : vector<16x8xbf16>, vector<8x16xbf16>, vector<16x16xf32> -> vector<16x16xf32>
    %23 = arith.addf %18, %22 : vector<16x16xf32>
    %24 = vector.extract_strided_slice %8 {offsets = [48, 0], sizes = [16, 8], strides = [1, 1]} : vector<64x8xf32> to vector<16x8xf32>
    %25 = arith.truncf %24 : vector<16x8xf32> to vector<16x8xbf16>
    %26 = vector.extract_strided_slice %9 {offsets = [24, 0], sizes = [8, 16], strides = [1, 1]} : vector<32x16xbf16> to vector<8x16xbf16>
    %cst_12 = arith.constant dense<0.000000e+00> : vector<16x16xf32>
    %27 = tpu.matmul %25, %26, %cst_12 {dimension_numbers = #tpu.dot_dimension_numbers<[1], [0], [0], [1], [0, 0, 1, 1], [], []>} : vector<16x8xbf16>, vector<8x16xbf16>, vector<16x16xf32> -> vector<16x16xf32>
    %28 = arith.addf %23, %27 : vector<16x16xf32>
    %c0_13 = arith.constant 0 : index
    %c0_14 = arith.constant 0 : index
    %29 = vector.load %arg6[%c0_13, %c0_14] : memref<1x16xf32, #tpu.memory_space<vmem>>, vector<1x16xf32>
    %30 = vector.broadcast %29 : vector<1x16xf32> to vector<16x16xf32>
    %31 = arith.addf %28, %30 : vector<16x16xf32>
    %cst_15 = arith.constant 0.000000e+00 : f32
    %32 = vector.broadcast %cst_15 : f32 to vector<16x16xf32>
    %33 = arith.maximumf %31, %32 : vector<16x16xf32>
    %c0_16 = arith.constant 0 : index
    %c0_17 = arith.constant 0 : index
    %34 = vector.load %arg7[%c0_16, %c0_17] : memref<64x32xbf16, #tpu.memory_space<vmem>>, vector<64x32xbf16>
    %35 = vector.extract_strided_slice %33 {offsets = [0, 0], sizes = [4, 16], strides = [1, 1]} : vector<16x16xf32> to vector<4x16xf32>
    %36 = arith.truncf %35 : vector<4x16xf32> to vector<4x16xbf16>
    %37 = vector.extract_strided_slice %34 {offsets = [0, 0], sizes = [16, 32], strides = [1, 1]} : vector<64x32xbf16> to vector<16x32xbf16>
    %cst_18 = arith.constant dense<0.000000e+00> : vector<4x32xf32>
    %38 = tpu.matmul %36, %37, %cst_18 {dimension_numbers = #tpu.dot_dimension_numbers<[1], [0], [0], [1], [0, 0, 1, 1], [], []>} : vector<4x16xbf16>, vector<16x32xbf16>, vector<4x32xf32> -> vector<4x32xf32>
    %39 = vector.extract_strided_slice %33 {offsets = [4, 0], sizes = [4, 16], strides = [1, 1]} : vector<16x16xf32> to vector<4x16xf32>
    %40 = arith.truncf %39 : vector<4x16xf32> to vector<4x16xbf16>
    %41 = vector.extract_strided_slice %34 {offsets = [16, 0], sizes = [16, 32], strides = [1, 1]} : vector<64x32xbf16> to vector<16x32xbf16>
    %cst_19 = arith.constant dense<0.000000e+00> : vector<4x32xf32>
    %42 = tpu.matmul %40, %41, %cst_19 {dimension_numbers = #tpu.dot_dimension_numbers<[1], [0], [0], [1], [0, 0, 1, 1], [], []>} : vector<4x16xbf16>, vector<16x32xbf16>, vector<4x32xf32> -> vector<4x32xf32>
    %43 = arith.addf %38, %42 : vector<4x32xf32>
    %44 = vector.extract_strided_slice %33 {offsets = [8, 0], sizes = [4, 16], strides = [1, 1]} : vector<16x16xf32> to vector<4x16xf32>
    %45 = arith.truncf %44 : vector<4x16xf32> to vector<4x16xbf16>
    %46 = vector.extract_strided_slice %34 {offsets = [32, 0], sizes = [16, 32], strides = [1, 1]} : vector<64x32xbf16> to vector<16x32xbf16>
    %cst_20 = arith.constant dense<0.000000e+00> : vector<4x32xf32>
    %47 = tpu.matmul %45, %46, %cst_20 {dimension_numbers = #tpu.dot_dimension_numbers<[1], [0], [0], [1], [0, 0, 1, 1], [], []>} : vector<4x16xbf16>, vector<16x32xbf16>, vector<4x32xf32> -> vector<4x32xf32>
    %48 = arith.addf %43, %47 : vector<4x32xf32>
    %49 = vector.extract_strided_slice %33 {offsets = [12, 0], sizes = [4, 16], strides = [1, 1]} : vector<16x16xf32> to vector<4x16xf32>
    %50 = arith.truncf %49 : vector<4x16xf32> to vector<4x16xbf16>
    %51 = vector.extract_strided_slice %34 {offsets = [48, 0], sizes = [16, 32], strides = [1, 1]} : vector<64x32xbf16> to vector<16x32xbf16>
    %cst_21 = arith.constant dense<0.000000e+00> : vector<4x32xf32>
    %52 = tpu.matmul %50, %51, %cst_21 {dimension_numbers = #tpu.dot_dimension_numbers<[1], [0], [0], [1], [0, 0, 1, 1], [], []>} : vector<4x16xbf16>, vector<16x32xbf16>, vector<4x32xf32> -> vector<4x32xf32>
    %53 = arith.addf %48, %52 : vector<4x32xf32>
    %c0_22 = arith.constant 0 : index
    %c0_23 = arith.constant 0 : index
    %54 = vector.load %arg8[%c0_22, %c0_23] : memref<1x32xf32, #tpu.memory_space<vmem>>, vector<1x32xf32>
    %55 = vector.broadcast %54 : vector<1x32xf32> to vector<4x32xf32>
    %56 = arith.addf %53, %55 : vector<4x32xf32>
    %cst_24 = arith.constant 0.000000e+00 : f32
    %57 = vector.broadcast %cst_24 : f32 to vector<4x32xf32>
    %58 = arith.maximumf %56, %57 : vector<4x32xf32>
    %59 = vector.extract_strided_slice %58 {offsets = [0, 0], sizes = [1, 32], strides = [1, 1]} : vector<4x32xf32> to vector<1x32xf32>
    %60 = arith.truncf %59 : vector<1x32xf32> to vector<1x32xbf16>
    %c0_25 = arith.constant 0 : index
    %c0_26 = arith.constant 0 : index
    %61 = vector.load %arg9[%c0_25, %c0_26] : memref<128x16xbf16, #tpu.memory_space<vmem>>, vector<32x16xbf16>
    %cst_27 = arith.constant dense<0.000000e+00> : vector<1x16xf32>
    %62 = tpu.matmul %60, %61, %cst_27 {dimension_numbers = #tpu.dot_dimension_numbers<[1], [0], [0], [1], [0, 0, 1, 1], [], []>} : vector<1x32xbf16>, vector<32x16xbf16>, vector<1x16xf32> -> vector<1x16xf32>
    %63 = vector.extract_strided_slice %58 {offsets = [1, 0], sizes = [1, 32], strides = [1, 1]} : vector<4x32xf32> to vector<1x32xf32>
    %64 = arith.truncf %63 : vector<1x32xf32> to vector<1x32xbf16>
    %c32 = arith.constant 32 : index
    %c0_28 = arith.constant 0 : index
    %65 = vector.load %arg9[%c32, %c0_28] : memref<128x16xbf16, #tpu.memory_space<vmem>>, vector<32x16xbf16>
    %cst_29 = arith.constant dense<0.000000e+00> : vector<1x16xf32>
    %66 = tpu.matmul %64, %65, %cst_29 {dimension_numbers = #tpu.dot_dimension_numbers<[1], [0], [0], [1], [0, 0, 1, 1], [], []>} : vector<1x32xbf16>, vector<32x16xbf16>, vector<1x16xf32> -> vector<1x16xf32>
    %67 = arith.addf %62, %66 : vector<1x16xf32>
    %68 = vector.extract_strided_slice %58 {offsets = [2, 0], sizes = [1, 32], strides = [1, 1]} : vector<4x32xf32> to vector<1x32xf32>
    %69 = arith.truncf %68 : vector<1x32xf32> to vector<1x32xbf16>
    %c64 = arith.constant 64 : index
    %c0_30 = arith.constant 0 : index
    %70 = vector.load %arg9[%c64, %c0_30] : memref<128x16xbf16, #tpu.memory_space<vmem>>, vector<32x16xbf16>
    %cst_31 = arith.constant dense<0.000000e+00> : vector<1x16xf32>
    %71 = tpu.matmul %69, %70, %cst_31 {dimension_numbers = #tpu.dot_dimension_numbers<[1], [0], [0], [1], [0, 0, 1, 1], [], []>} : vector<1x32xbf16>, vector<32x16xbf16>, vector<1x16xf32> -> vector<1x16xf32>
    %72 = arith.addf %67, %71 : vector<1x16xf32>
    %73 = vector.extract_strided_slice %58 {offsets = [3, 0], sizes = [1, 32], strides = [1, 1]} : vector<4x32xf32> to vector<1x32xf32>
    %74 = arith.truncf %73 : vector<1x32xf32> to vector<1x32xbf16>
    %c96 = arith.constant 96 : index
    %c0_32 = arith.constant 0 : index
    %75 = vector.load %arg9[%c96, %c0_32] : memref<128x16xbf16, #tpu.memory_space<vmem>>, vector<32x16xbf16>
    %cst_33 = arith.constant dense<0.000000e+00> : vector<1x16xf32>
    %76 = tpu.matmul %74, %75, %cst_33 {dimension_numbers = #tpu.dot_dimension_numbers<[1], [0], [0], [1], [0, 0, 1, 1], [], []>} : vector<1x32xbf16>, vector<32x16xbf16>, vector<1x16xf32> -> vector<1x16xf32>
    %77 = arith.addf %72, %76 : vector<1x16xf32>
    %c0_34 = arith.constant 0 : index
    %c0_35 = arith.constant 0 : index
    %78 = vector.load %arg10[%c0_34, %c0_35] : memref<1x16xf32, #tpu.memory_space<vmem>>, vector<1x16xf32>
    %79 = arith.addf %77, %78 : vector<1x16xf32>
    %c0_36 = arith.constant 0 : index
    %c0_37 = arith.constant 0 : index
    %c0_38 = arith.constant 0 : index
    %80 = vector.load %arg13[%c0_36, %c0_37, %c0_38] : memref<1x1x16xf32, #tpu.memory_space<vmem>>, vector<1x1x16xf32>
    %81 = vector.shape_cast %80 : vector<1x1x16xf32> to vector<1x16xf32>
    %82 = vector.shape_cast %79 : vector<1x16xf32> to vector<1x1x16xf32>
    tpu.vector_store %arg13[%c0_36, %c0_37, %c0_38], %82 {strides = array<i32>} : memref<1x1x16xf32, #tpu.memory_space<vmem>>, vector<1x1x16xf32>,
    %83 = vector.extract_strided_slice %79 {offsets = [0, 0], sizes = [1, 8], strides = [1, 1]} : vector<1x16xf32> to vector<1x8xf32>
    %84 = vector.extract_strided_slice %79 {offsets = [0, 8], sizes = [1, 8], strides = [1, 1]} : vector<1x16xf32> to vector<1x8xf32>
    %cst_39 = arith.constant 5.000000e-01 : f32
    %85 = vector.broadcast %cst_39 : f32 to vector<1x8xf32>
    %86 = arith.mulf %85, %84 : vector<1x8xf32>
    %87 = math.exp %86 : vector<1x8xf32>
    %c0_40 = arith.constant 0 : index
    %c0_41 = arith.constant 0 : index
    %c0_42 = arith.constant 0 : index
    %88 = vector.load %arg2[%c0_40, %c0_41, %c0_42] : memref<1x1x8xf32, #tpu.memory_space<vmem>>, vector<1x1x8xf32>
    %89 = vector.shape_cast %88 : vector<1x1x8xf32> to vector<1x8xf32>
    %90 = arith.mulf %87, %89 : vector<1x8xf32>
    %91 = arith.addf %83, %90 : vector<1x8xf32>
    %c0_43 = arith.constant 0 : index
    %c0_44 = arith.constant 0 : index
    %c0_45 = arith.constant 0 : index
    %92 = vector.load %arg14[%c0_43, %c0_44, %c0_45] : memref<1x1x8xf32, #tpu.memory_space<vmem>>, vector<1x1x8xf32>
    %93 = vector.shape_cast %92 : vector<1x1x8xf32> to vector<1x8xf32>
    %94 = vector.shape_cast %91 : vector<1x8xf32> to vector<1x1x8xf32>
    tpu.vector_store %arg14[%c0_43, %c0_44, %c0_45], %94 {strides = array<i32>} : memref<1x1x8xf32, #tpu.memory_space<vmem>>, vector<1x1x8xf32>,
    %95 = arith.truncf %91 : vector<1x8xf32> to vector<1x8xbf16>
    %c0_46 = arith.constant 0 : index
    %c0_47 = arith.constant 0 : index
    %96 = vector.load %arg11[%c0_46, %c0_47] : memref<8x128xbf16, #tpu.memory_space<vmem>>, vector<8x128xbf16>
    %cst_48 = arith.constant dense<0.000000e+00> : vector<1x128xf32>
    %97 = tpu.matmul %95, %96, %cst_48 {dimension_numbers = #tpu.dot_dimension_numbers<[1], [0], [0], [1], [0, 0, 1, 1], [], []>} : vector<1x8xbf16>, vector<8x128xbf16>, vector<1x128xf32> -> vector<1x128xf32>
    %c0_49 = arith.constant 0 : index
    %c0_50 = arith.constant 0 : index
    %98 = vector.load %arg12[%c0_49, %c0_50] : memref<1x128xf32, #tpu.memory_space<vmem>>, vector<1x128xf32>
    %99 = arith.addf %97, %98 : vector<1x128xf32>
    %cst_51 = arith.constant 0.000000e+00 : f32
    %100 = vector.broadcast %cst_51 : f32 to vector<1x128xf32>
    %101 = arith.maximumf %99, %100 : vector<1x128xf32>
    %c0_52 = arith.constant 0 : index
    %c0_53 = arith.constant 0 : index
    %c0_54 = arith.constant 0 : index
    %102 = vector.load %arg15[%c0_52, %c0_53, %c0_54] : memref<1x1x128xf32, #tpu.memory_space<vmem>>, vector<1x1x128xf32>
    %103 = vector.shape_cast %102 : vector<1x1x128xf32> to vector<1x128xf32>
    %104 = vector.shape_cast %101 : vector<1x128xf32> to vector<1x1x128xf32>
    tpu.vector_store %arg15[%c0_52, %c0_53, %c0_54], %104 {strides = array<i32>} : memref<1x1x128xf32, #tpu.memory_space<vmem>>, vector<1x1x128xf32>,
    return
  }
  func.func @transform_0(%arg0: i32) -> (i32, i32, i32) {
    %c0_i32 = arith.constant 0 : i32
    %c0_i32_0 = arith.constant 0 : i32
    %c0_i32_1 = arith.constant 0 : i32
    return %arg0, %c0_i32, %c0_i32_0 : i32, i32, i32
  }
  func.func @transform_1(%arg0: i32) -> (i32, i32, i32) {
    %c0_i32 = arith.constant 0 : i32
    %c0_i32_0 = arith.constant 0 : i32
    %c0_i32_1 = arith.constant 0 : i32
    return %arg0, %c0_i32, %c0_i32_0 : i32, i32, i32
  }
  func.func @transform_2(%arg0: i32) -> (i32, i32) {
    %c0_i32 = arith.constant 0 : i32
    %c0_i32_0 = arith.constant 0 : i32
    %c0_i32_1 = arith.constant 0 : i32
    return %c0_i32, %c0_i32_0 : i32, i32
  }
  func.func @transform_3(%arg0: i32) -> (i32, i32) {
    %c0_i32 = arith.constant 0 : i32
    %c0_i32_0 = arith.constant 0 : i32
    %c0_i32_1 = arith.constant 0 : i32
    return %c0_i32, %c0_i32_0 : i32, i32
  }
  func.func @transform_4(%arg0: i32) -> (i32, i32) {
    %c0_i32 = arith.constant 0 : i32
    %c0_i32_0 = arith.constant 0 : i32
    %c0_i32_1 = arith.constant 0 : i32
    return %c0_i32, %c0_i32_0 : i32, i32
  }
  func.func @transform_5(%arg0: i32) -> (i32, i32) {
    %c0_i32 = arith.constant 0 : i32
    %c0_i32_0 = arith.constant 0 : i32
    %c0_i32_1 = arith.constant 0 : i32
    return %c0_i32, %c0_i32_0 : i32, i32
  }
  func.func @transform_6(%arg0: i32) -> (i32, i32) {
    %c0_i32 = arith.constant 0 : i32
    %c0_i32_0 = arith.constant 0 : i32
    %c0_i32_1 = arith.constant 0 : i32
    return %c0_i32, %c0_i32_0 : i32, i32
  }
  func.func @transform_7(%arg0: i32) -> (i32, i32) {
    %c0_i32 = arith.constant 0 : i32
    %c0_i32_0 = arith.constant 0 : i32
    %c0_i32_1 = arith.constant 0 : i32
    return %c0_i32, %c0_i32_0 : i32, i32
  }
  func.func @transform_8(%arg0: i32) -> (i32, i32) {
    %c0_i32 = arith.constant 0 : i32
    %c0_i32_0 = arith.constant 0 : i32
    %c0_i32_1 = arith.constant 0 : i32
    return %c0_i32, %c0_i32_0 : i32, i32
  }
  func.func @transform_9(%arg0: i32) -> (i32, i32) {
    %c0_i32 = arith.constant 0 : i32
    %c0_i32_0 = arith.constant 0 : i32
    %c0_i32_1 = arith.constant 0 : i32
    return %c0_i32, %c0_i32_0 : i32, i32
  }
  func.func @transform_10(%arg0: i32) -> (i32, i32) {
    %c0_i32 = arith.constant 0 : i32
    %c0_i32_0 = arith.constant 0 : i32
    %c0_i32_1 = arith.constant 0 : i32
    return %c0_i32, %c0_i32_0 : i32, i32
  }
  func.func @transform_11(%arg0: i32) -> (i32, i32) {
    %c0_i32 = arith.constant 0 : i32
    %c0_i32_0 = arith.constant 0 : i32
    %c0_i32_1 = arith.constant 0 : i32
    return %c0_i32, %c0_i32_0 : i32, i32
  }
  func.func @transform_12(%arg0: i32) -> (i32, i32, i32) {
    %c0_i32 = arith.constant 0 : i32
    %c0_i32_0 = arith.constant 0 : i32
    %c0_i32_1 = arith.constant 0 : i32
    return %arg0, %c0_i32, %c0_i32_0 : i32, i32, i32
  }
  func.func @transform_13(%arg0: i32) -> (i32, i32, i32) {
    %c0_i32 = arith.constant 0 : i32
    %c0_i32_0 = arith.constant 0 : i32
    %c0_i32_1 = arith.constant 0 : i32
    return %arg0, %c0_i32, %c0_i32_0 : i32, i32, i32
  }
  func.func @transform_14(%arg0: i32) -> (i32, i32, i32) {
    %c0_i32 = arith.constant 0 : i32
    %c0_i32_0 = arith.constant 0 : i32
    %c0_i32_1 = arith.constant 0 : i32
    return %arg0, %c0_i32, %c0_i32_0 : i32, i32, i32
  }
}

module attributes {stable_mosaic.version = 11 : i64} {
  func.func @_decoder_kernel(%arg0: i32, %arg1: memref<1x4x32xbf16, #tpu.memory_space<vmem>>, %arg2: memref<32x128xbf16, #tpu.memory_space<vmem>>, %arg3: memref<1x128xf32, #tpu.memory_space<vmem>>, %arg4: memref<32x64xbf16, #tpu.memory_space<vmem>>, %arg5: memref<1x64xf32, #tpu.memory_space<vmem>>, %arg6: memref<16x32xbf16, #tpu.memory_space<vmem>>, %arg7: memref<1x32xf32, #tpu.memory_space<vmem>>, %arg8: memref<32x12xbf16, #tpu.memory_space<vmem>>, %arg9: memref<1x12xf32, #tpu.memory_space<vmem>>, %arg10: memref<1x4x192xf32, #tpu.memory_space<vmem>>) attributes {dimension_semantics = [#tpu.dimension_semantics<parallel>], iteration_bounds = array<i64: 2>, scalar_prefetch = 0 : i64, scratch_operands = 0 : i64, tpu.core_type = #tpu.core_type<tc>, window_params = [{transform_indices = @transform_0, window_bounds = array<i64: 1, 4, 32>}, {pipeline_mode = #tpu.pipeline_mode<synchronous>, transform_indices = @transform_1, window_bounds = array<i64: 32, 128>}, {pipeline_mode = #tpu.pipeline_mode<synchronous>, transform_indices = @transform_2, window_bounds = array<i64: 1, 128>}, {pipeline_mode = #tpu.pipeline_mode<synchronous>, transform_indices = @transform_3, window_bounds = array<i64: 32, 64>}, {pipeline_mode = #tpu.pipeline_mode<synchronous>, transform_indices = @transform_4, window_bounds = array<i64: 1, 64>}, {pipeline_mode = #tpu.pipeline_mode<synchronous>, transform_indices = @transform_5, window_bounds = array<i64: 16, 32>}, {pipeline_mode = #tpu.pipeline_mode<synchronous>, transform_indices = @transform_6, window_bounds = array<i64: 1, 32>}, {pipeline_mode = #tpu.pipeline_mode<synchronous>, transform_indices = @transform_7, window_bounds = array<i64: 32, 12>}, {pipeline_mode = #tpu.pipeline_mode<synchronous>, transform_indices = @transform_8, window_bounds = array<i64: 1, 12>}, {transform_indices = @transform_9, window_bounds = array<i64: 1, 4, 192>}]} {
    %c0 = arith.constant 0 : index
    %c0_0 = arith.constant 0 : index
    %c0_1 = arith.constant 0 : index
    %0 = vector.load %arg1[%c0, %c0_0, %c0_1] : memref<1x4x32xbf16, #tpu.memory_space<vmem>>, vector<1x4x32xbf16>
    %1 = vector.shape_cast %0 : vector<1x4x32xbf16> to vector<4x32xbf16>
    %c0_2 = arith.constant 0 : index
    %c0_3 = arith.constant 0 : index
    %2 = vector.load %arg4[%c0_2, %c0_3] : memref<32x64xbf16, #tpu.memory_space<vmem>>, vector<32x64xbf16>
    %c0_4 = arith.constant 0 : index
    %c0_5 = arith.constant 0 : index
    %3 = vector.load %arg6[%c0_4, %c0_5] : memref<16x32xbf16, #tpu.memory_space<vmem>>, vector<16x32xbf16>
    %c0_6 = arith.constant 0 : index
    %c0_7 = arith.constant 0 : index
    %4 = vector.load %arg8[%c0_6, %c0_7] : memref<32x12xbf16, #tpu.memory_space<vmem>>, vector<32x12xbf16>
    %c0_8 = arith.constant 0 : index
    %c0_9 = arith.constant 0 : index
    %5 = vector.load %arg2[%c0_8, %c0_9] : memref<32x128xbf16, #tpu.memory_space<vmem>>, vector<32x128xbf16>
    %cst = arith.constant dense<0.000000e+00> : vector<4x128xf32>
    %6 = tpu.matmul %1, %5, %cst {dimension_numbers = #tpu.dot_dimension_numbers<[1], [0], [0], [1], [0, 0, 1, 1], [], []>} : vector<4x32xbf16>, vector<32x128xbf16>, vector<4x128xf32> -> vector<4x128xf32>
    %c0_10 = arith.constant 0 : index
    %c0_11 = arith.constant 0 : index
    %7 = vector.load %arg3[%c0_10, %c0_11] : memref<1x128xf32, #tpu.memory_space<vmem>>, vector<1x128xf32>
    %8 = vector.broadcast %7 : vector<1x128xf32> to vector<4x128xf32>
    %9 = arith.addf %6, %8 : vector<4x128xf32>
    %cst_12 = arith.constant 0.000000e+00 : f32
    %10 = vector.broadcast %cst_12 : f32 to vector<4x128xf32>
    %11 = arith.maximumf %9, %10 : vector<4x128xf32>
    %12 = vector.extract_strided_slice %11 {offsets = [0, 0], sizes = [4, 32], strides = [1, 1]} : vector<4x128xf32> to vector<4x32xf32>
    %13 = arith.truncf %12 : vector<4x32xf32> to vector<4x32xbf16>
    %cst_13 = arith.constant dense<0.000000e+00> : vector<4x64xf32>
    %14 = tpu.matmul %13, %2, %cst_13 {dimension_numbers = #tpu.dot_dimension_numbers<[1], [0], [0], [1], [0, 0, 1, 1], [], []>} : vector<4x32xbf16>, vector<32x64xbf16>, vector<4x64xf32> -> vector<4x64xf32>
    %c0_14 = arith.constant 0 : index
    %c0_15 = arith.constant 0 : index
    %15 = vector.load %arg5[%c0_14, %c0_15] : memref<1x64xf32, #tpu.memory_space<vmem>>, vector<1x64xf32>
    %16 = vector.broadcast %15 : vector<1x64xf32> to vector<4x64xf32>
    %17 = arith.addf %14, %16 : vector<4x64xf32>
    %cst_16 = arith.constant 0.000000e+00 : f32
    %18 = vector.broadcast %cst_16 : f32 to vector<4x64xf32>
    %19 = arith.maximumf %17, %18 : vector<4x64xf32>
    %20 = vector.extract_strided_slice %19 {offsets = [0, 0], sizes = [4, 16], strides = [1, 1]} : vector<4x64xf32> to vector<4x16xf32>
    %21 = arith.truncf %20 : vector<4x16xf32> to vector<4x16xbf16>
    %cst_17 = arith.constant dense<0.000000e+00> : vector<4x32xf32>
    %22 = tpu.matmul %21, %3, %cst_17 {dimension_numbers = #tpu.dot_dimension_numbers<[1], [0], [0], [1], [0, 0, 1, 1], [], []>} : vector<4x16xbf16>, vector<16x32xbf16>, vector<4x32xf32> -> vector<4x32xf32>
    %c0_18 = arith.constant 0 : index
    %c0_19 = arith.constant 0 : index
    %23 = vector.load %arg7[%c0_18, %c0_19] : memref<1x32xf32, #tpu.memory_space<vmem>>, vector<1x32xf32>
    %24 = vector.broadcast %23 : vector<1x32xf32> to vector<4x32xf32>
    %25 = arith.addf %22, %24 : vector<4x32xf32>
    %cst_20 = arith.constant 0.000000e+00 : f32
    %26 = vector.broadcast %cst_20 : f32 to vector<4x32xf32>
    %27 = arith.maximumf %25, %26 : vector<4x32xf32>
    %28 = arith.truncf %27 : vector<4x32xf32> to vector<4x32xbf16>
    %cst_21 = arith.constant dense<0.000000e+00> : vector<4x12xf32>
    %29 = tpu.matmul %28, %4, %cst_21 {dimension_numbers = #tpu.dot_dimension_numbers<[1], [0], [0], [1], [0, 0, 1, 1], [], []>} : vector<4x32xbf16>, vector<32x12xbf16>, vector<4x12xf32> -> vector<4x12xf32>
    %c0_22 = arith.constant 0 : index
    %c0_23 = arith.constant 0 : index
    %30 = vector.load %arg9[%c0_22, %c0_23] : memref<1x12xf32, #tpu.memory_space<vmem>>, vector<1x12xf32>
    %31 = vector.broadcast %30 : vector<1x12xf32> to vector<4x12xf32>
    %32 = arith.addf %29, %31 : vector<4x12xf32>
    %33 = arith.negf %32 : vector<4x12xf32>
    %34 = math.exp %33 : vector<4x12xf32>
    %cst_24 = arith.constant 1.000000e+00 : f32
    %35 = vector.broadcast %cst_24 : f32 to vector<4x12xf32>
    %36 = arith.addf %35, %34 : vector<4x12xf32>
    %37 = arith.divf %35, %36 : vector<4x12xf32>
    %38 = vector.extract_strided_slice %19 {offsets = [0, 16], sizes = [4, 16], strides = [1, 1]} : vector<4x64xf32> to vector<4x16xf32>
    %39 = arith.truncf %38 : vector<4x16xf32> to vector<4x16xbf16>
    %cst_25 = arith.constant dense<0.000000e+00> : vector<4x32xf32>
    %40 = tpu.matmul %39, %3, %cst_25 {dimension_numbers = #tpu.dot_dimension_numbers<[1], [0], [0], [1], [0, 0, 1, 1], [], []>} : vector<4x16xbf16>, vector<16x32xbf16>, vector<4x32xf32> -> vector<4x32xf32>
    %c0_26 = arith.constant 0 : index
    %c0_27 = arith.constant 0 : index
    %41 = vector.load %arg7[%c0_26, %c0_27] : memref<1x32xf32, #tpu.memory_space<vmem>>, vector<1x32xf32>
    %42 = vector.broadcast %41 : vector<1x32xf32> to vector<4x32xf32>
    %43 = arith.addf %40, %42 : vector<4x32xf32>
    %cst_28 = arith.constant 0.000000e+00 : f32
    %44 = vector.broadcast %cst_28 : f32 to vector<4x32xf32>
    %45 = arith.maximumf %43, %44 : vector<4x32xf32>
    %46 = arith.truncf %45 : vector<4x32xf32> to vector<4x32xbf16>
    %cst_29 = arith.constant dense<0.000000e+00> : vector<4x12xf32>
    %47 = tpu.matmul %46, %4, %cst_29 {dimension_numbers = #tpu.dot_dimension_numbers<[1], [0], [0], [1], [0, 0, 1, 1], [], []>} : vector<4x32xbf16>, vector<32x12xbf16>, vector<4x12xf32> -> vector<4x12xf32>
    %c0_30 = arith.constant 0 : index
    %c0_31 = arith.constant 0 : index
    %48 = vector.load %arg9[%c0_30, %c0_31] : memref<1x12xf32, #tpu.memory_space<vmem>>, vector<1x12xf32>
    %49 = vector.broadcast %48 : vector<1x12xf32> to vector<4x12xf32>
    %50 = arith.addf %47, %49 : vector<4x12xf32>
    %51 = arith.negf %50 : vector<4x12xf32>
    %52 = math.exp %51 : vector<4x12xf32>
    %cst_32 = arith.constant 1.000000e+00 : f32
    %53 = vector.broadcast %cst_32 : f32 to vector<4x12xf32>
    %54 = arith.addf %53, %52 : vector<4x12xf32>
    %55 = arith.divf %53, %54 : vector<4x12xf32>
    %56 = vector.extract_strided_slice %19 {offsets = [0, 32], sizes = [4, 16], strides = [1, 1]} : vector<4x64xf32> to vector<4x16xf32>
    %57 = arith.truncf %56 : vector<4x16xf32> to vector<4x16xbf16>
    %cst_33 = arith.constant dense<0.000000e+00> : vector<4x32xf32>
    %58 = tpu.matmul %57, %3, %cst_33 {dimension_numbers = #tpu.dot_dimension_numbers<[1], [0], [0], [1], [0, 0, 1, 1], [], []>} : vector<4x16xbf16>, vector<16x32xbf16>, vector<4x32xf32> -> vector<4x32xf32>
    %c0_34 = arith.constant 0 : index
    %c0_35 = arith.constant 0 : index
    %59 = vector.load %arg7[%c0_34, %c0_35] : memref<1x32xf32, #tpu.memory_space<vmem>>, vector<1x32xf32>
    %60 = vector.broadcast %59 : vector<1x32xf32> to vector<4x32xf32>
    %61 = arith.addf %58, %60 : vector<4x32xf32>
    %cst_36 = arith.constant 0.000000e+00 : f32
    %62 = vector.broadcast %cst_36 : f32 to vector<4x32xf32>
    %63 = arith.maximumf %61, %62 : vector<4x32xf32>
    %64 = arith.truncf %63 : vector<4x32xf32> to vector<4x32xbf16>
    %cst_37 = arith.constant dense<0.000000e+00> : vector<4x12xf32>
    %65 = tpu.matmul %64, %4, %cst_37 {dimension_numbers = #tpu.dot_dimension_numbers<[1], [0], [0], [1], [0, 0, 1, 1], [], []>} : vector<4x32xbf16>, vector<32x12xbf16>, vector<4x12xf32> -> vector<4x12xf32>
    %c0_38 = arith.constant 0 : index
    %c0_39 = arith.constant 0 : index
    %66 = vector.load %arg9[%c0_38, %c0_39] : memref<1x12xf32, #tpu.memory_space<vmem>>, vector<1x12xf32>
    %67 = vector.broadcast %66 : vector<1x12xf32> to vector<4x12xf32>
    %68 = arith.addf %65, %67 : vector<4x12xf32>
    %69 = arith.negf %68 : vector<4x12xf32>
    %70 = math.exp %69 : vector<4x12xf32>
    %cst_40 = arith.constant 1.000000e+00 : f32
    %71 = vector.broadcast %cst_40 : f32 to vector<4x12xf32>
    %72 = arith.addf %71, %70 : vector<4x12xf32>
    %73 = arith.divf %71, %72 : vector<4x12xf32>
    %74 = vector.extract_strided_slice %19 {offsets = [0, 48], sizes = [4, 16], strides = [1, 1]} : vector<4x64xf32> to vector<4x16xf32>
    %75 = arith.truncf %74 : vector<4x16xf32> to vector<4x16xbf16>
    %cst_41 = arith.constant dense<0.000000e+00> : vector<4x32xf32>
    %76 = tpu.matmul %75, %3, %cst_41 {dimension_numbers = #tpu.dot_dimension_numbers<[1], [0], [0], [1], [0, 0, 1, 1], [], []>} : vector<4x16xbf16>, vector<16x32xbf16>, vector<4x32xf32> -> vector<4x32xf32>
    %c0_42 = arith.constant 0 : index
    %c0_43 = arith.constant 0 : index
    %77 = vector.load %arg7[%c0_42, %c0_43] : memref<1x32xf32, #tpu.memory_space<vmem>>, vector<1x32xf32>
    %78 = vector.broadcast %77 : vector<1x32xf32> to vector<4x32xf32>
    %79 = arith.addf %76, %78 : vector<4x32xf32>
    %cst_44 = arith.constant 0.000000e+00 : f32
    %80 = vector.broadcast %cst_44 : f32 to vector<4x32xf32>
    %81 = arith.maximumf %79, %80 : vector<4x32xf32>
    %82 = arith.truncf %81 : vector<4x32xf32> to vector<4x32xbf16>
    %cst_45 = arith.constant dense<0.000000e+00> : vector<4x12xf32>
    %83 = tpu.matmul %82, %4, %cst_45 {dimension_numbers = #tpu.dot_dimension_numbers<[1], [0], [0], [1], [0, 0, 1, 1], [], []>} : vector<4x32xbf16>, vector<32x12xbf16>, vector<4x12xf32> -> vector<4x12xf32>
    %c0_46 = arith.constant 0 : index
    %c0_47 = arith.constant 0 : index
    %84 = vector.load %arg9[%c0_46, %c0_47] : memref<1x12xf32, #tpu.memory_space<vmem>>, vector<1x12xf32>
    %85 = vector.broadcast %84 : vector<1x12xf32> to vector<4x12xf32>
    %86 = arith.addf %83, %85 : vector<4x12xf32>
    %87 = arith.negf %86 : vector<4x12xf32>
    %88 = math.exp %87 : vector<4x12xf32>
    %cst_48 = arith.constant 1.000000e+00 : f32
    %89 = vector.broadcast %cst_48 : f32 to vector<4x12xf32>
    %90 = arith.addf %89, %88 : vector<4x12xf32>
    %91 = arith.divf %89, %90 : vector<4x12xf32>
    %92 = vector.extract_strided_slice %11 {offsets = [0, 32], sizes = [4, 32], strides = [1, 1]} : vector<4x128xf32> to vector<4x32xf32>
    %93 = arith.truncf %92 : vector<4x32xf32> to vector<4x32xbf16>
    %cst_49 = arith.constant dense<0.000000e+00> : vector<4x64xf32>
    %94 = tpu.matmul %93, %2, %cst_49 {dimension_numbers = #tpu.dot_dimension_numbers<[1], [0], [0], [1], [0, 0, 1, 1], [], []>} : vector<4x32xbf16>, vector<32x64xbf16>, vector<4x64xf32> -> vector<4x64xf32>
    %c0_50 = arith.constant 0 : index
    %c0_51 = arith.constant 0 : index
    %95 = vector.load %arg5[%c0_50, %c0_51] : memref<1x64xf32, #tpu.memory_space<vmem>>, vector<1x64xf32>
    %96 = vector.broadcast %95 : vector<1x64xf32> to vector<4x64xf32>
    %97 = arith.addf %94, %96 : vector<4x64xf32>
    %cst_52 = arith.constant 0.000000e+00 : f32
    %98 = vector.broadcast %cst_52 : f32 to vector<4x64xf32>
    %99 = arith.maximumf %97, %98 : vector<4x64xf32>
    %100 = vector.extract_strided_slice %99 {offsets = [0, 0], sizes = [4, 16], strides = [1, 1]} : vector<4x64xf32> to vector<4x16xf32>
    %101 = arith.truncf %100 : vector<4x16xf32> to vector<4x16xbf16>
    %cst_53 = arith.constant dense<0.000000e+00> : vector<4x32xf32>
    %102 = tpu.matmul %101, %3, %cst_53 {dimension_numbers = #tpu.dot_dimension_numbers<[1], [0], [0], [1], [0, 0, 1, 1], [], []>} : vector<4x16xbf16>, vector<16x32xbf16>, vector<4x32xf32> -> vector<4x32xf32>
    %c0_54 = arith.constant 0 : index
    %c0_55 = arith.constant 0 : index
    %103 = vector.load %arg7[%c0_54, %c0_55] : memref<1x32xf32, #tpu.memory_space<vmem>>, vector<1x32xf32>
    %104 = vector.broadcast %103 : vector<1x32xf32> to vector<4x32xf32>
    %105 = arith.addf %102, %104 : vector<4x32xf32>
    %cst_56 = arith.constant 0.000000e+00 : f32
    %106 = vector.broadcast %cst_56 : f32 to vector<4x32xf32>
    %107 = arith.maximumf %105, %106 : vector<4x32xf32>
    %108 = arith.truncf %107 : vector<4x32xf32> to vector<4x32xbf16>
    %cst_57 = arith.constant dense<0.000000e+00> : vector<4x12xf32>
    %109 = tpu.matmul %108, %4, %cst_57 {dimension_numbers = #tpu.dot_dimension_numbers<[1], [0], [0], [1], [0, 0, 1, 1], [], []>} : vector<4x32xbf16>, vector<32x12xbf16>, vector<4x12xf32> -> vector<4x12xf32>
    %c0_58 = arith.constant 0 : index
    %c0_59 = arith.constant 0 : index
    %110 = vector.load %arg9[%c0_58, %c0_59] : memref<1x12xf32, #tpu.memory_space<vmem>>, vector<1x12xf32>
    %111 = vector.broadcast %110 : vector<1x12xf32> to vector<4x12xf32>
    %112 = arith.addf %109, %111 : vector<4x12xf32>
    %113 = arith.negf %112 : vector<4x12xf32>
    %114 = math.exp %113 : vector<4x12xf32>
    %cst_60 = arith.constant 1.000000e+00 : f32
    %115 = vector.broadcast %cst_60 : f32 to vector<4x12xf32>
    %116 = arith.addf %115, %114 : vector<4x12xf32>
    %117 = arith.divf %115, %116 : vector<4x12xf32>
    %118 = vector.extract_strided_slice %99 {offsets = [0, 16], sizes = [4, 16], strides = [1, 1]} : vector<4x64xf32> to vector<4x16xf32>
    %119 = arith.truncf %118 : vector<4x16xf32> to vector<4x16xbf16>
    %cst_61 = arith.constant dense<0.000000e+00> : vector<4x32xf32>
    %120 = tpu.matmul %119, %3, %cst_61 {dimension_numbers = #tpu.dot_dimension_numbers<[1], [0], [0], [1], [0, 0, 1, 1], [], []>} : vector<4x16xbf16>, vector<16x32xbf16>, vector<4x32xf32> -> vector<4x32xf32>
    %c0_62 = arith.constant 0 : index
    %c0_63 = arith.constant 0 : index
    %121 = vector.load %arg7[%c0_62, %c0_63] : memref<1x32xf32, #tpu.memory_space<vmem>>, vector<1x32xf32>
    %122 = vector.broadcast %121 : vector<1x32xf32> to vector<4x32xf32>
    %123 = arith.addf %120, %122 : vector<4x32xf32>
    %cst_64 = arith.constant 0.000000e+00 : f32
    %124 = vector.broadcast %cst_64 : f32 to vector<4x32xf32>
    %125 = arith.maximumf %123, %124 : vector<4x32xf32>
    %126 = arith.truncf %125 : vector<4x32xf32> to vector<4x32xbf16>
    %cst_65 = arith.constant dense<0.000000e+00> : vector<4x12xf32>
    %127 = tpu.matmul %126, %4, %cst_65 {dimension_numbers = #tpu.dot_dimension_numbers<[1], [0], [0], [1], [0, 0, 1, 1], [], []>} : vector<4x32xbf16>, vector<32x12xbf16>, vector<4x12xf32> -> vector<4x12xf32>
    %c0_66 = arith.constant 0 : index
    %c0_67 = arith.constant 0 : index
    %128 = vector.load %arg9[%c0_66, %c0_67] : memref<1x12xf32, #tpu.memory_space<vmem>>, vector<1x12xf32>
    %129 = vector.broadcast %128 : vector<1x12xf32> to vector<4x12xf32>
    %130 = arith.addf %127, %129 : vector<4x12xf32>
    %131 = arith.negf %130 : vector<4x12xf32>
    %132 = math.exp %131 : vector<4x12xf32>
    %cst_68 = arith.constant 1.000000e+00 : f32
    %133 = vector.broadcast %cst_68 : f32 to vector<4x12xf32>
    %134 = arith.addf %133, %132 : vector<4x12xf32>
    %135 = arith.divf %133, %134 : vector<4x12xf32>
    %136 = vector.extract_strided_slice %99 {offsets = [0, 32], sizes = [4, 16], strides = [1, 1]} : vector<4x64xf32> to vector<4x16xf32>
    %137 = arith.truncf %136 : vector<4x16xf32> to vector<4x16xbf16>
    %cst_69 = arith.constant dense<0.000000e+00> : vector<4x32xf32>
    %138 = tpu.matmul %137, %3, %cst_69 {dimension_numbers = #tpu.dot_dimension_numbers<[1], [0], [0], [1], [0, 0, 1, 1], [], []>} : vector<4x16xbf16>, vector<16x32xbf16>, vector<4x32xf32> -> vector<4x32xf32>
    %c0_70 = arith.constant 0 : index
    %c0_71 = arith.constant 0 : index
    %139 = vector.load %arg7[%c0_70, %c0_71] : memref<1x32xf32, #tpu.memory_space<vmem>>, vector<1x32xf32>
    %140 = vector.broadcast %139 : vector<1x32xf32> to vector<4x32xf32>
    %141 = arith.addf %138, %140 : vector<4x32xf32>
    %cst_72 = arith.constant 0.000000e+00 : f32
    %142 = vector.broadcast %cst_72 : f32 to vector<4x32xf32>
    %143 = arith.maximumf %141, %142 : vector<4x32xf32>
    %144 = arith.truncf %143 : vector<4x32xf32> to vector<4x32xbf16>
    %cst_73 = arith.constant dense<0.000000e+00> : vector<4x12xf32>
    %145 = tpu.matmul %144, %4, %cst_73 {dimension_numbers = #tpu.dot_dimension_numbers<[1], [0], [0], [1], [0, 0, 1, 1], [], []>} : vector<4x32xbf16>, vector<32x12xbf16>, vector<4x12xf32> -> vector<4x12xf32>
    %c0_74 = arith.constant 0 : index
    %c0_75 = arith.constant 0 : index
    %146 = vector.load %arg9[%c0_74, %c0_75] : memref<1x12xf32, #tpu.memory_space<vmem>>, vector<1x12xf32>
    %147 = vector.broadcast %146 : vector<1x12xf32> to vector<4x12xf32>
    %148 = arith.addf %145, %147 : vector<4x12xf32>
    %149 = arith.negf %148 : vector<4x12xf32>
    %150 = math.exp %149 : vector<4x12xf32>
    %cst_76 = arith.constant 1.000000e+00 : f32
    %151 = vector.broadcast %cst_76 : f32 to vector<4x12xf32>
    %152 = arith.addf %151, %150 : vector<4x12xf32>
    %153 = arith.divf %151, %152 : vector<4x12xf32>
    %154 = vector.extract_strided_slice %99 {offsets = [0, 48], sizes = [4, 16], strides = [1, 1]} : vector<4x64xf32> to vector<4x16xf32>
    %155 = arith.truncf %154 : vector<4x16xf32> to vector<4x16xbf16>
    %cst_77 = arith.constant dense<0.000000e+00> : vector<4x32xf32>
    %156 = tpu.matmul %155, %3, %cst_77 {dimension_numbers = #tpu.dot_dimension_numbers<[1], [0], [0], [1], [0, 0, 1, 1], [], []>} : vector<4x16xbf16>, vector<16x32xbf16>, vector<4x32xf32> -> vector<4x32xf32>
    %c0_78 = arith.constant 0 : index
    %c0_79 = arith.constant 0 : index
    %157 = vector.load %arg7[%c0_78, %c0_79] : memref<1x32xf32, #tpu.memory_space<vmem>>, vector<1x32xf32>
    %158 = vector.broadcast %157 : vector<1x32xf32> to vector<4x32xf32>
    %159 = arith.addf %156, %158 : vector<4x32xf32>
    %cst_80 = arith.constant 0.000000e+00 : f32
    %160 = vector.broadcast %cst_80 : f32 to vector<4x32xf32>
    %161 = arith.maximumf %159, %160 : vector<4x32xf32>
    %162 = arith.truncf %161 : vector<4x32xf32> to vector<4x32xbf16>
    %cst_81 = arith.constant dense<0.000000e+00> : vector<4x12xf32>
    %163 = tpu.matmul %162, %4, %cst_81 {dimension_numbers = #tpu.dot_dimension_numbers<[1], [0], [0], [1], [0, 0, 1, 1], [], []>} : vector<4x32xbf16>, vector<32x12xbf16>, vector<4x12xf32> -> vector<4x12xf32>
    %c0_82 = arith.constant 0 : index
    %c0_83 = arith.constant 0 : index
    %164 = vector.load %arg9[%c0_82, %c0_83] : memref<1x12xf32, #tpu.memory_space<vmem>>, vector<1x12xf32>
    %165 = vector.broadcast %164 : vector<1x12xf32> to vector<4x12xf32>
    %166 = arith.addf %163, %165 : vector<4x12xf32>
    %167 = arith.negf %166 : vector<4x12xf32>
    %168 = math.exp %167 : vector<4x12xf32>
    %cst_84 = arith.constant 1.000000e+00 : f32
    %169 = vector.broadcast %cst_84 : f32 to vector<4x12xf32>
    %170 = arith.addf %169, %168 : vector<4x12xf32>
    %171 = arith.divf %169, %170 : vector<4x12xf32>
    %172 = vector.extract_strided_slice %11 {offsets = [0, 64], sizes = [4, 32], strides = [1, 1]} : vector<4x128xf32> to vector<4x32xf32>
    %173 = arith.truncf %172 : vector<4x32xf32> to vector<4x32xbf16>
    %cst_85 = arith.constant dense<0.000000e+00> : vector<4x64xf32>
    %174 = tpu.matmul %173, %2, %cst_85 {dimension_numbers = #tpu.dot_dimension_numbers<[1], [0], [0], [1], [0, 0, 1, 1], [], []>} : vector<4x32xbf16>, vector<32x64xbf16>, vector<4x64xf32> -> vector<4x64xf32>
    %c0_86 = arith.constant 0 : index
    %c0_87 = arith.constant 0 : index
    %175 = vector.load %arg5[%c0_86, %c0_87] : memref<1x64xf32, #tpu.memory_space<vmem>>, vector<1x64xf32>
    %176 = vector.broadcast %175 : vector<1x64xf32> to vector<4x64xf32>
    %177 = arith.addf %174, %176 : vector<4x64xf32>
    %cst_88 = arith.constant 0.000000e+00 : f32
    %178 = vector.broadcast %cst_88 : f32 to vector<4x64xf32>
    %179 = arith.maximumf %177, %178 : vector<4x64xf32>
    %180 = vector.extract_strided_slice %179 {offsets = [0, 0], sizes = [4, 16], strides = [1, 1]} : vector<4x64xf32> to vector<4x16xf32>
    %181 = arith.truncf %180 : vector<4x16xf32> to vector<4x16xbf16>
    %cst_89 = arith.constant dense<0.000000e+00> : vector<4x32xf32>
    %182 = tpu.matmul %181, %3, %cst_89 {dimension_numbers = #tpu.dot_dimension_numbers<[1], [0], [0], [1], [0, 0, 1, 1], [], []>} : vector<4x16xbf16>, vector<16x32xbf16>, vector<4x32xf32> -> vector<4x32xf32>
    %c0_90 = arith.constant 0 : index
    %c0_91 = arith.constant 0 : index
    %183 = vector.load %arg7[%c0_90, %c0_91] : memref<1x32xf32, #tpu.memory_space<vmem>>, vector<1x32xf32>
    %184 = vector.broadcast %183 : vector<1x32xf32> to vector<4x32xf32>
    %185 = arith.addf %182, %184 : vector<4x32xf32>
    %cst_92 = arith.constant 0.000000e+00 : f32
    %186 = vector.broadcast %cst_92 : f32 to vector<4x32xf32>
    %187 = arith.maximumf %185, %186 : vector<4x32xf32>
    %188 = arith.truncf %187 : vector<4x32xf32> to vector<4x32xbf16>
    %cst_93 = arith.constant dense<0.000000e+00> : vector<4x12xf32>
    %189 = tpu.matmul %188, %4, %cst_93 {dimension_numbers = #tpu.dot_dimension_numbers<[1], [0], [0], [1], [0, 0, 1, 1], [], []>} : vector<4x32xbf16>, vector<32x12xbf16>, vector<4x12xf32> -> vector<4x12xf32>
    %c0_94 = arith.constant 0 : index
    %c0_95 = arith.constant 0 : index
    %190 = vector.load %arg9[%c0_94, %c0_95] : memref<1x12xf32, #tpu.memory_space<vmem>>, vector<1x12xf32>
    %191 = vector.broadcast %190 : vector<1x12xf32> to vector<4x12xf32>
    %192 = arith.addf %189, %191 : vector<4x12xf32>
    %193 = arith.negf %192 : vector<4x12xf32>
    %194 = math.exp %193 : vector<4x12xf32>
    %cst_96 = arith.constant 1.000000e+00 : f32
    %195 = vector.broadcast %cst_96 : f32 to vector<4x12xf32>
    %196 = arith.addf %195, %194 : vector<4x12xf32>
    %197 = arith.divf %195, %196 : vector<4x12xf32>
    %198 = vector.extract_strided_slice %179 {offsets = [0, 16], sizes = [4, 16], strides = [1, 1]} : vector<4x64xf32> to vector<4x16xf32>
    %199 = arith.truncf %198 : vector<4x16xf32> to vector<4x16xbf16>
    %cst_97 = arith.constant dense<0.000000e+00> : vector<4x32xf32>
    %200 = tpu.matmul %199, %3, %cst_97 {dimension_numbers = #tpu.dot_dimension_numbers<[1], [0], [0], [1], [0, 0, 1, 1], [], []>} : vector<4x16xbf16>, vector<16x32xbf16>, vector<4x32xf32> -> vector<4x32xf32>
    %c0_98 = arith.constant 0 : index
    %c0_99 = arith.constant 0 : index
    %201 = vector.load %arg7[%c0_98, %c0_99] : memref<1x32xf32, #tpu.memory_space<vmem>>, vector<1x32xf32>
    %202 = vector.broadcast %201 : vector<1x32xf32> to vector<4x32xf32>
    %203 = arith.addf %200, %202 : vector<4x32xf32>
    %cst_100 = arith.constant 0.000000e+00 : f32
    %204 = vector.broadcast %cst_100 : f32 to vector<4x32xf32>
    %205 = arith.maximumf %203, %204 : vector<4x32xf32>
    %206 = arith.truncf %205 : vector<4x32xf32> to vector<4x32xbf16>
    %cst_101 = arith.constant dense<0.000000e+00> : vector<4x12xf32>
    %207 = tpu.matmul %206, %4, %cst_101 {dimension_numbers = #tpu.dot_dimension_numbers<[1], [0], [0], [1], [0, 0, 1, 1], [], []>} : vector<4x32xbf16>, vector<32x12xbf16>, vector<4x12xf32> -> vector<4x12xf32>
    %c0_102 = arith.constant 0 : index
    %c0_103 = arith.constant 0 : index
    %208 = vector.load %arg9[%c0_102, %c0_103] : memref<1x12xf32, #tpu.memory_space<vmem>>, vector<1x12xf32>
    %209 = vector.broadcast %208 : vector<1x12xf32> to vector<4x12xf32>
    %210 = arith.addf %207, %209 : vector<4x12xf32>
    %211 = arith.negf %210 : vector<4x12xf32>
    %212 = math.exp %211 : vector<4x12xf32>
    %cst_104 = arith.constant 1.000000e+00 : f32
    %213 = vector.broadcast %cst_104 : f32 to vector<4x12xf32>
    %214 = arith.addf %213, %212 : vector<4x12xf32>
    %215 = arith.divf %213, %214 : vector<4x12xf32>
    %216 = vector.extract_strided_slice %179 {offsets = [0, 32], sizes = [4, 16], strides = [1, 1]} : vector<4x64xf32> to vector<4x16xf32>
    %217 = arith.truncf %216 : vector<4x16xf32> to vector<4x16xbf16>
    %cst_105 = arith.constant dense<0.000000e+00> : vector<4x32xf32>
    %218 = tpu.matmul %217, %3, %cst_105 {dimension_numbers = #tpu.dot_dimension_numbers<[1], [0], [0], [1], [0, 0, 1, 1], [], []>} : vector<4x16xbf16>, vector<16x32xbf16>, vector<4x32xf32> -> vector<4x32xf32>
    %c0_106 = arith.constant 0 : index
    %c0_107 = arith.constant 0 : index
    %219 = vector.load %arg7[%c0_106, %c0_107] : memref<1x32xf32, #tpu.memory_space<vmem>>, vector<1x32xf32>
    %220 = vector.broadcast %219 : vector<1x32xf32> to vector<4x32xf32>
    %221 = arith.addf %218, %220 : vector<4x32xf32>
    %cst_108 = arith.constant 0.000000e+00 : f32
    %222 = vector.broadcast %cst_108 : f32 to vector<4x32xf32>
    %223 = arith.maximumf %221, %222 : vector<4x32xf32>
    %224 = arith.truncf %223 : vector<4x32xf32> to vector<4x32xbf16>
    %cst_109 = arith.constant dense<0.000000e+00> : vector<4x12xf32>
    %225 = tpu.matmul %224, %4, %cst_109 {dimension_numbers = #tpu.dot_dimension_numbers<[1], [0], [0], [1], [0, 0, 1, 1], [], []>} : vector<4x32xbf16>, vector<32x12xbf16>, vector<4x12xf32> -> vector<4x12xf32>
    %c0_110 = arith.constant 0 : index
    %c0_111 = arith.constant 0 : index
    %226 = vector.load %arg9[%c0_110, %c0_111] : memref<1x12xf32, #tpu.memory_space<vmem>>, vector<1x12xf32>
    %227 = vector.broadcast %226 : vector<1x12xf32> to vector<4x12xf32>
    %228 = arith.addf %225, %227 : vector<4x12xf32>
    %229 = arith.negf %228 : vector<4x12xf32>
    %230 = math.exp %229 : vector<4x12xf32>
    %cst_112 = arith.constant 1.000000e+00 : f32
    %231 = vector.broadcast %cst_112 : f32 to vector<4x12xf32>
    %232 = arith.addf %231, %230 : vector<4x12xf32>
    %233 = arith.divf %231, %232 : vector<4x12xf32>
    %234 = vector.extract_strided_slice %179 {offsets = [0, 48], sizes = [4, 16], strides = [1, 1]} : vector<4x64xf32> to vector<4x16xf32>
    %235 = arith.truncf %234 : vector<4x16xf32> to vector<4x16xbf16>
    %cst_113 = arith.constant dense<0.000000e+00> : vector<4x32xf32>
    %236 = tpu.matmul %235, %3, %cst_113 {dimension_numbers = #tpu.dot_dimension_numbers<[1], [0], [0], [1], [0, 0, 1, 1], [], []>} : vector<4x16xbf16>, vector<16x32xbf16>, vector<4x32xf32> -> vector<4x32xf32>
    %c0_114 = arith.constant 0 : index
    %c0_115 = arith.constant 0 : index
    %237 = vector.load %arg7[%c0_114, %c0_115] : memref<1x32xf32, #tpu.memory_space<vmem>>, vector<1x32xf32>
    %238 = vector.broadcast %237 : vector<1x32xf32> to vector<4x32xf32>
    %239 = arith.addf %236, %238 : vector<4x32xf32>
    %cst_116 = arith.constant 0.000000e+00 : f32
    %240 = vector.broadcast %cst_116 : f32 to vector<4x32xf32>
    %241 = arith.maximumf %239, %240 : vector<4x32xf32>
    %242 = arith.truncf %241 : vector<4x32xf32> to vector<4x32xbf16>
    %cst_117 = arith.constant dense<0.000000e+00> : vector<4x12xf32>
    %243 = tpu.matmul %242, %4, %cst_117 {dimension_numbers = #tpu.dot_dimension_numbers<[1], [0], [0], [1], [0, 0, 1, 1], [], []>} : vector<4x32xbf16>, vector<32x12xbf16>, vector<4x12xf32> -> vector<4x12xf32>
    %c0_118 = arith.constant 0 : index
    %c0_119 = arith.constant 0 : index
    %244 = vector.load %arg9[%c0_118, %c0_119] : memref<1x12xf32, #tpu.memory_space<vmem>>, vector<1x12xf32>
    %245 = vector.broadcast %244 : vector<1x12xf32> to vector<4x12xf32>
    %246 = arith.addf %243, %245 : vector<4x12xf32>
    %247 = arith.negf %246 : vector<4x12xf32>
    %248 = math.exp %247 : vector<4x12xf32>
    %cst_120 = arith.constant 1.000000e+00 : f32
    %249 = vector.broadcast %cst_120 : f32 to vector<4x12xf32>
    %250 = arith.addf %249, %248 : vector<4x12xf32>
    %251 = arith.divf %249, %250 : vector<4x12xf32>
    %252 = vector.extract_strided_slice %11 {offsets = [0, 96], sizes = [4, 32], strides = [1, 1]} : vector<4x128xf32> to vector<4x32xf32>
    %253 = arith.truncf %252 : vector<4x32xf32> to vector<4x32xbf16>
    %cst_121 = arith.constant dense<0.000000e+00> : vector<4x64xf32>
    %254 = tpu.matmul %253, %2, %cst_121 {dimension_numbers = #tpu.dot_dimension_numbers<[1], [0], [0], [1], [0, 0, 1, 1], [], []>} : vector<4x32xbf16>, vector<32x64xbf16>, vector<4x64xf32> -> vector<4x64xf32>
    %c0_122 = arith.constant 0 : index
    %c0_123 = arith.constant 0 : index
    %255 = vector.load %arg5[%c0_122, %c0_123] : memref<1x64xf32, #tpu.memory_space<vmem>>, vector<1x64xf32>
    %256 = vector.broadcast %255 : vector<1x64xf32> to vector<4x64xf32>
    %257 = arith.addf %254, %256 : vector<4x64xf32>
    %cst_124 = arith.constant 0.000000e+00 : f32
    %258 = vector.broadcast %cst_124 : f32 to vector<4x64xf32>
    %259 = arith.maximumf %257, %258 : vector<4x64xf32>
    %260 = vector.extract_strided_slice %259 {offsets = [0, 0], sizes = [4, 16], strides = [1, 1]} : vector<4x64xf32> to vector<4x16xf32>
    %261 = arith.truncf %260 : vector<4x16xf32> to vector<4x16xbf16>
    %cst_125 = arith.constant dense<0.000000e+00> : vector<4x32xf32>
    %262 = tpu.matmul %261, %3, %cst_125 {dimension_numbers = #tpu.dot_dimension_numbers<[1], [0], [0], [1], [0, 0, 1, 1], [], []>} : vector<4x16xbf16>, vector<16x32xbf16>, vector<4x32xf32> -> vector<4x32xf32>
    %c0_126 = arith.constant 0 : index
    %c0_127 = arith.constant 0 : index
    %263 = vector.load %arg7[%c0_126, %c0_127] : memref<1x32xf32, #tpu.memory_space<vmem>>, vector<1x32xf32>
    %264 = vector.broadcast %263 : vector<1x32xf32> to vector<4x32xf32>
    %265 = arith.addf %262, %264 : vector<4x32xf32>
    %cst_128 = arith.constant 0.000000e+00 : f32
    %266 = vector.broadcast %cst_128 : f32 to vector<4x32xf32>
    %267 = arith.maximumf %265, %266 : vector<4x32xf32>
    %268 = arith.truncf %267 : vector<4x32xf32> to vector<4x32xbf16>
    %cst_129 = arith.constant dense<0.000000e+00> : vector<4x12xf32>
    %269 = tpu.matmul %268, %4, %cst_129 {dimension_numbers = #tpu.dot_dimension_numbers<[1], [0], [0], [1], [0, 0, 1, 1], [], []>} : vector<4x32xbf16>, vector<32x12xbf16>, vector<4x12xf32> -> vector<4x12xf32>
    %c0_130 = arith.constant 0 : index
    %c0_131 = arith.constant 0 : index
    %270 = vector.load %arg9[%c0_130, %c0_131] : memref<1x12xf32, #tpu.memory_space<vmem>>, vector<1x12xf32>
    %271 = vector.broadcast %270 : vector<1x12xf32> to vector<4x12xf32>
    %272 = arith.addf %269, %271 : vector<4x12xf32>
    %273 = arith.negf %272 : vector<4x12xf32>
    %274 = math.exp %273 : vector<4x12xf32>
    %cst_132 = arith.constant 1.000000e+00 : f32
    %275 = vector.broadcast %cst_132 : f32 to vector<4x12xf32>
    %276 = arith.addf %275, %274 : vector<4x12xf32>
    %277 = arith.divf %275, %276 : vector<4x12xf32>
    %278 = vector.extract_strided_slice %259 {offsets = [0, 16], sizes = [4, 16], strides = [1, 1]} : vector<4x64xf32> to vector<4x16xf32>
    %279 = arith.truncf %278 : vector<4x16xf32> to vector<4x16xbf16>
    %cst_133 = arith.constant dense<0.000000e+00> : vector<4x32xf32>
    %280 = tpu.matmul %279, %3, %cst_133 {dimension_numbers = #tpu.dot_dimension_numbers<[1], [0], [0], [1], [0, 0, 1, 1], [], []>} : vector<4x16xbf16>, vector<16x32xbf16>, vector<4x32xf32> -> vector<4x32xf32>
    %c0_134 = arith.constant 0 : index
    %c0_135 = arith.constant 0 : index
    %281 = vector.load %arg7[%c0_134, %c0_135] : memref<1x32xf32, #tpu.memory_space<vmem>>, vector<1x32xf32>
    %282 = vector.broadcast %281 : vector<1x32xf32> to vector<4x32xf32>
    %283 = arith.addf %280, %282 : vector<4x32xf32>
    %cst_136 = arith.constant 0.000000e+00 : f32
    %284 = vector.broadcast %cst_136 : f32 to vector<4x32xf32>
    %285 = arith.maximumf %283, %284 : vector<4x32xf32>
    %286 = arith.truncf %285 : vector<4x32xf32> to vector<4x32xbf16>
    %cst_137 = arith.constant dense<0.000000e+00> : vector<4x12xf32>
    %287 = tpu.matmul %286, %4, %cst_137 {dimension_numbers = #tpu.dot_dimension_numbers<[1], [0], [0], [1], [0, 0, 1, 1], [], []>} : vector<4x32xbf16>, vector<32x12xbf16>, vector<4x12xf32> -> vector<4x12xf32>
    %c0_138 = arith.constant 0 : index
    %c0_139 = arith.constant 0 : index
    %288 = vector.load %arg9[%c0_138, %c0_139] : memref<1x12xf32, #tpu.memory_space<vmem>>, vector<1x12xf32>
    %289 = vector.broadcast %288 : vector<1x12xf32> to vector<4x12xf32>
    %290 = arith.addf %287, %289 : vector<4x12xf32>
    %291 = arith.negf %290 : vector<4x12xf32>
    %292 = math.exp %291 : vector<4x12xf32>
    %cst_140 = arith.constant 1.000000e+00 : f32
    %293 = vector.broadcast %cst_140 : f32 to vector<4x12xf32>
    %294 = arith.addf %293, %292 : vector<4x12xf32>
    %295 = arith.divf %293, %294 : vector<4x12xf32>
    %296 = vector.extract_strided_slice %259 {offsets = [0, 32], sizes = [4, 16], strides = [1, 1]} : vector<4x64xf32> to vector<4x16xf32>
    %297 = arith.truncf %296 : vector<4x16xf32> to vector<4x16xbf16>
    %cst_141 = arith.constant dense<0.000000e+00> : vector<4x32xf32>
    %298 = tpu.matmul %297, %3, %cst_141 {dimension_numbers = #tpu.dot_dimension_numbers<[1], [0], [0], [1], [0, 0, 1, 1], [], []>} : vector<4x16xbf16>, vector<16x32xbf16>, vector<4x32xf32> -> vector<4x32xf32>
    %c0_142 = arith.constant 0 : index
    %c0_143 = arith.constant 0 : index
    %299 = vector.load %arg7[%c0_142, %c0_143] : memref<1x32xf32, #tpu.memory_space<vmem>>, vector<1x32xf32>
    %300 = vector.broadcast %299 : vector<1x32xf32> to vector<4x32xf32>
    %301 = arith.addf %298, %300 : vector<4x32xf32>
    %cst_144 = arith.constant 0.000000e+00 : f32
    %302 = vector.broadcast %cst_144 : f32 to vector<4x32xf32>
    %303 = arith.maximumf %301, %302 : vector<4x32xf32>
    %304 = arith.truncf %303 : vector<4x32xf32> to vector<4x32xbf16>
    %cst_145 = arith.constant dense<0.000000e+00> : vector<4x12xf32>
    %305 = tpu.matmul %304, %4, %cst_145 {dimension_numbers = #tpu.dot_dimension_numbers<[1], [0], [0], [1], [0, 0, 1, 1], [], []>} : vector<4x32xbf16>, vector<32x12xbf16>, vector<4x12xf32> -> vector<4x12xf32>
    %c0_146 = arith.constant 0 : index
    %c0_147 = arith.constant 0 : index
    %306 = vector.load %arg9[%c0_146, %c0_147] : memref<1x12xf32, #tpu.memory_space<vmem>>, vector<1x12xf32>
    %307 = vector.broadcast %306 : vector<1x12xf32> to vector<4x12xf32>
    %308 = arith.addf %305, %307 : vector<4x12xf32>
    %309 = arith.negf %308 : vector<4x12xf32>
    %310 = math.exp %309 : vector<4x12xf32>
    %cst_148 = arith.constant 1.000000e+00 : f32
    %311 = vector.broadcast %cst_148 : f32 to vector<4x12xf32>
    %312 = arith.addf %311, %310 : vector<4x12xf32>
    %313 = arith.divf %311, %312 : vector<4x12xf32>
    %314 = vector.extract_strided_slice %259 {offsets = [0, 48], sizes = [4, 16], strides = [1, 1]} : vector<4x64xf32> to vector<4x16xf32>
    %315 = arith.truncf %314 : vector<4x16xf32> to vector<4x16xbf16>
    %cst_149 = arith.constant dense<0.000000e+00> : vector<4x32xf32>
    %316 = tpu.matmul %315, %3, %cst_149 {dimension_numbers = #tpu.dot_dimension_numbers<[1], [0], [0], [1], [0, 0, 1, 1], [], []>} : vector<4x16xbf16>, vector<16x32xbf16>, vector<4x32xf32> -> vector<4x32xf32>
    %c0_150 = arith.constant 0 : index
    %c0_151 = arith.constant 0 : index
    %317 = vector.load %arg7[%c0_150, %c0_151] : memref<1x32xf32, #tpu.memory_space<vmem>>, vector<1x32xf32>
    %318 = vector.broadcast %317 : vector<1x32xf32> to vector<4x32xf32>
    %319 = arith.addf %316, %318 : vector<4x32xf32>
    %cst_152 = arith.constant 0.000000e+00 : f32
    %320 = vector.broadcast %cst_152 : f32 to vector<4x32xf32>
    %321 = arith.maximumf %319, %320 : vector<4x32xf32>
    %322 = arith.truncf %321 : vector<4x32xf32> to vector<4x32xbf16>
    %cst_153 = arith.constant dense<0.000000e+00> : vector<4x12xf32>
    %323 = tpu.matmul %322, %4, %cst_153 {dimension_numbers = #tpu.dot_dimension_numbers<[1], [0], [0], [1], [0, 0, 1, 1], [], []>} : vector<4x32xbf16>, vector<32x12xbf16>, vector<4x12xf32> -> vector<4x12xf32>
    %c0_154 = arith.constant 0 : index
    %c0_155 = arith.constant 0 : index
    %324 = vector.load %arg9[%c0_154, %c0_155] : memref<1x12xf32, #tpu.memory_space<vmem>>, vector<1x12xf32>
    %325 = vector.broadcast %324 : vector<1x12xf32> to vector<4x12xf32>
    %326 = arith.addf %323, %325 : vector<4x12xf32>
    %327 = arith.negf %326 : vector<4x12xf32>
    %328 = math.exp %327 : vector<4x12xf32>
    %cst_156 = arith.constant 1.000000e+00 : f32
    %329 = vector.broadcast %cst_156 : f32 to vector<4x12xf32>
    %330 = arith.addf %329, %328 : vector<4x12xf32>
    %331 = arith.divf %329, %330 : vector<4x12xf32>
    %332 = tpu.concatenate %37, %55, %73, %91, %117, %135, %153, %171, %197, %215, %233, %251, %277, %295, %313, %331 in 1 : vector<4x12xf32>, vector<4x12xf32>, vector<4x12xf32>, vector<4x12xf32>, vector<4x12xf32>, vector<4x12xf32>, vector<4x12xf32>, vector<4x12xf32>, vector<4x12xf32>, vector<4x12xf32>, vector<4x12xf32>, vector<4x12xf32>, vector<4x12xf32>, vector<4x12xf32>, vector<4x12xf32>, vector<4x12xf32> -> vector<4x192xf32>
    %c0_157 = arith.constant 0 : index
    %c0_158 = arith.constant 0 : index
    %c0_159 = arith.constant 0 : index
    %333 = vector.load %arg10[%c0_157, %c0_158, %c0_159] : memref<1x4x192xf32, #tpu.memory_space<vmem>>, vector<1x4x192xf32>
    %334 = vector.shape_cast %333 : vector<1x4x192xf32> to vector<4x192xf32>
    %335 = vector.shape_cast %332 : vector<4x192xf32> to vector<1x4x192xf32>
    tpu.vector_store %arg10[%c0_157, %c0_158, %c0_159], %335 {strides = array<i32>} : memref<1x4x192xf32, #tpu.memory_space<vmem>>, vector<1x4x192xf32>,
    return
  }
  func.func @transform_0(%arg0: i32) -> (i32, i32, i32) {
    %c0_i32 = arith.constant 0 : i32
    %c0_i32_0 = arith.constant 0 : i32
    %c0_i32_1 = arith.constant 0 : i32
    return %arg0, %c0_i32, %c0_i32_0 : i32, i32, i32
  }
  func.func @transform_1(%arg0: i32) -> (i32, i32) {
    %c0_i32 = arith.constant 0 : i32
    %c0_i32_0 = arith.constant 0 : i32
    %c0_i32_1 = arith.constant 0 : i32
    return %c0_i32, %c0_i32_0 : i32, i32
  }
  func.func @transform_2(%arg0: i32) -> (i32, i32) {
    %c0_i32 = arith.constant 0 : i32
    %c0_i32_0 = arith.constant 0 : i32
    %c0_i32_1 = arith.constant 0 : i32
    return %c0_i32, %c0_i32_0 : i32, i32
  }
  func.func @transform_3(%arg0: i32) -> (i32, i32) {
    %c0_i32 = arith.constant 0 : i32
    %c0_i32_0 = arith.constant 0 : i32
    %c0_i32_1 = arith.constant 0 : i32
    return %c0_i32, %c0_i32_0 : i32, i32
  }
  func.func @transform_4(%arg0: i32) -> (i32, i32) {
    %c0_i32 = arith.constant 0 : i32
    %c0_i32_0 = arith.constant 0 : i32
    %c0_i32_1 = arith.constant 0 : i32
    return %c0_i32, %c0_i32_0 : i32, i32
  }
  func.func @transform_5(%arg0: i32) -> (i32, i32) {
    %c0_i32 = arith.constant 0 : i32
    %c0_i32_0 = arith.constant 0 : i32
    %c0_i32_1 = arith.constant 0 : i32
    return %c0_i32, %c0_i32_0 : i32, i32
  }
  func.func @transform_6(%arg0: i32) -> (i32, i32) {
    %c0_i32 = arith.constant 0 : i32
    %c0_i32_0 = arith.constant 0 : i32
    %c0_i32_1 = arith.constant 0 : i32
    return %c0_i32, %c0_i32_0 : i32, i32
  }
  func.func @transform_7(%arg0: i32) -> (i32, i32) {
    %c0_i32 = arith.constant 0 : i32
    %c0_i32_0 = arith.constant 0 : i32
    %c0_i32_1 = arith.constant 0 : i32
    return %c0_i32, %c0_i32_0 : i32, i32
  }
  func.func @transform_8(%arg0: i32) -> (i32, i32) {
    %c0_i32 = arith.constant 0 : i32
    %c0_i32_0 = arith.constant 0 : i32
    %c0_i32_1 = arith.constant 0 : i32
    return %c0_i32, %c0_i32_0 : i32, i32
  }
  func.func @transform_9(%arg0: i32) -> (i32, i32, i32) {
    %c0_i32 = arith.constant 0 : i32
    %c0_i32_0 = arith.constant 0 : i32
    %c0_i32_1 = arith.constant 0 : i32
    return %arg0, %c0_i32, %c0_i32_0 : i32, i32, i32
  }
}

</mosaic_0001>

<llo_original>
// kernel: tile.23
$region0: #{tile.23}
  #allocation0 [shape = 's32[1]{0}', space=sflag, size = 0x4, scoped, tag = 'scoped memory for tile.23']
  %s0 = inlined_call_operand.vmem [shape: f32[32], index: 0, kind: input, shape index: {}]
  %s1 = inlined_call_operand.vmem [shape: f32[4,32], index: 1, kind: output, shape index: {}]
  // Predicated region
  $region2: #{tile.23} parent=0 // pred_check
    _
  $region3: #{tile.23} parent=0 // pred_check_branch
    %3 = sbr.rel (0) target = $region5
  $region4: #{tile.23} parent=0 // pred_region
    _
  $region5: #{tile.23} parent=0 // pred_fallthru
    _
  %v4 = vld [vmem:[%s0] ss:$0 sm:$0xff]
  %5 = vst [vmem:[%s1] sm:$0xf] %v4

// kernel: tile.28
$region0: #{tile.28}
  #allocation0 [shape = 's32[1]{0}', space=sflag, size = 0x4, scoped, tag = 'scoped memory for tile.28']
  %s0 = inlined_call_operand.vmem [shape: f32[16], index: 0, kind: input, shape index: {}]
  %s1 = inlined_call_operand.vmem [shape: f32[4,16], index: 1, kind: output, shape index: {}]
  // Predicated region
  $region2: #{tile.28} parent=0 // pred_check
    _
  $region3: #{tile.28} parent=0 // pred_check_branch
    %3 = sbr.rel (0) target = $region5
  $region4: #{tile.28} parent=0 // pred_region
    _
  $region5: #{tile.28} parent=0 // pred_fallthru
    _
  %v4 = vld [vmem:[%s0] ss:$0 sm:$0xff]
  %5 = vst [vmem:[%s1] sm:$0xf] %v4

// kernel: tile.29
$region0: #{tile.29}
  %s0 = inlined_call_operand.vmem [shape: f32[4,16], index: 0, kind: input, shape index: {}]
  %s1 = inlined_call_operand.vmem [shape: f32[1,64], index: 1, kind: output, shape index: {}]
  $region1: #{tile.29} parent=0
    #allocation0 [shape = 'u8[4096]{0}', space=vmem, size = 0x1000, scoped, tag = 'scoped mem for output reshape']
    #allocation1 [shape = 'u8[4096]{0}', space=vmem, size = 0x1000, scoped, tag = 'scoped mem for input reshape']
    %s3 = ssub.s32 16, 1
    %v4 = vld [vmem:[%s0] sm:%s3]
    %5 = vst [vmem:[#allocation1] sm:%s3] %v4
    %v6 = vld [vmem:[#allocation1] sm:$0x1]
    %vm7 = vcmask 130048
    %8 = vst.msk [vmem:[#allocation0] sm:$0x1] %vm7, %v6
    %s9 = scalar_lea.vmem [#allocation1], 3
    %v10 = vld [vmem:[%s9] sm:$0x1]
    %11 = vrot.lane.b32.xlu0 %v10, 48
    %v12 = vpop.permute.xlu0 %11
    %vm13 = vcmask 523648
    %14 = vst.msk [vmem:[#allocation0] sm:$0x1] %vm13, %v12
    %s15 = scalar_lea.vmem [#allocation1], 2
    %v16 = vld [vmem:[%s15] sm:$0x1]
    %17 = vrot.lane.b32.xlu0 %v16, 32
    %v18 = vpop.permute.xlu0 %17
    %vm19 = vcmask 392448
    %20 = vst.msk [vmem:[#allocation0] sm:$0x1] %vm19, %v18
    %s21 = scalar_lea.vmem [#allocation1], 1
    %v22 = vld [vmem:[%s21] sm:$0x1]
    %23 = vrot.lane.b32.xlu0 %v22, 16
    %v24 = vpop.permute.xlu0 %23
    %vm25 = vcmask 261248
    %26 = vst.msk [vmem:[#allocation0] sm:$0x1] %vm25, %v24
    %s28 = ssub.s32 2, 1
    %v29 = vld [vmem:[#allocation0] sm:%s28]
    %s31 = ssub.s32 2, 1
    %32 = vst [vmem:[%s1] sm:%s31] %v29

// kernel: tile.33
$region0: #{tile.33}
  #allocation0 [shape = 's32[1]{0}', space=sflag, size = 0x4, scoped, tag = 'scoped memory for tile.33']
  %s0 = inlined_call_operand.vmem [shape: f32[8], index: 0, kind: input, shape index: {}]
  %s1 = inlined_call_operand.vmem [shape: f32[4,8], index: 1, kind: output, shape index: {}]
  // Predicated region
  $region2: #{tile.33} parent=0 // pred_check
    _
  $region3: #{tile.33} parent=0 // pred_check_branch
    %3 = sbr.rel (0) target = $region5
  $region4: #{tile.33} parent=0 // pred_region
    _
  $region5: #{tile.33} parent=0 // pred_fallthru
    _
  %v4 = vld [vmem:[%s0] ss:$0 sm:$0xff]
  %5 = vst [vmem:[%s1] sm:$0xf] %v4

// kernel: tile.34
$region0: #{tile.34}
  %s0 = inlined_call_operand.vmem [shape: f32[4,8], index: 0, kind: input, shape index: {}]
  %s1 = inlined_call_operand.vmem [shape: f32[1,32], index: 1, kind: output, shape index: {}]
  $region1: #{tile.34} parent=0
    #allocation0 [shape = 'u8[4096]{0}', space=vmem, size = 0x1000, scoped, tag = 'scoped mem for output reshape']
    #allocation1 [shape = 'u8[4096]{0}', space=vmem, size = 0x1000, scoped, tag = 'scoped mem for input reshape']
    %s3 = ssub.s32 16, 1
    %v4 = vld [vmem:[%s0] sm:%s3]
    %5 = vst [vmem:[#allocation1] sm:%s3] %v4
    %v6 = vld [vmem:[#allocation1] sm:$0x1]
    %vm7 = vcmask 64512
    %8 = vst.msk [vmem:[#allocation0] sm:$0x1] %vm7, %v6
    %s9 = scalar_lea.vmem [#allocation1], 3
    %v10 = vld [vmem:[%s9] sm:$0x1]
    %11 = vrot.lane.b32.xlu0 %v10, 24
    %v12 = vpop.permute.xlu0 %11
    %vm13 = vcmask 261312
    %14 = vst.msk [vmem:[#allocation0] sm:$0x1] %vm13, %v12
    %s15 = scalar_lea.vmem [#allocation1], 2
    %v16 = vld [vmem:[%s15] sm:$0x1]
    %17 = vrot.lane.b32.xlu0 %v16, 16
    %v18 = vpop.permute.xlu0 %17
    %vm19 = vcmask 195712
    %20 = vst.msk [vmem:[#allocation0] sm:$0x1] %vm19, %v18
    %s21 = scalar_lea.vmem [#allocation1], 1
    %v22 = vld [vmem:[%s21] sm:$0x1]
    %23 = vrot.lane.b32.xlu0 %v22, 8
    %v24 = vpop.permute.xlu0 %23
    %vm25 = vcmask 130112
    %26 = vst.msk [vmem:[#allocation0] sm:$0x1] %vm25, %v24
    %s28 = ssub.s32 2, 1
    %v29 = vld [vmem:[#allocation0] sm:%s28]
    %s31 = ssub.s32 2, 1
    %32 = vst [vmem:[%s1] sm:%s31] %v29

// kernel: tile.38
$region0: #{tile.38}
  #allocation0 [shape = 's32[1]{0}', space=sflag, size = 0x4, scoped, tag = 'scoped memory for tile.38']
  %s0 = inlined_call_operand.vmem [shape: f32[3], index: 0, kind: input, shape index: {}]
  %s1 = inlined_call_operand.vmem [shape: f32[4,3], index: 1, kind: output, shape index: {}]
  // Predicated region
  $region2: #{tile.38} parent=0 // pred_check
    _
  $region3: #{tile.38} parent=0 // pred_check_branch
    %3 = sbr.rel (0) target = $region5
  $region4: #{tile.38} parent=0 // pred_region
    _
  $region5: #{tile.38} parent=0 // pred_fallthru
    _
  %v4 = vld [vmem:[%s0] ss:$0 sm:$0xff]
  %5 = vst [vmem:[%s1] sm:$0xf] %v4

// kernel: tile.39
$region0: #{tile.39}
  %s0 = inlined_call_operand.vmem [shape: f32[4,3], index: 0, kind: input, shape index: {}]
  %s1 = inlined_call_operand.vmem [shape: f32[1,12], index: 1, kind: output, shape index: {}]
  $region1: #{tile.39} parent=0
    #allocation0 [shape = 'u8[4096]{0}', space=vmem, size = 0x1000, scoped, tag = 'scoped mem for output reshape']
    #allocation1 [shape = 'u8[4096]{0}', space=vmem, size = 0x1000, scoped, tag = 'scoped mem for input reshape']
    %s3 = ssub.s32 16, 1
    %v4 = vld [vmem:[%s0] sm:%s3]
    %5 = vst [vmem:[#allocation1] sm:%s3] %v4
    %v6 = vld [vmem:[#allocation1] sm:$0x1]
    %vm7 = vcmask 23552
    %8 = vst.msk [vmem:[#allocation0] sm:$0x1] %vm7, %v6
    %s9 = scalar_lea.vmem [#allocation1], 3
    %v10 = vld [vmem:[%s9] sm:$0x1]
    %11 = vrot.lane.b32.xlu0 %v10, 9
    %v12 = vpop.permute.xlu0 %11
    %vm13 = vcmask 97352
    %14 = vst.msk [vmem:[#allocation0] sm:$0x1] %vm13, %v12
    %s15 = scalar_lea.vmem [#allocation1], 2
    %v16 = vld [vmem:[%s15] sm:$0x1]
    %17 = vrot.lane.b32.xlu0 %v16, 6
    %v18 = vpop.permute.xlu0 %17
    %vm19 = vcmask 72752
    %20 = vst.msk [vmem:[#allocation0] sm:$0x1] %vm19, %v18
    %s21 = scalar_lea.vmem [#allocation1], 1
    %v22 = vld [vmem:[%s21] sm:$0x1]
    %23 = vrot.lane.b32.xlu0 %v22, 3
    %v24 = vpop.permute.xlu0 %23
    %vm25 = vcmask 48152
    %26 = vst.msk [vmem:[#allocation0] sm:$0x1] %vm25, %v24
    %s28 = ssub.s32 2, 1
    %v29 = vld [vmem:[#allocation0] sm:%s28]
    %s31 = ssub.s32 2, 1
    %32 = vst [vmem:[%s1] sm:%s31] %v29

// kernel: mixture_vae_forward.2
$region0: #{mixture_vae_forward.2}
  #allocation0 [shape = 'u32[]', space=smem, size = 0x4, offset = 0x4, fixed_abs, tag = 'smem constant byte address 0x4 - core index']
  #allocation1 [shape = 'u32[72,128]{1,0:T(1,128)}', space=vmem, size = 0x9000, scoped, tag = 'internal scratch']
  %s0 = inlined_call_operand.vmem [shape: bf16[2,64,12], index: 0, kind: input, shape index: {}]
  %s1 = inlined_call_operand.vmem [shape: f32[2,1,8], index: 1, kind: input, shape index: {}]
  %s2 = inlined_call_operand.vmem [shape: bf16[12,8], index: 2, kind: input, shape index: {}]
  %s3 = inlined_call_operand.vmem [shape: f32[1,8], index: 3, kind: input, shape index: {}]
  %s4 = inlined_call_operand.vmem [shape: bf16[32,16], index: 4, kind: input, shape index: {}]
  %s5 = inlined_call_operand.vmem [shape: f32[1,16], index: 5, kind: input, shape index: {}]
  %s6 = inlined_call_operand.vmem [shape: bf16[64,32], index: 6, kind: input, shape index: {}]
  %s7 = inlined_call_operand.vmem [shape: f32[1,32], index: 7, kind: input, shape index: {}]
  %s8 = inlined_call_operand.vmem [shape: bf16[128,16], index: 8, kind: input, shape index: {}]
  %s9 = inlined_call_operand.vmem [shape: f32[1,16], index: 9, kind: input, shape index: {}]
  %s10 = inlined_call_operand.vmem [shape: bf16[8,128], index: 10, kind: input, shape index: {}]
  %s11 = inlined_call_operand.vmem [shape: f32[1,128], index: 11, kind: input, shape index: {}]
  %s12 = inlined_call_operand.vmem [shape: f32[2,1,16], index: 12, kind: output, shape index: {0}]
  %s13 = inlined_call_operand.hbm [shape: f32[2,1,8], index: 13, kind: output, shape index: {1}]
  %s14 = inlined_call_operand.vmem [shape: f32[2,1,128], index: 14, kind: output, shape index: {2}]
  %15 = xla_tuple %s12, %s13, %s14
  %s16 = sld [smem:[#allocation0]]
  $region97: #{mixture_vae_forward.2} parent=0
    _
  %s18 = ssub.s32 1, %s16
  %s19 = scalar_select 0, %s18, %s16
  $region1: #{mixture_vae_forward.2} parent=0
    #allocation2 [shape = 'u8[1024]{0}', space=vmem, size = 0x400, scoped, tag = 'output window, operand 1']
    #allocation3 [shape = 's32[2]{0}', space=sflag, size = 0x8, scoped, tag = 'scoped memory for mixture_vae_forward.2']
    %20 = vsyncpa [#allocation3], 0
    %s21 = scalar_lea.sflag [#allocation3], 1
    %22 = vsyncpa %s21, 0
    loop: start=0, step=1, limit=4
    $region2: #{mixture_vae_forward.2} parent=1 // loop_pre_header
      _
    $region3: #{mixture_vae_forward.2} parent=1 // loop_header
      %s24 = sphi 0, %s28
      %p25 = scmp.ge.s32.totalorder %s24, 4
      %s34 = sphi 0, %s36
      %s37 = sphi 0, %s34
      %s38 = sphi 0, %s37
      %s54 = sphi 0, %s38
      %s60 = sphi 0, %s62
      %s63 = sphi 0, %s60
      %s64 = sphi 0, %s63
      %s80 = sphi 0, %s64
      %s84 = sphi 0, %s84
      %s86 = sphi 0, %s84
      %s87 = sphi 0, %s86
      %s101 = sphi 0, %s87
      %s105 = sphi 0, %s105
      %s107 = sphi 0, %s105
      %s108 = sphi 0, %s107
      %s122 = sphi 0, %s108
      %s126 = sphi 0, %s126
      %s128 = sphi 0, %s126
      %s129 = sphi 0, %s128
      %s143 = sphi 0, %s129
      %s147 = sphi 0, %s147
      %s149 = sphi 0, %s147
      %s150 = sphi 0, %s149
      %s164 = sphi 0, %s150
      %s168 = sphi 0, %s168
      %s170 = sphi 0, %s168
      %s171 = sphi 0, %s170
      %s185 = sphi 0, %s171
      %s189 = sphi 0, %s189
      %s191 = sphi 0, %s189
      %s192 = sphi 0, %s191
      %s206 = sphi 0, %s192
      %s210 = sphi 0, %s210
      %s212 = sphi 0, %s210
      %s213 = sphi 0, %s212
      %s227 = sphi 0, %s213
      %s231 = sphi 0, %s231
      %s233 = sphi 0, %s231
      %s234 = sphi 0, %s233
      %s248 = sphi 0, %s234
      %s252 = sphi 0, %s252
      %s254 = sphi 0, %s252
      %s255 = sphi 0, %s254
      %s269 = sphi 0, %s255
      %s273 = sphi 0, %s273
      %s275 = sphi 0, %s273
      %s276 = sphi 0, %s275
      %s290 = sphi 0, %s276
      %s296 = sphi 0, %s298
      %s299 = sphi 0, %s296
      %s300 = sphi 0, %s299
      %s316 = sphi 0, %s300
      %s322 = sphi 0, %s324
      %s325 = sphi 0, %s322
      %s326 = sphi 0, %s325
      %s342 = sphi 0, %s326
      %s348 = sphi 0, %s350
      %s351 = sphi 0, %s348
      %s352 = sphi 0, %s351
      %s368 = sphi 0, %s352
    $region4: #{mixture_vae_forward.2} parent=1 // loop_header_branch
      %27 = sbr.rel (%p25) target = $region8
    $region5: #{mixture_vae_forward.2} parent=1 // loop_body
      %s29 = ssub.s32 %s24, 1
      %s30 = ssub.s32 %s24, 2
      %s31 = sadd.s32 %s24, 1
      %s32 = ssub.s32 %s24, %s31
      %p33 = scmp.eq.s32.totalorder %s32, 0
      %s35 = sadd.s32 %s34, 1
      %s36 = scalar_select %p33, %s34, %s35
      %p39 = pneg %p33
      %p40 = scmp.eq.s32.totalorder %s24, 1
      %p41 = por %p39, %p40
      %p42 = scmp.ne.s32.totalorder %s34, %s37
      %p43 = scmp.eq.s32.totalorder %s24, 0
      %p44 = por %p42, %p43
      %p45 = scmp.ne.s32.totalorder %s34, %s37
      %p46 = scmp.eq.s32.totalorder %s29, 1
      %p47 = por %p45, %p46
      %p48 = scmp.ne.s32.totalorder %s37, %s38
      %p49 = scmp.eq.s32.totalorder %s29, 0
      %p50 = por %p48, %p49
      %p51 = scmp.ne.s32.totalorder %s37, %s38
      %p52 = scmp.eq.s32.totalorder %s30, 1
      %p53 = por %p51, %p52
      %p55 = scmp.ne.s32.totalorder %s38, %s54
      %p56 = scmp.eq.s32.totalorder %s30, 0
      %p57 = por %p55, %p56
      %s58 = ssub.s32 %s24, %s31
      %p59 = scmp.eq.s32.totalorder %s58, 0
      %s61 = sadd.s32 %s60, 1
      %s62 = scalar_select %p59, %s60, %s61
      %p65 = pneg %p59
      %p66 = scmp.eq.s32.totalorder %s24, 1
      %p67 = por %p65, %p66
      %p68 = scmp.ne.s32.totalorder %s60, %s63
      %p69 = scmp.eq.s32.totalorder %s24, 0
      %p70 = por %p68, %p69
      %p71 = scmp.ne.s32.totalorder %s60, %s63
      %p72 = scmp.eq.s32.totalorder %s29, 1
      %p73 = por %p71, %p72
      %p74 = scmp.ne.s32.totalorder %s63, %s64
      %p75 = scmp.eq.s32.totalorder %s29, 0
      %p76 = por %p74, %p75
      %p77 = scmp.ne.s32.totalorder %s63, %s64
      %p78 = scmp.eq.s32.totalorder %s30, 1
      %p79 = por %p77, %p78
      %p81 = scmp.ne.s32.totalorder %s64, %s80
      %p82 = scmp.eq.s32.totalorder %s30, 0
      %p83 = por %p81, %p82
      %s85 = sadd.s32 %s84, 1
      %p88 = scmp.eq.s32.totalorder %s24, 1
      %p89 = scmp.ne.s32.totalorder %s84, %s86
      %p90 = scmp.eq.s32.totalorder %s24, 0
      %p91 = por %p89, %p90
      %p92 = scmp.ne.s32.totalorder %s84, %s86
      %p93 = scmp.eq.s32.totalorder %s29, 1
      %p94 = por %p92, %p93
      %p95 = scmp.ne.s32.totalorder %s86, %s87
      %p96 = scmp.eq.s32.totalorder %s29, 0
      %p97 = por %p95, %p96
      %p98 = scmp.ne.s32.totalorder %s86, %s87
      %p99 = scmp.eq.s32.totalorder %s30, 1
      %p100 = por %p98, %p99
      %p102 = scmp.ne.s32.totalorder %s87, %s101
      %p103 = scmp.eq.s32.totalorder %s30, 0
      %p104 = por %p102, %p103
      %s106 = sadd.s32 %s105, 1
      %p109 = scmp.eq.s32.totalorder %s24, 1
      %p110 = scmp.ne.s32.totalorder %s105, %s107
      %p111 = scmp.eq.s32.totalorder %s24, 0
      %p112 = por %p110, %p111
      %p113 = scmp.ne.s32.totalorder %s105, %s107
      %p114 = scmp.eq.s32.totalorder %s29, 1
      %p115 = por %p113, %p114
      %p116 = scmp.ne.s32.totalorder %s107, %s108
      %p117 = scmp.eq.s32.totalorder %s29, 0
      %p118 = por %p116, %p117
      %p119 = scmp.ne.s32.totalorder %s107, %s108
      %p120 = scmp.eq.s32.totalorder %s30, 1
      %p121 = por %p119, %p120
      %p123 = scmp.ne.s32.totalorder %s108, %s122
      %p124 = scmp.eq.s32.totalorder %s30, 0
      %p125 = por %p123, %p124
      %s127 = sadd.s32 %s126, 1
      %p130 = scmp.eq.s32.totalorder %s24, 1
      %p131 = scmp.ne.s32.totalorder %s126, %s128
      %p132 = scmp.eq.s32.totalorder %s24, 0
      %p133 = por %p131, %p132
      %p134 = scmp.ne.s32.totalorder %s126, %s128
      %p135 = scmp.eq.s32.totalorder %s29, 1
      %p136 = por %p134, %p135
      %p137 = scmp.ne.s32.totalorder %s128, %s129
      %p138 = scmp.eq.s32.totalorder %s29, 0
      %p139 = por %p137, %p138
      %p140 = scmp.ne.s32.totalorder %s128, %s129
      %p141 = scmp.eq.s32.totalorder %s30, 1
      %p142 = por %p140, %p141
      %p144 = scmp.ne.s32.totalorder %s129, %s143
      %p145 = scmp.eq.s32.totalorder %s30, 0
      %p146 = por %p144, %p145
      %s148 = sadd.s32 %s147, 1
      %p151 = scmp.eq.s32.totalorder %s24, 1
      %p152 = scmp.ne.s32.totalorder %s147, %s149
      %p153 = scmp.eq.s32.totalorder %s24, 0
      %p154 = por %p152, %p153
      %p155 = scmp.ne.s32.totalorder %s147, %s149
      %p156 = scmp.eq.s32.totalorder %s29, 1
      %p157 = por %p155, %p156
      %p158 = scmp.ne.s32.totalorder %s149, %s150
      %p159 = scmp.eq.s32.totalorder %s29, 0
      %p160 = por %p158, %p159
      %p161 = scmp.ne.s32.totalorder %s149, %s150
      %p162 = scmp.eq.s32.totalorder %s30, 1
      %p163 = por %p161, %p162
      %p165 = scmp.ne.s32.totalorder %s150, %s164
      %p166 = scmp.eq.s32.totalorder %s30, 0
      %p167 = por %p165, %p166
      %s169 = sadd.s32 %s168, 1
      %p172 = scmp.eq.s32.totalorder %s24, 1
      %p173 = scmp.ne.s32.totalorder %s168, %s170
      %p174 = scmp.eq.s32.totalorder %s24, 0
      %p175 = por %p173, %p174
      %p176 = scmp.ne.s32.totalorder %s168, %s170
      %p177 = scmp.eq.s32.totalorder %s29, 1
      %p178 = por %p176, %p177
      %p179 = scmp.ne.s32.totalorder %s170, %s171
      %p180 = scmp.eq.s32.totalorder %s29, 0
      %p181 = por %p179, %p180
      %p182 = scmp.ne.s32.totalorder %s170, %s171
      %p183 = scmp.eq.s32.totalorder %s30, 1
      %p184 = por %p182, %p183
      %p186 = scmp.ne.s32.totalorder %s171, %s185
      %p187 = scmp.eq.s32.totalorder %s30, 0
      %p188 = por %p186, %p187
      %s190 = sadd.s32 %s189, 1
      %p193 = scmp.eq.s32.totalorder %s24, 1
      %p194 = scmp.ne.s32.totalorder %s189, %s191
      %p195 = scmp.eq.s32.totalorder %s24, 0
      %p196 = por %p194, %p195
      %p197 = scmp.ne.s32.totalorder %s189, %s191
      %p198 = scmp.eq.s32.totalorder %s29, 1
      %p199 = por %p197, %p198
      %p200 = scmp.ne.s32.totalorder %s191, %s192
      %p201 = scmp.eq.s32.totalorder %s29, 0
      %p202 = por %p200, %p201
      %p203 = scmp.ne.s32.totalorder %s191, %s192
      %p204 = scmp.eq.s32.totalorder %s30, 1
      %p205 = por %p203, %p204
      %p207 = scmp.ne.s32.totalorder %s192, %s206
      %p208 = scmp.eq.s32.totalorder %s30, 0
      %p209 = por %p207, %p208
      %s211 = sadd.s32 %s210, 1
      %p214 = scmp.eq.s32.totalorder %s24, 1
      %p215 = scmp.ne.s32.totalorder %s210, %s212
      %p216 = scmp.eq.s32.totalorder %s24, 0
      %p217 = por %p215, %p216
      %p218 = scmp.ne.s32.totalorder %s210, %s212
      %p219 = scmp.eq.s32.totalorder %s29, 1
      %p220 = por %p218, %p219
      %p221 = scmp.ne.s32.totalorder %s212, %s213
      %p222 = scmp.eq.s32.totalorder %s29, 0
      %p223 = por %p221, %p222
      %p224 = scmp.ne.s32.totalorder %s212, %s213
      %p225 = scmp.eq.s32.totalorder %s30, 1
      %p226 = por %p224, %p225
      %p228 = scmp.ne.s32.totalorder %s213, %s227
      %p229 = scmp.eq.s32.totalorder %s30, 0
      %p230 = por %p228, %p229
      %s232 = sadd.s32 %s231, 1
      %p235 = scmp.eq.s32.totalorder %s24, 1
      %p236 = scmp.ne.s32.totalorder %s231, %s233
      %p237 = scmp.eq.s32.totalorder %s24, 0
      %p238 = por %p236, %p237
      %p239 = scmp.ne.s32.totalorder %s231, %s233
      %p240 = scmp.eq.s32.totalorder %s29, 1
      %p241 = por %p239, %p240
      %p242 = scmp.ne.s32.totalorder %s233, %s234
      %p243 = scmp.eq.s32.totalorder %s29, 0
      %p244 = por %p242, %p243
      %p245 = scmp.ne.s32.totalorder %s233, %s234
      %p246 = scmp.eq.s32.totalorder %s30, 1
      %p247 = por %p245, %p246
      %p249 = scmp.ne.s32.totalorder %s234, %s248
      %p250 = scmp.eq.s32.totalorder %s30, 0
      %p251 = por %p249, %p250
      %s253 = sadd.s32 %s252, 1
      %p256 = scmp.eq.s32.totalorder %s24, 1
      %p257 = scmp.ne.s32.totalorder %s252, %s254
      %p258 = scmp.eq.s32.totalorder %s24, 0
      %p259 = por %p257, %p258
      %p260 = scmp.ne.s32.totalorder %s252, %s254
      %p261 = scmp.eq.s32.totalorder %s29, 1
      %p262 = por %p260, %p261
      %p263 = scmp.ne.s32.totalorder %s254, %s255
      %p264 = scmp.eq.s32.totalorder %s29, 0
      %p265 = por %p263, %p264
      %p266 = scmp.ne.s32.totalorder %s254, %s255
      %p267 = scmp.eq.s32.totalorder %s30, 1
      %p268 = por %p266, %p267
      %p270 = scmp.ne.s32.totalorder %s255, %s269
      %p271 = scmp.eq.s32.totalorder %s30, 0
      %p272 = por %p270, %p271
      %s274 = sadd.s32 %s273, 1
      %p277 = scmp.eq.s32.totalorder %s24, 1
      %p278 = scmp.ne.s32.totalorder %s273, %s275
      %p279 = scmp.eq.s32.totalorder %s24, 0
      %p280 = por %p278, %p279
      %p281 = scmp.ne.s32.totalorder %s273, %s275
      %p282 = scmp.eq.s32.totalorder %s29, 1
      %p283 = por %p281, %p282
      %p284 = scmp.ne.s32.totalorder %s275, %s276
      %p285 = scmp.eq.s32.totalorder %s29, 0
      %p286 = por %p284, %p285
      %p287 = scmp.ne.s32.totalorder %s275, %s276
      %p288 = scmp.eq.s32.totalorder %s30, 1
      %p289 = por %p287, %p288
      %p291 = scmp.ne.s32.totalorder %s276, %s290
      %p292 = scmp.eq.s32.totalorder %s30, 0
      %p293 = por %p291, %p292
      %s294 = ssub.s32 %s24, %s31
      %p295 = scmp.eq.s32.totalorder %s294, 0
      %s297 = sadd.s32 %s296, 1
      %s298 = scalar_select %p295, %s296, %s297
      %p301 = pneg %p295
      %p302 = scmp.eq.s32.totalorder %s24, 1
      %p303 = por %p301, %p302
      %p304 = scmp.ne.s32.totalorder %s296, %s299
      %p305 = scmp.eq.s32.totalorder %s24, 0
      %p306 = por %p304, %p305
      %p307 = scmp.ne.s32.totalorder %s296, %s299
      %p308 = scmp.eq.s32.totalorder %s29, 1
      %p309 = por %p307, %p308
      %p310 = scmp.ne.s32.totalorder %s299, %s300
      %p311 = scmp.eq.s32.totalorder %s29, 0
      %p312 = por %p310, %p311
      %p313 = scmp.ne.s32.totalorder %s299, %s300
      %p314 = scmp.eq.s32.totalorder %s30, 1
      %p315 = por %p313, %p314
      %p317 = scmp.ne.s32.totalorder %s300, %s316
      %p318 = scmp.eq.s32.totalorder %s30, 0
      %p319 = por %p317, %p318
      %s320 = ssub.s32 %s24, %s31
      %p321 = scmp.eq.s32.totalorder %s320, 0
      %s323 = sadd.s32 %s322, 1
      %s324 = scalar_select %p321, %s322, %s323
      %p327 = pneg %p321
      %p328 = scmp.eq.s32.totalorder %s24, 1
      %p329 = por %p327, %p328
      %p330 = scmp.ne.s32.totalorder %s322, %s325
      %p331 = scmp.eq.s32.totalorder %s24, 0
      %p332 = por %p330, %p331
      %p333 = scmp.ne.s32.totalorder %s322, %s325
      %p334 = scmp.eq.s32.totalorder %s29, 1
      %p335 = por %p333, %p334
      %p336 = scmp.ne.s32.totalorder %s325, %s326
      %p337 = scmp.eq.s32.totalorder %s29, 0
      %p338 = por %p336, %p337
      %p339 = scmp.ne.s32.totalorder %s325, %s326
      %p340 = scmp.eq.s32.totalorder %s30, 1
      %p341 = por %p339, %p340
      %p343 = scmp.ne.s32.totalorder %s326, %s342
      %p344 = scmp.eq.s32.totalorder %s30, 0
      %p345 = por %p343, %p344
      %s346 = ssub.s32 %s24, %s31
      %p347 = scmp.eq.s32.totalorder %s346, 0
      %s349 = sadd.s32 %s348, 1
      %s350 = scalar_select %p347, %s348, %s349
      %p353 = pneg %p347
      %p354 = scmp.eq.s32.totalorder %s24, 1
      %p355 = por %p353, %p354
      %p356 = scmp.ne.s32.totalorder %s348, %s351
      %p357 = scmp.eq.s32.totalorder %s24, 0
      %p358 = por %p356, %p357
      %p359 = scmp.ne.s32.totalorder %s348, %s351
      %p360 = scmp.eq.s32.totalorder %s29, 1
      %p361 = por %p359, %p360
      %p362 = scmp.ne.s32.totalorder %s351, %s352
      %p363 = scmp.eq.s32.totalorder %s29, 0
      %p364 = por %p362, %p363
      %p365 = scmp.ne.s32.totalorder %s351, %s352
      %p366 = scmp.eq.s32.totalorder %s30, 1
      %p367 = por %p365, %p366
      %p369 = scmp.ne.s32.totalorder %s352, %s368
      %p370 = scmp.eq.s32.totalorder %s30, 0
      %p371 = por %p369, %p370
      %p372 = scmp.le.s32.totalorder 1, %s24
      %p373 = scmp.lt.s32.totalorder %s24, 3
      %p374 = pnand %p372, %p373
      %p375 = pneg %p374
      // Predicated region
      $region9: #{mixture_vae_forward.2} parent=5 // pred_check
        _
      $region10: #{mixture_vae_forward.2} parent=5 // pred_check_branch
        %377 = sbr.rel (%p374) target = $region12
      $region11: #{mixture_vae_forward.2} parent=5 // pred_region
        %s378 = ssub.s32 %s24, 1
        // Predicated region
        $region13: #{mixture_vae_forward.2} parent=11 // pred_check
          %p379 = pneg %p97
        $region14: #{mixture_vae_forward.2} parent=11 // pred_check_branch
          %381 = sbr.rel (%p379) target = $region16
        $region15: #{mixture_vae_forward.2} parent=11 // pred_region
          _
        $region16: #{mixture_vae_forward.2} parent=11 // pred_fallthru
          _
        // Predicated region
        $region17: #{mixture_vae_forward.2} parent=11 // pred_check
          %p382 = pneg %p118
        $region18: #{mixture_vae_forward.2} parent=11 // pred_check_branch
          %384 = sbr.rel (%p382) target = $region20
        $region19: #{mixture_vae_forward.2} parent=11 // pred_region
          _
        $region20: #{mixture_vae_forward.2} parent=11 // pred_fallthru
          _
        // Predicated region
        $region21: #{mixture_vae_forward.2} parent=11 // pred_check
          %p385 = pneg %p139
        $region22: #{mixture_vae_forward.2} parent=11 // pred_check_branch
          %387 = sbr.rel (%p385) target = $region24
        $region23: #{mixture_vae_forward.2} parent=11 // pred_region
          _
        $region24: #{mixture_vae_forward.2} parent=11 // pred_fallthru
          _
        // Predicated region
        $region25: #{mixture_vae_forward.2} parent=11 // pred_check
          %p388 = pneg %p160
        $region26: #{mixture_vae_forward.2} parent=11 // pred_check_branch
          %390 = sbr.rel (%p388) target = $region28
        $region27: #{mixture_vae_forward.2} parent=11 // pred_region
          _
        $region28: #{mixture_vae_forward.2} parent=11 // pred_fallthru
          _
        // Predicated region
        $region29: #{mixture_vae_forward.2} parent=11 // pred_check
          %p391 = pneg %p181
        $region30: #{mixture_vae_forward.2} parent=11 // pred_check_branch
          %393 = sbr.rel (%p391) target = $region32
        $region31: #{mixture_vae_forward.2} parent=11 // pred_region
          _
        $region32: #{mixture_vae_forward.2} parent=11 // pred_fallthru
          _
        // Predicated region
        $region33: #{mixture_vae_forward.2} parent=11 // pred_check
          %p394 = pneg %p202
        $region34: #{mixture_vae_forward.2} parent=11 // pred_check_branch
          %396 = sbr.rel (%p394) target = $region36
        $region35: #{mixture_vae_forward.2} parent=11 // pred_region
          _
        $region36: #{mixture_vae_forward.2} parent=11 // pred_fallthru
          _
        // Predicated region
        $region37: #{mixture_vae_forward.2} parent=11 // pred_check
          %p397 = pneg %p223
        $region38: #{mixture_vae_forward.2} parent=11 // pred_check_branch
          %399 = sbr.rel (%p397) target = $region40
        $region39: #{mixture_vae_forward.2} parent=11 // pred_region
          _
        $region40: #{mixture_vae_forward.2} parent=11 // pred_fallthru
          _
        // Predicated region
        $region41: #{mixture_vae_forward.2} parent=11 // pred_check
          %p400 = pneg %p244
        $region42: #{mixture_vae_forward.2} parent=11 // pred_check_branch
          %402 = sbr.rel (%p400) target = $region44
        $region43: #{mixture_vae_forward.2} parent=11 // pred_region
          _
        $region44: #{mixture_vae_forward.2} parent=11 // pred_fallthru
          _
        // Predicated region
        $region45: #{mixture_vae_forward.2} parent=11 // pred_check
          %p403 = pneg %p265
        $region46: #{mixture_vae_forward.2} parent=11 // pred_check_branch
          %405 = sbr.rel (%p403) target = $region48
        $region47: #{mixture_vae_forward.2} parent=11 // pred_region
          _
        $region48: #{mixture_vae_forward.2} parent=11 // pred_fallthru
          _
        // Predicated region
        $region49: #{mixture_vae_forward.2} parent=11 // pred_check
          %p406 = pneg %p286
        $region50: #{mixture_vae_forward.2} parent=11 // pred_check_branch
          %408 = sbr.rel (%p406) target = $region52
        $region51: #{mixture_vae_forward.2} parent=11 // pred_region
          _
        $region52: #{mixture_vae_forward.2} parent=11 // pred_fallthru
          _
      $region12: #{mixture_vae_forward.2} parent=5 // pred_fallthru
        _
      %p409 = scmp.lt.s32.totalorder %s24, 2
      // Predicated region
      $region53: #{mixture_vae_forward.2} parent=5 // pred_check
        %p410 = pneg %p409
      $region54: #{mixture_vae_forward.2} parent=5 // pred_check_branch
        %412 = sbr.rel (%p410) target = $region56
      $region55: #{mixture_vae_forward.2} parent=5 // pred_region
        // Predicated region
        $region57: #{mixture_vae_forward.2} parent=55 // pred_check
          %p413 = pneg %p44
        $region58: #{mixture_vae_forward.2} parent=55 // pred_check_branch
          %415 = sbr.rel (%p413) target = $region60
        $region59: #{mixture_vae_forward.2} parent=55 // pred_region
          %p416 = scmp.lt.s32.totalorder %s24, 1
          %s417 = scalar_select %p416, %s24, 1
          %s418 = smul.addr %s417, 8
          %s419 = smul.addr %s418, 4
          %s420 = scalar_lea.vmem %s0, %s419
        $region60: #{mixture_vae_forward.2} parent=55 // pred_fallthru
          _
        // Predicated region
        $region61: #{mixture_vae_forward.2} parent=55 // pred_check
          %p421 = pneg %p70
        $region62: #{mixture_vae_forward.2} parent=55 // pred_check_branch
          %423 = sbr.rel (%p421) target = $region64
        $region63: #{mixture_vae_forward.2} parent=55 // pred_region
          %p424 = scmp.lt.s32.totalorder %s24, 1
          %s425 = scalar_select %p424, %s24, 1
          %s426 = scalar_lea.vmem %s1, %s425
        $region64: #{mixture_vae_forward.2} parent=55 // pred_fallthru
          _
      $region56: #{mixture_vae_forward.2} parent=5 // pred_fallthru
        _
      %p427 = scmp.le.s32.totalorder 1, %s24
      %p428 = scmp.lt.s32.totalorder %s24, 3
      %p429 = pnand %p427, %p428
      %p430 = pneg %p429
      // Predicated region
      $region65: #{mixture_vae_forward.2} parent=5 // pred_check
        _
      $region66: #{mixture_vae_forward.2} parent=5 // pred_check_branch
        %432 = sbr.rel (%p429) target = $region68
      $region67: #{mixture_vae_forward.2} parent=5 // pred_region
        %s433 = ssub.s32 %s24, 1
        %p434 = scmp.lt.s32.totalorder %s29, 1
        %s435 = scalar_select %p434, %s29, 1
        %s436 = smul.addr %s435, 8
        %s437 = smul.addr %s436, 4
        %s438 = scalar_lea.vmem %s0, %s437
        %p439 = pneg %p50
        %p440 = pneg %p47
        %p441 = scmp.lt.s32.totalorder %s29, 1
        %s442 = scalar_select %p441, %s29, 1
        %s443 = scalar_lea.vmem %s1, %s442
        %p444 = pneg %p76
        %p445 = pneg %p73
        %p446 = pneg %p97
        %p447 = pneg %p94
        %p448 = pneg %p118
        %p449 = pneg %p115
        %p450 = pneg %p139
        %p451 = pneg %p136
        %p452 = pneg %p160
        %p453 = pneg %p157
        %p454 = pneg %p181
        %p455 = pneg %p178
        %p456 = pneg %p202
        %p457 = pneg %p199
        %p458 = pneg %p223
        %p459 = pneg %p220
        %p460 = pneg %p244
        %p461 = pneg %p241
        %p462 = pneg %p265
        %p463 = pneg %p262
        %p464 = pneg %p286
        %p465 = pneg %p283
        %p466 = pneg %p312
        %p467 = pneg %p309
        %p468 = scmp.lt.s32.totalorder %s29, 1
        %s469 = scalar_select %p468, %s29, 1
        %s470 = scalar_lea.vmem %s12, %s469
        %p471 = pneg %p338
        %p472 = pneg %p335
        %s473 = sand.u32 %s325, 1
        %s474 = scalar_lea.sflag [#allocation3], %s473
        %s475 = sand.u32 %s325, 1
        %s476 = scalar_lea.vmem [#allocation2], %s475
        %p477 = pneg %p364
        %p478 = pneg %p361
        %p479 = scmp.lt.s32.totalorder %s29, 1
        %s480 = scalar_select %p479, %s29, 1
        %s481 = scalar_lea.vmem %s14, %s480
        %p482 = scmp.lt.s32.totalorder %s29, 1
        %s483 = scalar_select %p482, %s29, 1
        %s484 = smul.addr %s483, 8
        %s485 = smul.addr %s484, 4
        %s486 = scalar_lea.vmem %s0, %s485
        %p487 = scmp.lt.s32.totalorder %s29, 1
        %s488 = scalar_select %p487, %s29, 1
        %s489 = scalar_lea.vmem %s1, %s488
        %p490 = scmp.lt.s32.totalorder %s29, 1
        %s491 = scalar_select %p490, %s29, 1
        %s492 = scalar_lea.vmem %s12, %s491
        %p493 = scmp.lt.s32.totalorder %s29, 1
        %s494 = scalar_select %p493, %s29, 1
        %s495 = scalar_lea.vmem %s14, %s494
        %v497 = vld [vmem:[%s486] sm:$0xf]
        %v498 = vld [vmem:[%s486 + $0x4] sm:$0xf]
        %v499 = vld [vmem:[%s486 + $0x8] sm:$0xf]
        %v500 = vld [vmem:[%s486 + $0xc] sm:$0xf]
        %v501 = vld [vmem:[%s486 + $0x10] sm:$0xf]
        %v502 = vld [vmem:[%s486 + $0x14] sm:$0xf]
        %v503 = vld [vmem:[%s486 + $0x18] sm:$0xf]
        %v504 = vld [vmem:[%s486 + $0x1c] sm:$0xf]
        %v505 = vld [vmem:[%s2] sm:$0xf]
        %v506 = vld [vmem:[%s2 + $0x4] sm:$0x3]
        %v507 = vld [vmem:[%s3] sm:$0x1]
        %v509 = vperm.slane %v507, 0
        %v519 = vunpack.c.l.b16 %v497
        %v520 = vunpack.c.l.b16 %v498
        %v521 = vunpack.c.l.b16 %v499
        %v522 = vunpack.c.l.b16 %v500
        %v523 = vunpack.c.l.b16 %v501
        %v524 = vunpack.c.l.b16 %v502
        %v525 = vunpack.c.l.b16 %v503
        %v526 = vunpack.c.l.b16 %v504
        %v527 = vpack.c.b16 %v520, %v519
        %v528 = vpack.c.b16 %v522, %v521
        %v529 = vpack.c.b16 %v524, %v523
        %v530 = vpack.c.b16 %v526, %v525
        %v533 = vunpack.c.l.b16 %v505
        %v534 = vunpack.c.l.b16 %v506
        %v535 = vpack.c.b16 %v534, %v533
        %vm536 = vcmask 97280
        %v538 = vsel %vm536, %v527, 0
        %v541 = vsel %vm536, %v528, 0
        %v544 = vsel %vm536, %v529, 0
        %v547 = vsel %vm536, %v530, 0
        %vm549 = vcmask 1045504
        %v551 = vsel %vm549, %v535, 0
        %553 = vmatpush.bf16.msra.mxu0 0
        %554 = vmatpush.bf16.msra.mxu0 0
        %555 = vmatpush.bf16.msra.mxu0 0
        %556 = vmatpush.bf16.msra.mxu0 0
        %557 = vmatpush.bf16.msra.mxu0 0
        %558 = vmatpush.bf16.msra.mxu0 0
        %559 = vmatpush.bf16.msra.mxu0 0
        %560 = vmatpush.bf16.msra.mxu0 %v551
        %561 = vmatmul.bf16.gmra.mxu0 %v538
        %v562 = vpop.f32.mrf.mxu0
        %v563 = vadd.f32 %v509, %v562
        %v564 = vpop.f32.mrf.mxu0
        %v565 = vadd.f32 %v509, %v564
        %566 = vmatmul.bf16.gmra.mxu0 %v541
        %v567 = vpop.f32.mrf.mxu0
        %v568 = vadd.f32 %v509, %v567
        %v569 = vpop.f32.mrf.mxu0
        %v570 = vadd.f32 %v509, %v569
        %571 = vmatmul.bf16.gmra.mxu0 %v544
        %v572 = vpop.f32.mrf.mxu0
        %v573 = vadd.f32 %v509, %v572
        %v574 = vpop.f32.mrf.mxu0
        %v575 = vadd.f32 %v509, %v574
        %576 = vmatmul.bf16.gmra.mxu0 %v547
        %v577 = vpop.f32.mrf.mxu0
        %v578 = vadd.f32 %v509, %v577
        %v579 = vpop.f32.mrf.mxu0
        %v580 = vadd.f32 %v509, %v579
        %581 = vdwg.mxu0
        %v582 = vmax.f32 %v563, 0.0
        %v583 = vmax.f32 %v565, 0.0
        %v584 = vmax.f32 %v568, 0.0
        %v585 = vmax.f32 %v570, 0.0
        %v586 = vmax.f32 %v573, 0.0
        %v587 = vmax.f32 %v575, 0.0
        %v588 = vmax.f32 %v578, 0.0
        %v589 = vmax.f32 %v580, 0.0
        %v590 = vld [vmem:[%s4] sm:$0xf]
        %v591 = vld [vmem:[%s4 + $0x4] sm:$0xf]
        %v592 = vld [vmem:[%s4 + $0x8] sm:$0xf]
        %v593 = vld [vmem:[%s4 + $0xc] sm:$0xf]
        %v594 = vpack.c.bf16 %v583, %v582
        %v595 = vpack.c.bf16 %v585, %v584
        %vm596 = vcmask 64512
        %v598 = vsel %vm596, %v595, 0
        %vm600 = vcmask 1043456
        %v602 = vsel %vm600, %v591, 0
        %604 = vmatpush.bf16.msra.mxu0 0
        %605 = vmatpush.bf16.msra.mxu0 0
        %606 = vmatpush.bf16.msra.mxu0 0
        %607 = vmatpush.bf16.msra.mxu0 0
        %608 = vmatpush.bf16.msra.mxu0 0
        %609 = vmatpush.bf16.msra.mxu0 0
        %610 = vmatpush.bf16.msra.mxu0 0
        %611 = vmatpush.bf16.msra.mxu0 %v602
        %612 = vmatmul.bf16.gmra.mxu0 %v598
        %v613 = vpop.f32.mrf.mxu0
        %v614 = vadd.f32 0.0, %v613
        %v615 = vpop.f32.mrf.mxu0
        %v616 = vadd.f32 0.0, %v615
        %617 = vdwg.mxu0
        %v619 = vsel %vm596, %v594, 0
        %v622 = vsel %vm600, %v590, 0
        %624 = vmatpush.bf16.msra.mxu0 0
        %625 = vmatpush.bf16.msra.mxu0 0
        %626 = vmatpush.bf16.msra.mxu0 0
        %627 = vmatpush.bf16.msra.mxu0 0
        %628 = vmatpush.bf16.msra.mxu0 0
        %629 = vmatpush.bf16.msra.mxu0 0
        %630 = vmatpush.bf16.msra.mxu0 0
        %631 = vmatpush.bf16.msra.mxu0 %v622
        %632 = vmatmul.bf16.gmra.mxu0 %v619
        %v633 = vpop.f32.mrf.mxu0
        %v634 = vadd.f32 %v614, %v633
        %v635 = vpop.f32.mrf.mxu0
        %v636 = vadd.f32 %v616, %v635
        %637 = vdwg.mxu0
        %v638 = vpack.c.bf16 %v587, %v586
        %v640 = vsel %vm596, %v638, 0
        %v643 = vsel %vm600, %v592, 0
        %645 = vmatpush.bf16.msra.mxu0 0
        %646 = vmatpush.bf16.msra.mxu0 0
        %647 = vmatpush.bf16.msra.mxu0 0
        %648 = vmatpush.bf16.msra.mxu0 0
        %649 = vmatpush.bf16.msra.mxu0 0
        %650 = vmatpush.bf16.msra.mxu0 0
        %651 = vmatpush.bf16.msra.mxu0 0
        %652 = vmatpush.bf16.msra.mxu0 %v643
        %653 = vmatmul.bf16.gmra.mxu0 %v640
        %v654 = vpop.f32.mrf.mxu0
        %v655 = vadd.f32 0.0, %v654
        %v656 = vpop.f32.mrf.mxu0
        %v657 = vadd.f32 0.0, %v656
        %658 = vdwg.mxu0
        %v659 = vadd.f32 %v634, %v655
        %v660 = vadd.f32 %v636, %v657
        %v661 = vpack.c.bf16 %v589, %v588
        %v663 = vsel %vm596, %v661, 0
        %v666 = vsel %vm600, %v593, 0
        %668 = vmatpush.bf16.msra.mxu0 0
        %669 = vmatpush.bf16.msra.mxu0 0
        %670 = vmatpush.bf16.msra.mxu0 0
        %671 = vmatpush.bf16.msra.mxu0 0
        %672 = vmatpush.bf16.msra.mxu0 0
        %673 = vmatpush.bf16.msra.mxu0 0
        %674 = vmatpush.bf16.msra.mxu0 0
        %675 = vmatpush.bf16.msra.mxu0 %v666
        %676 = vmatmul.bf16.gmra.mxu0 %v663
        %v677 = vpop.f32.mrf.mxu0
        %v678 = vadd.f32 0.0, %v677
        %v679 = vpop.f32.mrf.mxu0
        %v680 = vadd.f32 0.0, %v679
        %681 = vdwg.mxu0
        %v682 = vadd.f32 %v659, %v678
        %v683 = vadd.f32 %v660, %v680
        %v684 = vld [vmem:[%s5] sm:$0x1]
        %v686 = vperm.slane %v684, 0
        %v688 = vadd.f32 %v682, %v686
        %v689 = vadd.f32 %v683, %v686
        %v690 = vmax.f32 %v688, 0.0
        %v691 = vmax.f32 %v689, 0.0
        %v692 = vld [vmem:[%s6] sm:$0xf]
        %v693 = vld [vmem:[%s6 + $0x4] sm:$0xf]
        %v694 = vld [vmem:[%s6 + $0x8] sm:$0xf]
        %v695 = vld [vmem:[%s6 + $0xc] sm:$0xf]
        %v696 = vld [vmem:[%s6 + $0x10] sm:$0xf]
        %v697 = vld [vmem:[%s6 + $0x14] sm:$0xf]
        %v698 = vld [vmem:[%s6 + $0x18] sm:$0xf]
        %v699 = vld [vmem:[%s6 + $0x1c] sm:$0xf]
        %v700 = vpack.c.bf16 %v690, %v690
        %v702 = vrot.slane %v700, 2
        %v705 = vunpack.c.l.b16 %v694
        %v706 = vunpack.c.l.b16 %v695
        %v707 = vpack.c.b16 %v706, %v705
        %vm709 = vcmask 130048
        %v711 = vsel %vm709, %v702, 0
        %713 = vmatpush.bf16.msra.mxu0 0
        %714 = vmatpush.bf16.msra.mxu0 0
        %715 = vmatpush.bf16.msra.mxu0 0
        %716 = vmatpush.bf16.msra.mxu0 0
        %717 = vmatpush.bf16.msra.mxu0 0
        %718 = vmatpush.bf16.msra.mxu0 0
        %719 = vmatpush.bf16.msra.mxu0 0
        %720 = vmatpush.bf16.msra.mxu0 %v707
        %721 = vmatmul.bf16.gmra.mxu0 %v711
        %v722 = vpop.f32.mrf.mxu0
        %v723 = vadd.f32 0.0, %v722
        %v724 = vpop.f32.mrf.mxu0
        %725 = vdwg.mxu0
        %v728 = vunpack.c.l.b16 %v692
        %v729 = vunpack.c.l.b16 %v693
        %v730 = vpack.c.b16 %v729, %v728
        %v733 = vsel %vm709, %v700, 0
        %735 = vmatpush.bf16.msra.mxu0 0
        %736 = vmatpush.bf16.msra.mxu0 0
        %737 = vmatpush.bf16.msra.mxu0 0
        %738 = vmatpush.bf16.msra.mxu0 0
        %739 = vmatpush.bf16.msra.mxu0 0
        %740 = vmatpush.bf16.msra.mxu0 0
        %741 = vmatpush.bf16.msra.mxu0 0
        %742 = vmatpush.bf16.msra.mxu0 %v730
        %743 = vmatmul.bf16.gmra.mxu0 %v733
        %v744 = vpop.f32.mrf.mxu0
        %v745 = vadd.f32 %v723, %v744
        %v746 = vpop.f32.mrf.mxu0
        %747 = vdwg.mxu0
        %v748 = vpack.c.bf16 %v691, %v691
        %v751 = vunpack.c.l.b16 %v696
        %v752 = vunpack.c.l.b16 %v697
        %v753 = vpack.c.b16 %v752, %v751
        %v756 = vsel %vm709, %v748, 0
        %758 = vmatpush.bf16.msra.mxu0 0
        %759 = vmatpush.bf16.msra.mxu0 0
        %760 = vmatpush.bf16.msra.mxu0 0
        %761 = vmatpush.bf16.msra.mxu0 0
        %762 = vmatpush.bf16.msra.mxu0 0
        %763 = vmatpush.bf16.msra.mxu0 0
        %764 = vmatpush.bf16.msra.mxu0 0
        %765 = vmatpush.bf16.msra.mxu0 %v753
        %766 = vmatmul.bf16.gmra.mxu0 %v756
        %v767 = vpop.f32.mrf.mxu0
        %v768 = vadd.f32 0.0, %v767
        %v769 = vpop.f32.mrf.mxu0
        %770 = vdwg.mxu0
        %v771 = vadd.f32 %v745, %v768
        %v773 = vrot.slane %v748, 2
        %v776 = vunpack.c.l.b16 %v698
        %v777 = vunpack.c.l.b16 %v699
        %v778 = vpack.c.b16 %v777, %v776
        %v781 = vsel %vm709, %v773, 0
        %783 = vmatpush.bf16.msra.mxu0 0
        %784 = vmatpush.bf16.msra.mxu0 0
        %785 = vmatpush.bf16.msra.mxu0 0
        %786 = vmatpush.bf16.msra.mxu0 0
        %787 = vmatpush.bf16.msra.mxu0 0
        %788 = vmatpush.bf16.msra.mxu0 0
        %789 = vmatpush.bf16.msra.mxu0 0
        %790 = vmatpush.bf16.msra.mxu0 %v778
        %791 = vmatmul.bf16.gmra.mxu0 %v781
        %v792 = vpop.f32.mrf.mxu0
        %v793 = vadd.f32 0.0, %v792
        %v794 = vpop.f32.mrf.mxu0
        %795 = vdwg.mxu0
        %v796 = vadd.f32 %v771, %v793
        %v797 = vld [vmem:[%s7] sm:$0x1]
        %v799 = vperm.slane %v797, 0
        %v801 = vadd.f32 %v796, %v799
        %v802 = vmax.f32 %v801, 0.0
        %v803 = vpack.c.bf16 %v802, %v802
        %v804 = vld [vmem:[%s8] sm:$0xf]
        %v805 = vld [vmem:[%s8 + $0x4] sm:$0xf]
        %v806 = vld [vmem:[%s8 + $0x8] sm:$0xf]
        %v807 = vld [vmem:[%s8 + $0xc] sm:$0xf]
        %v808 = vld [vmem:[%s8 + $0x10] sm:$0xf]
        %v809 = vld [vmem:[%s8 + $0x14] sm:$0xf]
        %v810 = vld [vmem:[%s8 + $0x18] sm:$0xf]
        %v811 = vld [vmem:[%s8 + $0x1c] sm:$0xf]
        %v813 = vshrl.u32 %v803, 16
        %v819 = vunpack.c.l.b16 %v808
        %v820 = vunpack.c.l.b16 %v809
        %v821 = vunpack.c.l.b16 %v810
        %v822 = vunpack.c.l.b16 %v811
        %v823 = vpack.c.b16 %v820, %v819
        %v824 = vpack.c.b16 %v822, %v821
        %vm827 = vcmask 261120
        %v829 = vsel %vm827, %v813, 0
        %831 = vmatpush.bf16.msra.mxu0 0
        %832 = vmatpush.bf16.msra.mxu0 0
        %833 = vmatpush.bf16.msra.mxu0 0
        %834 = vmatpush.bf16.msra.mxu0 0
        %835 = vmatpush.bf16.msra.mxu0 0
        %836 = vmatpush.bf16.msra.mxu0 0
        %837 = vmatpush.bf16.msra.mxu0 %v824
        %838 = vmatpush.bf16.msra.mxu0 %v823
        %839 = vmatmul.bf16.gmra.mxu0 %v829
        %v840 = vpop.f32.mrf.mxu0
        %v841 = vadd.f32 0.0, %v840
        %v842 = vpop.f32.mrf.mxu0
        %843 = vdwg.mxu0
        %v848 = vunpack.c.l.b16 %v804
        %v849 = vunpack.c.l.b16 %v805
        %v850 = vunpack.c.l.b16 %v806
        %v851 = vunpack.c.l.b16 %v807
        %v852 = vpack.c.b16 %v849, %v848
        %v853 = vpack.c.b16 %v851, %v850
        %v856 = vsel %vm827, %v803, 0
        %858 = vmatpush.bf16.msra.mxu0 0
        %859 = vmatpush.bf16.msra.mxu0 0
        %860 = vmatpush.bf16.msra.mxu0 0
        %861 = vmatpush.bf16.msra.mxu0 0
        %862 = vmatpush.bf16.msra.mxu0 0
        %863 = vmatpush.bf16.msra.mxu0 0
        %864 = vmatpush.bf16.msra.mxu0 %v853
        %865 = vmatpush.bf16.msra.mxu0 %v852
        %866 = vmatmul.bf16.gmra.mxu0 %v856
        %v867 = vpop.f32.mrf.mxu0
        %v868 = vadd.f32 %v841, %v867
        %v869 = vpop.f32.mrf.mxu0
        %870 = vdwg.mxu0
        %v871 = vld [vmem:[%s8 + $0x20] sm:$0xf]
        %v872 = vld [vmem:[%s8 + $0x24] sm:$0xf]
        %v873 = vld [vmem:[%s8 + $0x28] sm:$0xf]
        %v874 = vld [vmem:[%s8 + $0x2c] sm:$0xf]
        %v876 = vrot.slane %v803, 1
        %v881 = vunpack.c.l.b16 %v871
        %v882 = vunpack.c.l.b16 %v872
        %v883 = vunpack.c.l.b16 %v873
        %v884 = vunpack.c.l.b16 %v874
        %v885 = vpack.c.b16 %v882, %v881
        %v886 = vpack.c.b16 %v884, %v883
        %v890 = vsel %vm827, %v876, 0
        %892 = vmatpush.bf16.msra.mxu0 0
        %893 = vmatpush.bf16.msra.mxu0 0
        %894 = vmatpush.bf16.msra.mxu0 0
        %895 = vmatpush.bf16.msra.mxu0 0
        %896 = vmatpush.bf16.msra.mxu0 0
        %897 = vmatpush.bf16.msra.mxu0 0
        %898 = vmatpush.bf16.msra.mxu0 %v886
        %899 = vmatpush.bf16.msra.mxu0 %v885
        %900 = vmatmul.bf16.gmra.mxu0 %v890
        %v901 = vpop.f32.mrf.mxu0
        %v902 = vadd.f32 0.0, %v901
        %v903 = vpop.f32.mrf.mxu0
        %904 = vdwg.mxu0
        %v905 = vadd.f32 %v868, %v902
        %v906 = vld [vmem:[%s8 + $0x30] sm:$0xf]
        %v907 = vld [vmem:[%s8 + $0x34] sm:$0xf]
        %v908 = vld [vmem:[%s8 + $0x38] sm:$0xf]
        %v909 = vld [vmem:[%s8 + $0x3c] sm:$0xf]
        %v910 = vrot.slane %v813, 1
        %v915 = vunpack.c.l.b16 %v906
        %v916 = vunpack.c.l.b16 %v907
        %v917 = vunpack.c.l.b16 %v908
        %v918 = vunpack.c.l.b16 %v909
        %v919 = vpack.c.b16 %v916, %v915
        %v920 = vpack.c.b16 %v918, %v917
        %v924 = vsel %vm827, %v910, 0
        %926 = vmatpush.bf16.msra.mxu0 0
        %927 = vmatpush.bf16.msra.mxu0 0
        %928 = vmatpush.bf16.msra.mxu0 0
        %929 = vmatpush.bf16.msra.mxu0 0
        %930 = vmatpush.bf16.msra.mxu0 0
        %931 = vmatpush.bf16.msra.mxu0 0
        %932 = vmatpush.bf16.msra.mxu0 %v920
        %933 = vmatpush.bf16.msra.mxu0 %v919
        %934 = vmatmul.bf16.gmra.mxu0 %v924
        %v935 = vpop.f32.mrf.mxu0
        %v936 = vadd.f32 0.0, %v935
        %v937 = vpop.f32.mrf.mxu0
        %938 = vdwg.mxu0
        %v939 = vadd.f32 %v905, %v936
        %v940 = vld [vmem:[%s9] sm:$0x1]
        %v941 = vadd.f32 %v939, %v940
        %vm942 = vcmask 122880
        %943 = vst.msk [vmem:[%s492] sm:$0x1] %vm942, %v941
        %v944 = vmul.f32 %v941, 0.5
        %v945 = vmul.f32 %v944, 1.442695
        %v946 = vpow.pop %v945
        %v947 = vld [vmem:[%s489] sm:$0x1]
        %v949 = vperm.slane %v947, 0
        %950 = vrot.lane.b32.xlu0 %v949, 8
        %v951 = vpop.permute.xlu0 %950
        %v953 = vmul.f32 %v946, %v951
        %955 = vrot.lane.b32.xlu0 %v953, 120
        %v956 = vpop.permute.xlu0 %955
        %v958 = vadd.f32 %v941, %v956
        %vm959 = vcmask 57344
        %960 = vst.msk [vmem:[%s476] sm:$0x1] %vm959, %v958
        %v961 = vpack.c.bf16 %v958, %v958
        %v962 = vld [vmem:[%s10] sm:$0xf]
        %v963 = vld [vmem:[%s11] sm:$0x1]
        %v965 = vsel %vm596, %v961, 0
        %v968 = vsel %vm600, %v962, 0
        %970 = vmatpush.bf16.msra.mxu0 0
        %971 = vmatpush.bf16.msra.mxu0 0
        %972 = vmatpush.bf16.msra.mxu0 0
        %973 = vmatpush.bf16.msra.mxu0 0
        %974 = vmatpush.bf16.msra.mxu0 0
        %975 = vmatpush.bf16.msra.mxu0 0
        %976 = vmatpush.bf16.msra.mxu0 0
        %977 = vmatpush.bf16.msra.mxu0 %v968
        %978 = vmatmul.bf16.gmra.mxu0 %v965
        %v979 = vpop.f32.mrf.mxu0
        %v980 = vadd.f32 %v963, %v979
        %v981 = vpop.f32.mrf.mxu0
        %982 = vdwg.mxu0
        %v983 = vmax.f32 %v980, 0.0
        %984 = vst [vmem:[%s495] sm:$0x1] %v983
        %p985 = scmp.lt.s32.totalorder %s29, 1
        %s986 = scalar_select %p985, %s29, 1
        %s987 = scalar_lea.vmem %s12, %s986
        %s988 = sand.u32 %s325, 1
        %s989 = scalar_lea.sflag [#allocation3], %s988
        %s990 = sand.u32 %s325, 1
        %s991 = scalar_lea.vmem [#allocation2], %s990
        %p992 = scmp.lt.s32.totalorder %s29, 1
        %s993 = scalar_select %p992, %s29, 1
        %s994 = scalar_lea.vmem %s14, %s993
        // Predicated region
        $region69: #{mixture_vae_forward.2} parent=67 // pred_check
          %p995 = pneg %p309
        $region70: #{mixture_vae_forward.2} parent=67 // pred_check_branch
          %997 = sbr.rel (%p995) target = $region72
        $region71: #{mixture_vae_forward.2} parent=67 // pred_region
          _
        $region72: #{mixture_vae_forward.2} parent=67 // pred_fallthru
          _
        // Predicated region
        $region73: #{mixture_vae_forward.2} parent=67 // pred_check
          %p998 = pneg %p335
        $region74: #{mixture_vae_forward.2} parent=67 // pred_check_branch
          %1000 = sbr.rel (%p998) target = $region76
        $region75: #{mixture_vae_forward.2} parent=67 // pred_region
          %1002 = vsyncadd %s989, 0
          %s1003 = scalar_lea.hbm %s13, %s29
          %s1005 = sshll.u32 %s991, 4
          %s1006 = int_to_ptr.vmem [resolvable:$true] %s1005
          %s1007 = sshll.u32 %s1003, 4
          %s1008 = int_to_ptr.hbm [resolvable:$true] %s1007
          %1010 = dma.vmem_to_hbm [thread:$0]  %s1006, 16, %s1008, %s989
        $region76: #{mixture_vae_forward.2} parent=67 // pred_fallthru
          _
        // Predicated region
        $region77: #{mixture_vae_forward.2} parent=67 // pred_check
          %p1011 = pneg %p361
        $region78: #{mixture_vae_forward.2} parent=67 // pred_check_branch
          %1013 = sbr.rel (%p1011) target = $region80
        $region79: #{mixture_vae_forward.2} parent=67 // pred_region
          _
        $region80: #{mixture_vae_forward.2} parent=67 // pred_fallthru
          _
      $region68: #{mixture_vae_forward.2} parent=5 // pred_fallthru
        _
      %p1014 = scmp.le.s32.totalorder 2, %s24
      // Predicated region
      $region81: #{mixture_vae_forward.2} parent=5 // pred_check
        %p1015 = pneg %p1014
      $region82: #{mixture_vae_forward.2} parent=5 // pred_check_branch
        %1017 = sbr.rel (%p1015) target = $region84
      $region83: #{mixture_vae_forward.2} parent=5 // pred_region
        %s1018 = ssub.s32 %s24, 2
        // Predicated region
        $region85: #{mixture_vae_forward.2} parent=83 // pred_check
          %p1019 = pneg %p315
        $region86: #{mixture_vae_forward.2} parent=83 // pred_check_branch
          %1021 = sbr.rel (%p1019) target = $region88
        $region87: #{mixture_vae_forward.2} parent=83 // pred_region
          %p1022 = scmp.lt.s32.totalorder %s30, 1
          %s1023 = scalar_select %p1022, %s30, 1
          %s1024 = scalar_lea.vmem %s12, %s1023
        $region88: #{mixture_vae_forward.2} parent=83 // pred_fallthru
          _
        // Predicated region
        $region89: #{mixture_vae_forward.2} parent=83 // pred_check
          %p1025 = pneg %p341
        $region90: #{mixture_vae_forward.2} parent=83 // pred_check_branch
          %1027 = sbr.rel (%p1025) target = $region92
        $region91: #{mixture_vae_forward.2} parent=83 // pred_region
          %s1028 = sand.u32 %s326, 1
          %s1029 = scalar_lea.sflag [#allocation3], %s1028
          %s1030 = sand.u32 %s326, 1
          %s1031 = scalar_lea.vmem [#allocation2], %s1030
          %1033 = dma.done %s1029, 16
        $region92: #{mixture_vae_forward.2} parent=83 // pred_fallthru
          _
        // Predicated region
        $region93: #{mixture_vae_forward.2} parent=83 // pred_check
          %p1034 = pneg %p367
        $region94: #{mixture_vae_forward.2} parent=83 // pred_check_branch
          %1036 = sbr.rel (%p1034) target = $region96
        $region95: #{mixture_vae_forward.2} parent=83 // pred_region
          %p1037 = scmp.lt.s32.totalorder %s30, 1
          %s1038 = scalar_select %p1037, %s30, 1
          %s1039 = scalar_lea.vmem %s14, %s1038
        $region96: #{mixture_vae_forward.2} parent=83 // pred_fallthru
          _
      $region84: #{mixture_vae_forward.2} parent=5 // pred_fallthru
        _
    $region6: #{mixture_vae_forward.2} parent=1 // loop_footer
      %s28 = sadd.s32 1, %s24
    $region7: #{mixture_vae_forward.2} parent=1 // loop_footer_branch
      %23 = sbr.rel target = $region3
    $region8: #{mixture_vae_forward.2} parent=1 // loop_exit
      _
    %1040 = vsyncpa [#allocation3], 1
    %s1041 = scalar_lea.sflag [#allocation3], 1
    %1042 = vsyncpa %s1041, 1

// kernel: mixture_vae_forward.3
$region0: #{mixture_vae_forward.3}
  #allocation0 [shape = 'u32[]', space=smem, size = 0x4, offset = 0x4, fixed_abs, tag = 'smem constant byte address 0x4 - core index']
  #allocation1 [shape = 'u32[72,128]{1,0:T(1,128)}', space=vmem, size = 0x9000, scoped, tag = 'internal scratch']
  %s0 = inlined_call_operand.vmem [shape: bf16[2,4,32], index: 0, kind: input, shape index: {}]
  %s1 = inlined_call_operand.vmem [shape: bf16[32,128], index: 1, kind: input, shape index: {}]
  %s2 = inlined_call_operand.vmem [shape: f32[1,128], index: 2, kind: input, shape index: {}]
  %s3 = inlined_call_operand.vmem [shape: bf16[32,64], index: 3, kind: input, shape index: {}]
  %s4 = inlined_call_operand.vmem [shape: f32[1,64], index: 4, kind: input, shape index: {}]
  %s5 = inlined_call_operand.vmem [shape: bf16[16,32], index: 5, kind: input, shape index: {}]
  %s6 = inlined_call_operand.vmem [shape: f32[1,32], index: 6, kind: input, shape index: {}]
  %s7 = inlined_call_operand.vmem [shape: bf16[32,12], index: 7, kind: input, shape index: {}]
  %s8 = inlined_call_operand.vmem [shape: f32[1,12], index: 8, kind: input, shape index: {}]
  %s9 = inlined_call_operand.vmem [shape: f32[2,4,192], index: 9, kind: output, shape index: {}]
  %s10 = sld [smem:[#allocation0]]
  $region69: #{mixture_vae_forward.3} parent=0
    _
  %s12 = ssub.s32 1, %s10
  %s13 = scalar_select 0, %s12, %s10
  loop: start=0, step=1, limit=4
  $region2: #{mixture_vae_forward.3} parent=0 // loop_pre_header
    _
  $region3: #{mixture_vae_forward.3} parent=0 // loop_header
    %s15 = sphi 0, %s19
    %p16 = scmp.ge.s32.totalorder %s15, 4
    %s25 = sphi 0, %s27
    %s28 = sphi 0, %s25
    %s29 = sphi 0, %s28
    %s45 = sphi 0, %s29
    %s49 = sphi 0, %s49
    %s51 = sphi 0, %s49
    %s52 = sphi 0, %s51
    %s66 = sphi 0, %s52
    %s70 = sphi 0, %s70
    %s72 = sphi 0, %s70
    %s73 = sphi 0, %s72
    %s87 = sphi 0, %s73
    %s91 = sphi 0, %s91
    %s93 = sphi 0, %s91
    %s94 = sphi 0, %s93
    %s108 = sphi 0, %s94
    %s112 = sphi 0, %s112
    %s114 = sphi 0, %s112
    %s115 = sphi 0, %s114
    %s129 = sphi 0, %s115
    %s133 = sphi 0, %s133
    %s135 = sphi 0, %s133
    %s136 = sphi 0, %s135
    %s150 = sphi 0, %s136
    %s154 = sphi 0, %s154
    %s156 = sphi 0, %s154
    %s157 = sphi 0, %s156
    %s171 = sphi 0, %s157
    %s175 = sphi 0, %s175
    %s177 = sphi 0, %s175
    %s178 = sphi 0, %s177
    %s192 = sphi 0, %s178
    %s196 = sphi 0, %s196
    %s198 = sphi 0, %s196
    %s199 = sphi 0, %s198
    %s213 = sphi 0, %s199
    %s219 = sphi 0, %s221
    %s222 = sphi 0, %s219
    %s223 = sphi 0, %s222
    %s239 = sphi 0, %s223
  $region4: #{mixture_vae_forward.3} parent=0 // loop_header_branch
    %18 = sbr.rel (%p16) target = $region8
  $region5: #{mixture_vae_forward.3} parent=0 // loop_body
    %s20 = ssub.s32 %s15, 1
    %s21 = ssub.s32 %s15, 2
    %s22 = sadd.s32 %s15, 1
    %s23 = ssub.s32 %s15, %s22
    %p24 = scmp.eq.s32.totalorder %s23, 0
    %s26 = sadd.s32 %s25, 1
    %s27 = scalar_select %p24, %s25, %s26
    %p30 = pneg %p24
    %p31 = scmp.eq.s32.totalorder %s15, 1
    %p32 = por %p30, %p31
    %p33 = scmp.ne.s32.totalorder %s25, %s28
    %p34 = scmp.eq.s32.totalorder %s15, 0
    %p35 = por %p33, %p34
    %p36 = scmp.ne.s32.totalorder %s25, %s28
    %p37 = scmp.eq.s32.totalorder %s20, 1
    %p38 = por %p36, %p37
    %p39 = scmp.ne.s32.totalorder %s28, %s29
    %p40 = scmp.eq.s32.totalorder %s20, 0
    %p41 = por %p39, %p40
    %p42 = scmp.ne.s32.totalorder %s28, %s29
    %p43 = scmp.eq.s32.totalorder %s21, 1
    %p44 = por %p42, %p43
    %p46 = scmp.ne.s32.totalorder %s29, %s45
    %p47 = scmp.eq.s32.totalorder %s21, 0
    %p48 = por %p46, %p47
    %s50 = sadd.s32 %s49, 1
    %p53 = scmp.eq.s32.totalorder %s15, 1
    %p54 = scmp.ne.s32.totalorder %s49, %s51
    %p55 = scmp.eq.s32.totalorder %s15, 0
    %p56 = por %p54, %p55
    %p57 = scmp.ne.s32.totalorder %s49, %s51
    %p58 = scmp.eq.s32.totalorder %s20, 1
    %p59 = por %p57, %p58
    %p60 = scmp.ne.s32.totalorder %s51, %s52
    %p61 = scmp.eq.s32.totalorder %s20, 0
    %p62 = por %p60, %p61
    %p63 = scmp.ne.s32.totalorder %s51, %s52
    %p64 = scmp.eq.s32.totalorder %s21, 1
    %p65 = por %p63, %p64
    %p67 = scmp.ne.s32.totalorder %s52, %s66
    %p68 = scmp.eq.s32.totalorder %s21, 0
    %p69 = por %p67, %p68
    %s71 = sadd.s32 %s70, 1
    %p74 = scmp.eq.s32.totalorder %s15, 1
    %p75 = scmp.ne.s32.totalorder %s70, %s72
    %p76 = scmp.eq.s32.totalorder %s15, 0
    %p77 = por %p75, %p76
    %p78 = scmp.ne.s32.totalorder %s70, %s72
    %p79 = scmp.eq.s32.totalorder %s20, 1
    %p80 = por %p78, %p79
    %p81 = scmp.ne.s32.totalorder %s72, %s73
    %p82 = scmp.eq.s32.totalorder %s20, 0
    %p83 = por %p81, %p82
    %p84 = scmp.ne.s32.totalorder %s72, %s73
    %p85 = scmp.eq.s32.totalorder %s21, 1
    %p86 = por %p84, %p85
    %p88 = scmp.ne.s32.totalorder %s73, %s87
    %p89 = scmp.eq.s32.totalorder %s21, 0
    %p90 = por %p88, %p89
    %s92 = sadd.s32 %s91, 1
    %p95 = scmp.eq.s32.totalorder %s15, 1
    %p96 = scmp.ne.s32.totalorder %s91, %s93
    %p97 = scmp.eq.s32.totalorder %s15, 0
    %p98 = por %p96, %p97
    %p99 = scmp.ne.s32.totalorder %s91, %s93
    %p100 = scmp.eq.s32.totalorder %s20, 1
    %p101 = por %p99, %p100
    %p102 = scmp.ne.s32.totalorder %s93, %s94
    %p103 = scmp.eq.s32.totalorder %s20, 0
    %p104 = por %p102, %p103
    %p105 = scmp.ne.s32.totalorder %s93, %s94
    %p106 = scmp.eq.s32.totalorder %s21, 1
    %p107 = por %p105, %p106
    %p109 = scmp.ne.s32.totalorder %s94, %s108
    %p110 = scmp.eq.s32.totalorder %s21, 0
    %p111 = por %p109, %p110
    %s113 = sadd.s32 %s112, 1
    %p116 = scmp.eq.s32.totalorder %s15, 1
    %p117 = scmp.ne.s32.totalorder %s112, %s114
    %p118 = scmp.eq.s32.totalorder %s15, 0
    %p119 = por %p117, %p118
    %p120 = scmp.ne.s32.totalorder %s112, %s114
    %p121 = scmp.eq.s32.totalorder %s20, 1
    %p122 = por %p120, %p121
    %p123 = scmp.ne.s32.totalorder %s114, %s115
    %p124 = scmp.eq.s32.totalorder %s20, 0
    %p125 = por %p123, %p124
    %p126 = scmp.ne.s32.totalorder %s114, %s115
    %p127 = scmp.eq.s32.totalorder %s21, 1
    %p128 = por %p126, %p127
    %p130 = scmp.ne.s32.totalorder %s115, %s129
    %p131 = scmp.eq.s32.totalorder %s21, 0
    %p132 = por %p130, %p131
    %s134 = sadd.s32 %s133, 1
    %p137 = scmp.eq.s32.totalorder %s15, 1
    %p138 = scmp.ne.s32.totalorder %s133, %s135
    %p139 = scmp.eq.s32.totalorder %s15, 0
    %p140 = por %p138, %p139
    %p141 = scmp.ne.s32.totalorder %s133, %s135
    %p142 = scmp.eq.s32.totalorder %s20, 1
    %p143 = por %p141, %p142
    %p144 = scmp.ne.s32.totalorder %s135, %s136
    %p145 = scmp.eq.s32.totalorder %s20, 0
    %p146 = por %p144, %p145
    %p147 = scmp.ne.s32.totalorder %s135, %s136
    %p148 = scmp.eq.s32.totalorder %s21, 1
    %p149 = por %p147, %p148
    %p151 = scmp.ne.s32.totalorder %s136, %s150
    %p152 = scmp.eq.s32.totalorder %s21, 0
    %p153 = por %p151, %p152
    %s155 = sadd.s32 %s154, 1
    %p158 = scmp.eq.s32.totalorder %s15, 1
    %p159 = scmp.ne.s32.totalorder %s154, %s156
    %p160 = scmp.eq.s32.totalorder %s15, 0
    %p161 = por %p159, %p160
    %p162 = scmp.ne.s32.totalorder %s154, %s156
    %p163 = scmp.eq.s32.totalorder %s20, 1
    %p164 = por %p162, %p163
    %p165 = scmp.ne.s32.totalorder %s156, %s157
    %p166 = scmp.eq.s32.totalorder %s20, 0
    %p167 = por %p165, %p166
    %p168 = scmp.ne.s32.totalorder %s156, %s157
    %p169 = scmp.eq.s32.totalorder %s21, 1
    %p170 = por %p168, %p169
    %p172 = scmp.ne.s32.totalorder %s157, %s171
    %p173 = scmp.eq.s32.totalorder %s21, 0
    %p174 = por %p172, %p173
    %s176 = sadd.s32 %s175, 1
    %p179 = scmp.eq.s32.totalorder %s15, 1
    %p180 = scmp.ne.s32.totalorder %s175, %s177
    %p181 = scmp.eq.s32.totalorder %s15, 0
    %p182 = por %p180, %p181
    %p183 = scmp.ne.s32.totalorder %s175, %s177
    %p184 = scmp.eq.s32.totalorder %s20, 1
    %p185 = por %p183, %p184
    %p186 = scmp.ne.s32.totalorder %s177, %s178
    %p187 = scmp.eq.s32.totalorder %s20, 0
    %p188 = por %p186, %p187
    %p189 = scmp.ne.s32.totalorder %s177, %s178
    %p190 = scmp.eq.s32.totalorder %s21, 1
    %p191 = por %p189, %p190
    %p193 = scmp.ne.s32.totalorder %s178, %s192
    %p194 = scmp.eq.s32.totalorder %s21, 0
    %p195 = por %p193, %p194
    %s197 = sadd.s32 %s196, 1
    %p200 = scmp.eq.s32.totalorder %s15, 1
    %p201 = scmp.ne.s32.totalorder %s196, %s198
    %p202 = scmp.eq.s32.totalorder %s15, 0
    %p203 = por %p201, %p202
    %p204 = scmp.ne.s32.totalorder %s196, %s198
    %p205 = scmp.eq.s32.totalorder %s20, 1
    %p206 = por %p204, %p205
    %p207 = scmp.ne.s32.totalorder %s198, %s199
    %p208 = scmp.eq.s32.totalorder %s20, 0
    %p209 = por %p207, %p208
    %p210 = scmp.ne.s32.totalorder %s198, %s199
    %p211 = scmp.eq.s32.totalorder %s21, 1
    %p212 = por %p210, %p211
    %p214 = scmp.ne.s32.totalorder %s199, %s213
    %p215 = scmp.eq.s32.totalorder %s21, 0
    %p216 = por %p214, %p215
    %s217 = ssub.s32 %s15, %s22
    %p218 = scmp.eq.s32.totalorder %s217, 0
    %s220 = sadd.s32 %s219, 1
    %s221 = scalar_select %p218, %s219, %s220
    %p224 = pneg %p218
    %p225 = scmp.eq.s32.totalorder %s15, 1
    %p226 = por %p224, %p225
    %p227 = scmp.ne.s32.totalorder %s219, %s222
    %p228 = scmp.eq.s32.totalorder %s15, 0
    %p229 = por %p227, %p228
    %p230 = scmp.ne.s32.totalorder %s219, %s222
    %p231 = scmp.eq.s32.totalorder %s20, 1
    %p232 = por %p230, %p231
    %p233 = scmp.ne.s32.totalorder %s222, %s223
    %p234 = scmp.eq.s32.totalorder %s20, 0
    %p235 = por %p233, %p234
    %p236 = scmp.ne.s32.totalorder %s222, %s223
    %p237 = scmp.eq.s32.totalorder %s21, 1
    %p238 = por %p236, %p237
    %p240 = scmp.ne.s32.totalorder %s223, %s239
    %p241 = scmp.eq.s32.totalorder %s21, 0
    %p242 = por %p240, %p241
    %p243 = scmp.le.s32.totalorder 1, %s15
    %p244 = scmp.lt.s32.totalorder %s15, 3
    %p245 = pnand %p243, %p244
    %p246 = pneg %p245
    // Predicated region
    $region9: #{mixture_vae_forward.3} parent=5 // pred_check
      _
    $region10: #{mixture_vae_forward.3} parent=5 // pred_check_branch
      %248 = sbr.rel (%p245) target = $region12
    $region11: #{mixture_vae_forward.3} parent=5 // pred_region
      %s249 = ssub.s32 %s15, 1
      // Predicated region
      $region13: #{mixture_vae_forward.3} parent=11 // pred_check
        %p250 = pneg %p62
      $region14: #{mixture_vae_forward.3} parent=11 // pred_check_branch
        %252 = sbr.rel (%p250) target = $region16
      $region15: #{mixture_vae_forward.3} parent=11 // pred_region
        _
      $region16: #{mixture_vae_forward.3} parent=11 // pred_fallthru
        _
      // Predicated region
      $region17: #{mixture_vae_forward.3} parent=11 // pred_check
        %p253 = pneg %p83
      $region18: #{mixture_vae_forward.3} parent=11 // pred_check_branch
        %255 = sbr.rel (%p253) target = $region20
      $region19: #{mixture_vae_forward.3} parent=11 // pred_region
        _
      $region20: #{mixture_vae_forward.3} parent=11 // pred_fallthru
        _
      // Predicated region
      $region21: #{mixture_vae_forward.3} parent=11 // pred_check
        %p256 = pneg %p104
      $region22: #{mixture_vae_forward.3} parent=11 // pred_check_branch
        %258 = sbr.rel (%p256) target = $region24
      $region23: #{mixture_vae_forward.3} parent=11 // pred_region
        _
      $region24: #{mixture_vae_forward.3} parent=11 // pred_fallthru
        _
      // Predicated region
      $region25: #{mixture_vae_forward.3} parent=11 // pred_check
        %p259 = pneg %p125
      $region26: #{mixture_vae_forward.3} parent=11 // pred_check_branch
        %261 = sbr.rel (%p259) target = $region28
      $region27: #{mixture_vae_forward.3} parent=11 // pred_region
        _
      $region28: #{mixture_vae_forward.3} parent=11 // pred_fallthru
        _
      // Predicated region
      $region29: #{mixture_vae_forward.3} parent=11 // pred_check
        %p262 = pneg %p146
      $region30: #{mixture_vae_forward.3} parent=11 // pred_check_branch
        %264 = sbr.rel (%p262) target = $region32
      $region31: #{mixture_vae_forward.3} parent=11 // pred_region
        _
      $region32: #{mixture_vae_forward.3} parent=11 // pred_fallthru
        _
      // Predicated region
      $region33: #{mixture_vae_forward.3} parent=11 // pred_check
        %p265 = pneg %p167
      $region34: #{mixture_vae_forward.3} parent=11 // pred_check_branch
        %267 = sbr.rel (%p265) target = $region36
      $region35: #{mixture_vae_forward.3} parent=11 // pred_region
        _
      $region36: #{mixture_vae_forward.3} parent=11 // pred_fallthru
        _
      // Predicated region
      $region37: #{mixture_vae_forward.3} parent=11 // pred_check
        %p268 = pneg %p188
      $region38: #{mixture_vae_forward.3} parent=11 // pred_check_branch
        %270 = sbr.rel (%p268) target = $region40
      $region39: #{mixture_vae_forward.3} parent=11 // pred_region
        _
      $region40: #{mixture_vae_forward.3} parent=11 // pred_fallthru
        _
      // Predicated region
      $region41: #{mixture_vae_forward.3} parent=11 // pred_check
        %p271 = pneg %p209
      $region42: #{mixture_vae_forward.3} parent=11 // pred_check_branch
        %273 = sbr.rel (%p271) target = $region44
      $region43: #{mixture_vae_forward.3} parent=11 // pred_region
        _
      $region44: #{mixture_vae_forward.3} parent=11 // pred_fallthru
        _
    $region12: #{mixture_vae_forward.3} parent=5 // pred_fallthru
      _
    %p274 = scmp.lt.s32.totalorder %s15, 2
    // Predicated region
    $region45: #{mixture_vae_forward.3} parent=5 // pred_check
      %p275 = pneg %p274
    $region46: #{mixture_vae_forward.3} parent=5 // pred_check_branch
      %277 = sbr.rel (%p275) target = $region48
    $region47: #{mixture_vae_forward.3} parent=5 // pred_region
      // Predicated region
      $region49: #{mixture_vae_forward.3} parent=47 // pred_check
        %p278 = pneg %p35
      $region50: #{mixture_vae_forward.3} parent=47 // pred_check_branch
        %280 = sbr.rel (%p278) target = $region52
      $region51: #{mixture_vae_forward.3} parent=47 // pred_region
        %p281 = scmp.lt.s32.totalorder %s15, 1
        %s282 = scalar_select %p281, %s15, 1
        %s283 = smul.addr %s282, 2
        %s284 = scalar_lea.vmem %s0, %s283
      $region52: #{mixture_vae_forward.3} parent=47 // pred_fallthru
        _
    $region48: #{mixture_vae_forward.3} parent=5 // pred_fallthru
      _
    %p285 = scmp.le.s32.totalorder 1, %s15
    %p286 = scmp.lt.s32.totalorder %s15, 3
    %p287 = pnand %p285, %p286
    %p288 = pneg %p287
    // Predicated region
    $region53: #{mixture_vae_forward.3} parent=5 // pred_check
      _
    $region54: #{mixture_vae_forward.3} parent=5 // pred_check_branch
      %290 = sbr.rel (%p287) target = $region56
    $region55: #{mixture_vae_forward.3} parent=5 // pred_region
      %s291 = ssub.s32 %s15, 1
      %p292 = scmp.lt.s32.totalorder %s20, 1
      %s293 = scalar_select %p292, %s20, 1
      %s294 = smul.addr %s293, 2
      %s295 = scalar_lea.vmem %s0, %s294
      %p296 = pneg %p41
      %p297 = pneg %p38
      %p298 = pneg %p62
      %p299 = pneg %p59
      %p300 = pneg %p83
      %p301 = pneg %p80
      %p302 = pneg %p104
      %p303 = pneg %p101
      %p304 = pneg %p125
      %p305 = pneg %p122
      %p306 = pneg %p146
      %p307 = pneg %p143
      %p308 = pneg %p167
      %p309 = pneg %p164
      %p310 = pneg %p188
      %p311 = pneg %p185
      %p312 = pneg %p209
      %p313 = pneg %p206
      %p314 = pneg %p235
      %p315 = pneg %p232
      %p316 = scmp.lt.s32.totalorder %s20, 1
      %s317 = scalar_select %p316, %s20, 1
      %s318 = smul.addr %s317, 2
      %s319 = smul.addr %s318, 4
      %s320 = scalar_lea.vmem %s9, %s319
      %p321 = scmp.lt.s32.totalorder %s20, 1
      %s322 = scalar_select %p321, %s20, 1
      %s323 = smul.addr %s322, 2
      %s324 = scalar_lea.vmem %s0, %s323
      %p325 = scmp.lt.s32.totalorder %s20, 1
      %s326 = scalar_select %p325, %s20, 1
      %s327 = smul.addr %s326, 2
      %s328 = smul.addr %s327, 4
      %s329 = scalar_lea.vmem %s9, %s328
      %v331 = vld [vmem:[%s324] sm:$0x3]
      %v332 = vld [vmem:[%s3] sm:$0xf]
      %v333 = vld [vmem:[%s3 + $0x4] sm:$0xf]
      %v334 = vld [vmem:[%s3 + $0x8] sm:$0xf]
      %v335 = vld [vmem:[%s3 + $0xc] sm:$0xf]
      %v336 = vld [vmem:[%s5] sm:$0xf]
      %v337 = vld [vmem:[%s5 + $0x4] sm:$0xf]
      %v338 = vld [vmem:[%s7] sm:$0xf]
      %v339 = vld [vmem:[%s7 + $0x4] sm:$0xf]
      %v340 = vld [vmem:[%s7 + $0x8] sm:$0xf]
      %v341 = vld [vmem:[%s7 + $0xc] sm:$0xf]
      %v342 = vld [vmem:[%s1] sm:$0xf]
      %v343 = vld [vmem:[%s1 + $0x4] sm:$0xf]
      %v344 = vld [vmem:[%s1 + $0x8] sm:$0xf]
      %v345 = vld [vmem:[%s1 + $0xc] sm:$0xf]
      %v346 = vld [vmem:[%s2] sm:$0x1]
      %v348 = vperm.slane %v346, 0
      %v354 = vunpack.c.l.b16 %v342
      %v355 = vunpack.c.l.b16 %v343
      %v356 = vunpack.c.l.b16 %v344
      %v357 = vunpack.c.l.b16 %v345
      %v358 = vpack.c.b16 %v355, %v354
      %v359 = vpack.c.b16 %v357, %v356
      %vm362 = vcmask 261120
      %v364 = vsel %vm362, %v331, 0
      %366 = vmatpush.bf16.msra.mxu0 0
      %367 = vmatpush.bf16.msra.mxu0 0
      %368 = vmatpush.bf16.msra.mxu0 0
      %369 = vmatpush.bf16.msra.mxu0 0
      %370 = vmatpush.bf16.msra.mxu0 0
      %371 = vmatpush.bf16.msra.mxu0 0
      %372 = vmatpush.bf16.msra.mxu0 %v359
      %373 = vmatpush.bf16.msra.mxu0 %v358
      %374 = vmatmul.bf16.gmra.mxu0 %v364
      %v375 = vpop.f32.mrf.mxu0
      %v376 = vadd.f32 %v348, %v375
      %v377 = vpop.f32.mrf.mxu0
      %378 = vdwg.mxu0
      %v379 = vmax.f32 %v376, 0.0
      %v380 = vpack.c.bf16 %v379, %v379
      %v381 = vld [vmem:[%s4] sm:$0x1]
      %v383 = vperm.slane %v381, 0
      %v389 = vunpack.c.l.b16 %v332
      %v390 = vunpack.c.l.b16 %v333
      %v391 = vunpack.c.l.b16 %v334
      %v392 = vunpack.c.l.b16 %v335
      %v393 = vpack.c.b16 %v390, %v389
      %v394 = vpack.c.b16 %v392, %v391
      %v398 = vsel %vm362, %v380, 0
      %400 = vmatpush.bf16.msra.mxu0 0
      %401 = vmatpush.bf16.msra.mxu0 0
      %402 = vmatpush.bf16.msra.mxu0 0
      %403 = vmatpush.bf16.msra.mxu0 0
      %404 = vmatpush.bf16.msra.mxu0 0
      %405 = vmatpush.bf16.msra.mxu0 0
      %406 = vmatpush.bf16.msra.mxu0 %v394
      %407 = vmatpush.bf16.msra.mxu0 %v393
      %408 = vmatmul.bf16.gmra.mxu0 %v398
      %v409 = vpop.f32.mrf.mxu0
      %v410 = vadd.f32 %v383, %v409
      %v411 = vpop.f32.mrf.mxu0
      %412 = vdwg.mxu0
      %v413 = vmax.f32 %v410, 0.0
      %v414 = vpack.c.bf16 %v413, %v413
      %v415 = vld [vmem:[%s6] sm:$0x1]
      %v417 = vperm.slane %v415, 0
      %v421 = vunpack.c.l.b16 %v336
      %v422 = vunpack.c.l.b16 %v337
      %v423 = vpack.c.b16 %v422, %v421
      %vm425 = vcmask 130048
      %v427 = vsel %vm425, %v414, 0
      %429 = vmatpush.bf16.msra.mxu0 0
      %430 = vmatpush.bf16.msra.mxu0 0
      %431 = vmatpush.bf16.msra.mxu0 0
      %432 = vmatpush.bf16.msra.mxu0 0
      %433 = vmatpush.bf16.msra.mxu0 0
      %434 = vmatpush.bf16.msra.mxu0 0
      %435 = vmatpush.bf16.msra.mxu0 0
      %436 = vmatpush.bf16.msra.mxu0 %v423
      %437 = vmatmul.bf16.gmra.mxu0 %v427
      %v438 = vpop.f32.mrf.mxu0
      %v439 = vadd.f32 %v417, %v438
      %v440 = vpop.f32.mrf.mxu0
      %441 = vdwg.mxu0
      %v442 = vmax.f32 %v439, 0.0
      %v443 = vpack.c.bf16 %v442, %v442
      %v444 = vld [vmem:[%s8] sm:$0x1]
      %v446 = vperm.slane %v444, 0
      %v452 = vunpack.c.l.b16 %v338
      %v453 = vunpack.c.l.b16 %v339
      %v454 = vunpack.c.l.b16 %v340
      %v455 = vunpack.c.l.b16 %v341
      %v456 = vpack.c.b16 %v453, %v452
      %v457 = vpack.c.b16 %v455, %v454
      %v461 = vsel %vm362, %v443, 0
      %463 = vmatpush.bf16.msra.mxu0 0
      %464 = vmatpush.bf16.msra.mxu0 0
      %465 = vmatpush.bf16.msra.mxu0 0
      %466 = vmatpush.bf16.msra.mxu0 0
      %467 = vmatpush.bf16.msra.mxu0 0
      %468 = vmatpush.bf16.msra.mxu0 0
      %469 = vmatpush.bf16.msra.mxu0 %v457
      %470 = vmatpush.bf16.msra.mxu0 %v456
      %471 = vmatmul.bf16.gmra.mxu0 %v461
      %v472 = vpop.f32.mrf.mxu0
      %v473 = vadd.f32 %v446, %v472
      %v474 = vpop.f32.mrf.mxu0
      %475 = vdwg.mxu0
      %v476 = vxor.u32 %v473, 2147483648
      %v477 = vmul.f32 %v476, 1.442695
      %v478 = vpow.pop %v477
      %v479 = vadd.f32 %v478, 1.0
      %v480 = vrcp.pop %v479
      %v481 = vmul.f32 %v479, %v480
      %v482 = vsub.f32 1.0, %v481
      %v483 = vmul.f32 %v480, %v482
      %v484 = vadd.f32 %v480, %v483
      %vm485 = vweird.f32 %v479
      %vm486 = vweird.f32 %v480
      %vm487 = vmor %vm485, %vm486
      %v488 = vsel %vm487, %v480, %v484
      %v489 = vand.u32 2147483647, %v479
      %vm490 = vcmp.eq.f32.partialorder %v489, 8.507059e+37
      %v491 = vand.u32 %v479, 2147483648
      %v492 = vor.u32 1.1754944e-38, %v491
      %v493 = vsel %vm490, %v492, %v488
      %v494 = vmul.f32 1.0, %v493
      %496 = vrot.lane.b32.xlu0 %v414, 112
      %v497 = vpop.permute.xlu0 %496
      %v499 = vsel %vm425, %v497, 0
      %501 = vmatpush.bf16.msra.mxu0 0
      %502 = vmatpush.bf16.msra.mxu0 0
      %503 = vmatpush.bf16.msra.mxu0 0
      %504 = vmatpush.bf16.msra.mxu0 0
      %505 = vmatpush.bf16.msra.mxu0 0
      %506 = vmatpush.bf16.msra.mxu0 0
      %507 = vmatpush.bf16.msra.mxu0 0
      %508 = vmatpush.bf16.msra.mxu0 %v423
      %509 = vmatmul.bf16.gmra.mxu0 %v499
      %v510 = vpop.f32.mrf.mxu0
      %v511 = vadd.f32 %v417, %v510
      %v512 = vpop.f32.mrf.mxu0
      %513 = vdwg.mxu0
      %v514 = vmax.f32 %v511, 0.0
      %v515 = vpack.c.bf16 %v514, %v514
      %v517 = vsel %vm362, %v515, 0
      %519 = vmatpush.bf16.msra.mxu0 0
      %520 = vmatpush.bf16.msra.mxu0 0
      %521 = vmatpush.bf16.msra.mxu0 0
      %522 = vmatpush.bf16.msra.mxu0 0
      %523 = vmatpush.bf16.msra.mxu0 0
      %524 = vmatpush.bf16.msra.mxu0 0
      %525 = vmatpush.bf16.msra.mxu0 %v457
      %526 = vmatpush.bf16.msra.mxu0 %v456
      %527 = vmatmul.bf16.gmra.mxu0 %v517
      %v528 = vpop.f32.mrf.mxu0
      %v529 = vadd.f32 %v446, %v528
      %v530 = vpop.f32.mrf.mxu0
      %531 = vdwg.mxu0
      %v532 = vxor.u32 %v529, 2147483648
      %v533 = vmul.f32 %v532, 1.442695
      %v534 = vpow.pop %v533
      %v535 = vadd.f32 %v534, 1.0
      %v536 = vrcp.pop %v535
      %v537 = vmul.f32 %v535, %v536
      %v538 = vsub.f32 1.0, %v537
      %v539 = vmul.f32 %v536, %v538
      %v540 = vadd.f32 %v536, %v539
      %vm541 = vweird.f32 %v535
      %vm542 = vweird.f32 %v536
      %vm543 = vmor %vm541, %vm542
      %v544 = vsel %vm543, %v536, %v540
      %v545 = vand.u32 2147483647, %v535
      %vm546 = vcmp.eq.f32.partialorder %v545, 8.507059e+37
      %v547 = vand.u32 %v535, 2147483648
      %v548 = vor.u32 1.1754944e-38, %v547
      %v549 = vsel %vm546, %v548, %v544
      %v550 = vmul.f32 1.0, %v549
      %551 = vrot.lane.b32.xlu0 %v414, 96
      %v552 = vpop.permute.xlu0 %551
      %v554 = vsel %vm425, %v552, 0
      %556 = vmatpush.bf16.msra.mxu0 0
      %557 = vmatpush.bf16.msra.mxu0 0
      %558 = vmatpush.bf16.msra.mxu0 0
      %559 = vmatpush.bf16.msra.mxu0 0
      %560 = vmatpush.bf16.msra.mxu0 0
      %561 = vmatpush.bf16.msra.mxu0 0
      %562 = vmatpush.bf16.msra.mxu0 0
      %563 = vmatpush.bf16.msra.mxu0 %v423
      %564 = vmatmul.bf16.gmra.mxu0 %v554
      %v565 = vpop.f32.mrf.mxu0
      %v566 = vadd.f32 %v417, %v565
      %v567 = vpop.f32.mrf.mxu0
      %568 = vdwg.mxu0
      %v569 = vmax.f32 %v566, 0.0
      %v570 = vpack.c.bf16 %v569, %v569
      %v572 = vsel %vm362, %v570, 0
      %574 = vmatpush.bf16.msra.mxu0 0
      %575 = vmatpush.bf16.msra.mxu0 0
      %576 = vmatpush.bf16.msra.mxu0 0
      %577 = vmatpush.bf16.msra.mxu0 0
      %578 = vmatpush.bf16.msra.mxu0 0
      %579 = vmatpush.bf16.msra.mxu0 0
      %580 = vmatpush.bf16.msra.mxu0 %v457
      %581 = vmatpush.bf16.msra.mxu0 %v456
      %582 = vmatmul.bf16.gmra.mxu0 %v572
      %v583 = vpop.f32.mrf.mxu0
      %v584 = vadd.f32 %v446, %v583
      %v585 = vpop.f32.mrf.mxu0
      %586 = vdwg.mxu0
      %v587 = vxor.u32 %v584, 2147483648
      %v588 = vmul.f32 %v587, 1.442695
      %v589 = vpow.pop %v588
      %v590 = vadd.f32 %v589, 1.0
      %v591 = vrcp.pop %v590
      %v592 = vmul.f32 %v590, %v591
      %v593 = vsub.f32 1.0, %v592
      %v594 = vmul.f32 %v591, %v593
      %v595 = vadd.f32 %v591, %v594
      %vm596 = vweird.f32 %v590
      %vm597 = vweird.f32 %v591
      %vm598 = vmor %vm596, %vm597
      %v599 = vsel %vm598, %v591, %v595
      %v600 = vand.u32 2147483647, %v590
      %vm601 = vcmp.eq.f32.partialorder %v600, 8.507059e+37
      %v602 = vand.u32 %v590, 2147483648
      %v603 = vor.u32 1.1754944e-38, %v602
      %v604 = vsel %vm601, %v603, %v599
      %v605 = vmul.f32 1.0, %v604
      %606 = vrot.lane.b32.xlu0 %v414, 80
      %v607 = vpop.permute.xlu0 %606
      %v609 = vsel %vm425, %v607, 0
      %611 = vmatpush.bf16.msra.mxu0 0
      %612 = vmatpush.bf16.msra.mxu0 0
      %613 = vmatpush.bf16.msra.mxu0 0
      %614 = vmatpush.bf16.msra.mxu0 0
      %615 = vmatpush.bf16.msra.mxu0 0
      %616 = vmatpush.bf16.msra.mxu0 0
      %617 = vmatpush.bf16.msra.mxu0 0
      %618 = vmatpush.bf16.msra.mxu0 %v423
      %619 = vmatmul.bf16.gmra.mxu0 %v609
      %v620 = vpop.f32.mrf.mxu0
      %v621 = vadd.f32 %v417, %v620
      %v622 = vpop.f32.mrf.mxu0
      %623 = vdwg.mxu0
      %v624 = vmax.f32 %v621, 0.0
      %v625 = vpack.c.bf16 %v624, %v624
      %v627 = vsel %vm362, %v625, 0
      %629 = vmatpush.bf16.msra.mxu0 0
      %630 = vmatpush.bf16.msra.mxu0 0
      %631 = vmatpush.bf16.msra.mxu0 0
      %632 = vmatpush.bf16.msra.mxu0 0
      %633 = vmatpush.bf16.msra.mxu0 0
      %634 = vmatpush.bf16.msra.mxu0 0
      %635 = vmatpush.bf16.msra.mxu0 %v457
      %636 = vmatpush.bf16.msra.mxu0 %v456
      %637 = vmatmul.bf16.gmra.mxu0 %v627
      %v638 = vpop.f32.mrf.mxu0
      %v639 = vadd.f32 %v446, %v638
      %v640 = vpop.f32.mrf.mxu0
      %641 = vdwg.mxu0
      %v642 = vxor.u32 %v639, 2147483648
      %v643 = vmul.f32 %v642, 1.442695
      %v644 = vpow.pop %v643
      %v645 = vadd.f32 %v644, 1.0
      %v646 = vrcp.pop %v645
      %v647 = vmul.f32 %v645, %v646
      %v648 = vsub.f32 1.0, %v647
      %v649 = vmul.f32 %v646, %v648
      %v650 = vadd.f32 %v646, %v649
      %vm651 = vweird.f32 %v645
      %vm652 = vweird.f32 %v646
      %vm653 = vmor %vm651, %vm652
      %v654 = vsel %vm653, %v646, %v650
      %v655 = vand.u32 2147483647, %v645
      %vm656 = vcmp.eq.f32.partialorder %v655, 8.507059e+37
      %v657 = vand.u32 %v645, 2147483648
      %v658 = vor.u32 1.1754944e-38, %v657
      %v659 = vsel %vm656, %v658, %v654
      %v660 = vmul.f32 1.0, %v659
      %662 = vrot.lane.b32.xlu0 %v380, 96
      %v663 = vpop.permute.xlu0 %662
      %v665 = vsel %vm362, %v663, 0
      %667 = vmatpush.bf16.msra.mxu0 0
      %668 = vmatpush.bf16.msra.mxu0 0
      %669 = vmatpush.bf16.msra.mxu0 0
      %670 = vmatpush.bf16.msra.mxu0 0
      %671 = vmatpush.bf16.msra.mxu0 0
      %672 = vmatpush.bf16.msra.mxu0 0
      %673 = vmatpush.bf16.msra.mxu0 %v394
      %674 = vmatpush.bf16.msra.mxu0 %v393
      %675 = vmatmul.bf16.gmra.mxu0 %v665
      %v676 = vpop.f32.mrf.mxu0
      %v677 = vadd.f32 %v383, %v676
      %v678 = vpop.f32.mrf.mxu0
      %679 = vdwg.mxu0
      %v680 = vmax.f32 %v677, 0.0
      %v681 = vpack.c.bf16 %v680, %v680
      %v683 = vsel %vm425, %v681, 0
      %685 = vmatpush.bf16.msra.mxu0 0
      %686 = vmatpush.bf16.msra.mxu0 0
      %687 = vmatpush.bf16.msra.mxu0 0
      %688 = vmatpush.bf16.msra.mxu0 0
      %689 = vmatpush.bf16.msra.mxu0 0
      %690 = vmatpush.bf16.msra.mxu0 0
      %691 = vmatpush.bf16.msra.mxu0 0
      %692 = vmatpush.bf16.msra.mxu0 %v423
      %693 = vmatmul.bf16.gmra.mxu0 %v683
      %v694 = vpop.f32.mrf.mxu0
      %v695 = vadd.f32 %v417, %v694
      %v696 = vpop.f32.mrf.mxu0
      %697 = vdwg.mxu0
      %v698 = vmax.f32 %v695, 0.0
      %v699 = vpack.c.bf16 %v698, %v698
      %v701 = vsel %vm362, %v699, 0
      %703 = vmatpush.bf16.msra.mxu0 0
      %704 = vmatpush.bf16.msra.mxu0 0
      %705 = vmatpush.bf16.msra.mxu0 0
      %706 = vmatpush.bf16.msra.mxu0 0
      %707 = vmatpush.bf16.msra.mxu0 0
      %708 = vmatpush.bf16.msra.mxu0 0
      %709 = vmatpush.bf16.msra.mxu0 %v457
      %710 = vmatpush.bf16.msra.mxu0 %v456
      %711 = vmatmul.bf16.gmra.mxu0 %v701
      %v712 = vpop.f32.mrf.mxu0
      %v713 = vadd.f32 %v446, %v712
      %v714 = vpop.f32.mrf.mxu0
      %715 = vdwg.mxu0
      %v716 = vxor.u32 %v713, 2147483648
      %v717 = vmul.f32 %v716, 1.442695
      %v718 = vpow.pop %v717
      %v719 = vadd.f32 %v718, 1.0
      %v720 = vrcp.pop %v719
      %v721 = vmul.f32 %v719, %v720
      %v722 = vsub.f32 1.0, %v721
      %v723 = vmul.f32 %v720, %v722
      %v724 = vadd.f32 %v720, %v723
      %vm725 = vweird.f32 %v719
      %vm726 = vweird.f32 %v720
      %vm727 = vmor %vm725, %vm726
      %v728 = vsel %vm727, %v720, %v724
      %v729 = vand.u32 2147483647, %v719
      %vm730 = vcmp.eq.f32.partialorder %v729, 8.507059e+37
      %v731 = vand.u32 %v719, 2147483648
      %v732 = vor.u32 1.1754944e-38, %v731
      %v733 = vsel %vm730, %v732, %v728
      %v734 = vmul.f32 1.0, %v733
      %736 = vrot.lane.b32.xlu0 %v681, 112
      %v737 = vpop.permute.xlu0 %736
      %v739 = vsel %vm425, %v737, 0
      %741 = vmatpush.bf16.msra.mxu0 0
      %742 = vmatpush.bf16.msra.mxu0 0
      %743 = vmatpush.bf16.msra.mxu0 0
      %744 = vmatpush.bf16.msra.mxu0 0
      %745 = vmatpush.bf16.msra.mxu0 0
      %746 = vmatpush.bf16.msra.mxu0 0
      %747 = vmatpush.bf16.msra.mxu0 0
      %748 = vmatpush.bf16.msra.mxu0 %v423
      %749 = vmatmul.bf16.gmra.mxu0 %v739
      %v750 = vpop.f32.mrf.mxu0
      %v751 = vadd.f32 %v417, %v750
      %v752 = vpop.f32.mrf.mxu0
      %753 = vdwg.mxu0
      %v754 = vmax.f32 %v751, 0.0
      %v755 = vpack.c.bf16 %v754, %v754
      %v757 = vsel %vm362, %v755, 0
      %759 = vmatpush.bf16.msra.mxu0 0
      %760 = vmatpush.bf16.msra.mxu0 0
      %761 = vmatpush.bf16.msra.mxu0 0
      %762 = vmatpush.bf16.msra.mxu0 0
      %763 = vmatpush.bf16.msra.mxu0 0
      %764 = vmatpush.bf16.msra.mxu0 0
      %765 = vmatpush.bf16.msra.mxu0 %v457
      %766 = vmatpush.bf16.msra.mxu0 %v456
      %767 = vmatmul.bf16.gmra.mxu0 %v757
      %v768 = vpop.f32.mrf.mxu0
      %v769 = vadd.f32 %v446, %v768
      %v770 = vpop.f32.mrf.mxu0
      %771 = vdwg.mxu0
      %v772 = vxor.u32 %v769, 2147483648
      %v773 = vmul.f32 %v772, 1.442695
      %v774 = vpow.pop %v773
      %v775 = vadd.f32 %v774, 1.0
      %v776 = vrcp.pop %v775
      %v777 = vmul.f32 %v775, %v776
      %v778 = vsub.f32 1.0, %v777
      %v779 = vmul.f32 %v776, %v778
      %v780 = vadd.f32 %v776, %v779
      %vm781 = vweird.f32 %v775
      %vm782 = vweird.f32 %v776
      %vm783 = vmor %vm781, %vm782
      %v784 = vsel %vm783, %v776, %v780
      %v785 = vand.u32 2147483647, %v775
      %vm786 = vcmp.eq.f32.partialorder %v785, 8.507059e+37
      %v787 = vand.u32 %v775, 2147483648
      %v788 = vor.u32 1.1754944e-38, %v787
      %v789 = vsel %vm786, %v788, %v784
      %v790 = vmul.f32 1.0, %v789
      %791 = vrot.lane.b32.xlu0 %v681, 96
      %v792 = vpop.permute.xlu0 %791
      %v794 = vsel %vm425, %v792, 0
      %796 = vmatpush.bf16.msra.mxu0 0
      %797 = vmatpush.bf16.msra.mxu0 0
      %798 = vmatpush.bf16.msra.mxu0 0
      %799 = vmatpush.bf16.msra.mxu0 0
      %800 = vmatpush.bf16.msra.mxu0 0
      %801 = vmatpush.bf16.msra.mxu0 0
      %802 = vmatpush.bf16.msra.mxu0 0
      %803 = vmatpush.bf16.msra.mxu0 %v423
      %804 = vmatmul.bf16.gmra.mxu0 %v794
      %v805 = vpop.f32.mrf.mxu0
      %v806 = vadd.f32 %v417, %v805
      %v807 = vpop.f32.mrf.mxu0
      %808 = vdwg.mxu0
      %v809 = vmax.f32 %v806, 0.0
      %v810 = vpack.c.bf16 %v809, %v809
      %v812 = vsel %vm362, %v810, 0
      %814 = vmatpush.bf16.msra.mxu0 0
      %815 = vmatpush.bf16.msra.mxu0 0
      %816 = vmatpush.bf16.msra.mxu0 0
      %817 = vmatpush.bf16.msra.mxu0 0
      %818 = vmatpush.bf16.msra.mxu0 0
      %819 = vmatpush.bf16.msra.mxu0 0
      %820 = vmatpush.bf16.msra.mxu0 %v457
      %821 = vmatpush.bf16.msra.mxu0 %v456
      %822 = vmatmul.bf16.gmra.mxu0 %v812
      %v823 = vpop.f32.mrf.mxu0
      %v824 = vadd.f32 %v446, %v823
      %v825 = vpop.f32.mrf.mxu0
      %826 = vdwg.mxu0
      %v827 = vxor.u32 %v824, 2147483648
      %v828 = vmul.f32 %v827, 1.442695
      %v829 = vpow.pop %v828
      %v830 = vadd.f32 %v829, 1.0
      %v831 = vrcp.pop %v830
      %v832 = vmul.f32 %v830, %v831
      %v833 = vsub.f32 1.0, %v832
      %v834 = vmul.f32 %v831, %v833
      %v835 = vadd.f32 %v831, %v834
      %vm836 = vweird.f32 %v830
      %vm837 = vweird.f32 %v831
      %vm838 = vmor %vm836, %vm837
      %v839 = vsel %vm838, %v831, %v835
      %v840 = vand.u32 2147483647, %v830
      %vm841 = vcmp.eq.f32.partialorder %v840, 8.507059e+37
      %v842 = vand.u32 %v830, 2147483648
      %v843 = vor.u32 1.1754944e-38, %v842
      %v844 = vsel %vm841, %v843, %v839
      %v845 = vmul.f32 1.0, %v844
      %846 = vrot.lane.b32.xlu0 %v681, 80
      %v847 = vpop.permute.xlu0 %846
      %v849 = vsel %vm425, %v847, 0
      %851 = vmatpush.bf16.msra.mxu0 0
      %852 = vmatpush.bf16.msra.mxu0 0
      %853 = vmatpush.bf16.msra.mxu0 0
      %854 = vmatpush.bf16.msra.mxu0 0
      %855 = vmatpush.bf16.msra.mxu0 0
      %856 = vmatpush.bf16.msra.mxu0 0
      %857 = vmatpush.bf16.msra.mxu0 0
      %858 = vmatpush.bf16.msra.mxu0 %v423
      %859 = vmatmul.bf16.gmra.mxu0 %v849
      %v860 = vpop.f32.mrf.mxu0
      %v861 = vadd.f32 %v417, %v860
      %v862 = vpop.f32.mrf.mxu0
      %863 = vdwg.mxu0
      %v864 = vmax.f32 %v861, 0.0
      %v865 = vpack.c.bf16 %v864, %v864
      %v867 = vsel %vm362, %v865, 0
      %869 = vmatpush.bf16.msra.mxu0 0
      %870 = vmatpush.bf16.msra.mxu0 0
      %871 = vmatpush.bf16.msra.mxu0 0
      %872 = vmatpush.bf16.msra.mxu0 0
      %873 = vmatpush.bf16.msra.mxu0 0
      %874 = vmatpush.bf16.msra.mxu0 0
      %875 = vmatpush.bf16.msra.mxu0 %v457
      %876 = vmatpush.bf16.msra.mxu0 %v456
      %877 = vmatmul.bf16.gmra.mxu0 %v867
      %v878 = vpop.f32.mrf.mxu0
      %v879 = vadd.f32 %v446, %v878
      %v880 = vpop.f32.mrf.mxu0
      %881 = vdwg.mxu0
      %v882 = vxor.u32 %v879, 2147483648
      %v883 = vmul.f32 %v882, 1.442695
      %v884 = vpow.pop %v883
      %v885 = vadd.f32 %v884, 1.0
      %v886 = vrcp.pop %v885
      %v887 = vmul.f32 %v885, %v886
      %v888 = vsub.f32 1.0, %v887
      %v889 = vmul.f32 %v886, %v888
      %v890 = vadd.f32 %v886, %v889
      %vm891 = vweird.f32 %v885
      %vm892 = vweird.f32 %v886
      %vm893 = vmor %vm891, %vm892
      %v894 = vsel %vm893, %v886, %v890
      %v895 = vand.u32 2147483647, %v885
      %vm896 = vcmp.eq.f32.partialorder %v895, 8.507059e+37
      %v897 = vand.u32 %v885, 2147483648
      %v898 = vor.u32 1.1754944e-38, %v897
      %v899 = vsel %vm896, %v898, %v894
      %v900 = vmul.f32 1.0, %v899
      %901 = vrot.lane.b32.xlu0 %v380, 64
      %v902 = vpop.permute.xlu0 %901
      %v904 = vsel %vm362, %v902, 0
      %906 = vmatpush.bf16.msra.mxu0 0
      %907 = vmatpush.bf16.msra.mxu0 0
      %908 = vmatpush.bf16.msra.mxu0 0
      %909 = vmatpush.bf16.msra.mxu0 0
      %910 = vmatpush.bf16.msra.mxu0 0
      %911 = vmatpush.bf16.msra.mxu0 0
      %912 = vmatpush.bf16.msra.mxu0 %v394
      %913 = vmatpush.bf16.msra.mxu0 %v393
      %914 = vmatmul.bf16.gmra.mxu0 %v904
      %v915 = vpop.f32.mrf.mxu0
      %v916 = vadd.f32 %v383, %v915
      %v917 = vpop.f32.mrf.mxu0
      %918 = vdwg.mxu0
      %v919 = vmax.f32 %v916, 0.0
      %v920 = vpack.c.bf16 %v919, %v919
      %v922 = vsel %vm425, %v920, 0
      %924 = vmatpush.bf16.msra.mxu0 0
      %925 = vmatpush.bf16.msra.mxu0 0
      %926 = vmatpush.bf16.msra.mxu0 0
      %927 = vmatpush.bf16.msra.mxu0 0
      %928 = vmatpush.bf16.msra.mxu0 0
      %929 = vmatpush.bf16.msra.mxu0 0
      %930 = vmatpush.bf16.msra.mxu0 0
      %931 = vmatpush.bf16.msra.mxu0 %v423
      %932 = vmatmul.bf16.gmra.mxu0 %v922
      %v933 = vpop.f32.mrf.mxu0
      %v934 = vadd.f32 %v417, %v933
      %v935 = vpop.f32.mrf.mxu0
      %936 = vdwg.mxu0
      %v937 = vmax.f32 %v934, 0.0
      %v938 = vpack.c.bf16 %v937, %v937
      %v940 = vsel %vm362, %v938, 0
      %942 = vmatpush.bf16.msra.mxu0 0
      %943 = vmatpush.bf16.msra.mxu0 0
      %944 = vmatpush.bf16.msra.mxu0 0
      %945 = vmatpush.bf16.msra.mxu0 0
      %946 = vmatpush.bf16.msra.mxu0 0
      %947 = vmatpush.bf16.msra.mxu0 0
      %948 = vmatpush.bf16.msra.mxu0 %v457
      %949 = vmatpush.bf16.msra.mxu0 %v456
      %950 = vmatmul.bf16.gmra.mxu0 %v940
      %v951 = vpop.f32.mrf.mxu0
      %v952 = vadd.f32 %v446, %v951
      %v953 = vpop.f32.mrf.mxu0
      %954 = vdwg.mxu0
      %v955 = vxor.u32 %v952, 2147483648
      %v956 = vmul.f32 %v955, 1.442695
      %v957 = vpow.pop %v956
      %v958 = vadd.f32 %v957, 1.0
      %v959 = vrcp.pop %v958
      %v960 = vmul.f32 %v958, %v959
      %v961 = vsub.f32 1.0, %v960
      %v962 = vmul.f32 %v959, %v961
      %v963 = vadd.f32 %v959, %v962
      %vm964 = vweird.f32 %v958
      %vm965 = vweird.f32 %v959
      %vm966 = vmor %vm964, %vm965
      %v967 = vsel %vm966, %v959, %v963
      %v968 = vand.u32 2147483647, %v958
      %vm969 = vcmp.eq.f32.partialorder %v968, 8.507059e+37
      %v970 = vand.u32 %v958, 2147483648
      %v971 = vor.u32 1.1754944e-38, %v970
      %v972 = vsel %vm969, %v971, %v967
      %v973 = vmul.f32 1.0, %v972
      %975 = vrot.lane.b32.xlu0 %v920, 112
      %v976 = vpop.permute.xlu0 %975
      %v978 = vsel %vm425, %v976, 0
      %980 = vmatpush.bf16.msra.mxu0 0
      %981 = vmatpush.bf16.msra.mxu0 0
      %982 = vmatpush.bf16.msra.mxu0 0
      %983 = vmatpush.bf16.msra.mxu0 0
      %984 = vmatpush.bf16.msra.mxu0 0
      %985 = vmatpush.bf16.msra.mxu0 0
      %986 = vmatpush.bf16.msra.mxu0 0
      %987 = vmatpush.bf16.msra.mxu0 %v423
      %988 = vmatmul.bf16.gmra.mxu0 %v978
      %v989 = vpop.f32.mrf.mxu0
      %v990 = vadd.f32 %v417, %v989
      %v991 = vpop.f32.mrf.mxu0
      %992 = vdwg.mxu0
      %v993 = vmax.f32 %v990, 0.0
      %v994 = vpack.c.bf16 %v993, %v993
      %v996 = vsel %vm362, %v994, 0
      %998 = vmatpush.bf16.msra.mxu0 0
      %999 = vmatpush.bf16.msra.mxu0 0
      %1000 = vmatpush.bf16.msra.mxu0 0
      %1001 = vmatpush.bf16.msra.mxu0 0
      %1002 = vmatpush.bf16.msra.mxu0 0
      %1003 = vmatpush.bf16.msra.mxu0 0
      %1004 = vmatpush.bf16.msra.mxu0 %v457
      %1005 = vmatpush.bf16.msra.mxu0 %v456
      %1006 = vmatmul.bf16.gmra.mxu0 %v996
      %v1007 = vpop.f32.mrf.mxu0
      %v1008 = vadd.f32 %v446, %v1007
      %v1009 = vpop.f32.mrf.mxu0
      %1010 = vdwg.mxu0
      %v1011 = vxor.u32 %v1008, 2147483648
      %v1012 = vmul.f32 %v1011, 1.442695
      %v1013 = vpow.pop %v1012
      %v1014 = vadd.f32 %v1013, 1.0
      %v1015 = vrcp.pop %v1014
      %v1016 = vmul.f32 %v1014, %v1015
      %v1017 = vsub.f32 1.0, %v1016
      %v1018 = vmul.f32 %v1015, %v1017
      %v1019 = vadd.f32 %v1015, %v1018
      %vm1020 = vweird.f32 %v1014
      %vm1021 = vweird.f32 %v1015
      %vm1022 = vmor %vm1020, %vm1021
      %v1023 = vsel %vm1022, %v1015, %v1019
      %v1024 = vand.u32 2147483647, %v1014
      %vm1025 = vcmp.eq.f32.partialorder %v1024, 8.507059e+37
      %v1026 = vand.u32 %v1014, 2147483648
      %v1027 = vor.u32 1.1754944e-38, %v1026
      %v1028 = vsel %vm1025, %v1027, %v1023
      %v1029 = vmul.f32 1.0, %v1028
      %1030 = vrot.lane.b32.xlu0 %v920, 96
      %v1031 = vpop.permute.xlu0 %1030
      %v1033 = vsel %vm425, %v1031, 0
      %1035 = vmatpush.bf16.msra.mxu0 0
      %1036 = vmatpush.bf16.msra.mxu0 0
      %1037 = vmatpush.bf16.msra.mxu0 0
      %1038 = vmatpush.bf16.msra.mxu0 0
      %1039 = vmatpush.bf16.msra.mxu0 0
      %1040 = vmatpush.bf16.msra.mxu0 0
      %1041 = vmatpush.bf16.msra.mxu0 0
      %1042 = vmatpush.bf16.msra.mxu0 %v423
      %1043 = vmatmul.bf16.gmra.mxu0 %v1033
      %v1044 = vpop.f32.mrf.mxu0
      %v1045 = vadd.f32 %v417, %v1044
      %v1046 = vpop.f32.mrf.mxu0
      %1047 = vdwg.mxu0
      %v1048 = vmax.f32 %v1045, 0.0
      %v1049 = vpack.c.bf16 %v1048, %v1048
      %v1051 = vsel %vm362, %v1049, 0
      %1053 = vmatpush.bf16.msra.mxu0 0
      %1054 = vmatpush.bf16.msra.mxu0 0
      %1055 = vmatpush.bf16.msra.mxu0 0
      %1056 = vmatpush.bf16.msra.mxu0 0
      %1057 = vmatpush.bf16.msra.mxu0 0
      %1058 = vmatpush.bf16.msra.mxu0 0
      %1059 = vmatpush.bf16.msra.mxu0 %v457
      %1060 = vmatpush.bf16.msra.mxu0 %v456
      %1061 = vmatmul.bf16.gmra.mxu0 %v1051
      %v1062 = vpop.f32.mrf.mxu0
      %v1063 = vadd.f32 %v446, %v1062
      %v1064 = vpop.f32.mrf.mxu0
      %1065 = vdwg.mxu0
      %v1066 = vxor.u32 %v1063, 2147483648
      %v1067 = vmul.f32 %v1066, 1.442695
      %v1068 = vpow.pop %v1067
      %v1069 = vadd.f32 %v1068, 1.0
      %v1070 = vrcp.pop %v1069
      %v1071 = vmul.f32 %v1069, %v1070
      %v1072 = vsub.f32 1.0, %v1071
      %v1073 = vmul.f32 %v1070, %v1072
      %v1074 = vadd.f32 %v1070, %v1073
      %vm1075 = vweird.f32 %v1069
      %vm1076 = vweird.f32 %v1070
      %vm1077 = vmor %vm1075, %vm1076
      %v1078 = vsel %vm1077, %v1070, %v1074
      %v1079 = vand.u32 2147483647, %v1069
      %vm1080 = vcmp.eq.f32.partialorder %v1079, 8.507059e+37
      %v1081 = vand.u32 %v1069, 2147483648
      %v1082 = vor.u32 1.1754944e-38, %v1081
      %v1083 = vsel %vm1080, %v1082, %v1078
      %v1084 = vmul.f32 1.0, %v1083
      %1085 = vrot.lane.b32.xlu0 %v920, 80
      %v1086 = vpop.permute.xlu0 %1085
      %v1088 = vsel %vm425, %v1086, 0
      %1090 = vmatpush.bf16.msra.mxu0 0
      %1091 = vmatpush.bf16.msra.mxu0 0
      %1092 = vmatpush.bf16.msra.mxu0 0
      %1093 = vmatpush.bf16.msra.mxu0 0
      %1094 = vmatpush.bf16.msra.mxu0 0
      %1095 = vmatpush.bf16.msra.mxu0 0
      %1096 = vmatpush.bf16.msra.mxu0 0
      %1097 = vmatpush.bf16.msra.mxu0 %v423
      %1098 = vmatmul.bf16.gmra.mxu0 %v1088
      %v1099 = vpop.f32.mrf.mxu0
      %v1100 = vadd.f32 %v417, %v1099
      %v1101 = vpop.f32.mrf.mxu0
      %1102 = vdwg.mxu0
      %v1103 = vmax.f32 %v1100, 0.0
      %v1104 = vpack.c.bf16 %v1103, %v1103
      %v1106 = vsel %vm362, %v1104, 0
      %1108 = vmatpush.bf16.msra.mxu0 0
      %1109 = vmatpush.bf16.msra.mxu0 0
      %1110 = vmatpush.bf16.msra.mxu0 0
      %1111 = vmatpush.bf16.msra.mxu0 0
      %1112 = vmatpush.bf16.msra.mxu0 0
      %1113 = vmatpush.bf16.msra.mxu0 0
      %1114 = vmatpush.bf16.msra.mxu0 %v457
      %1115 = vmatpush.bf16.msra.mxu0 %v456
      %1116 = vmatmul.bf16.gmra.mxu0 %v1106
      %v1117 = vpop.f32.mrf.mxu0
      %v1118 = vadd.f32 %v446, %v1117
      %v1119 = vpop.f32.mrf.mxu0
      %1120 = vdwg.mxu0
      %v1121 = vxor.u32 %v1118, 2147483648
      %v1122 = vmul.f32 %v1121, 1.442695
      %v1123 = vpow.pop %v1122
      %v1124 = vadd.f32 %v1123, 1.0
      %v1125 = vrcp.pop %v1124
      %v1126 = vmul.f32 %v1124, %v1125
      %v1127 = vsub.f32 1.0, %v1126
      %v1128 = vmul.f32 %v1125, %v1127
      %v1129 = vadd.f32 %v1125, %v1128
      %vm1130 = vweird.f32 %v1124
      %vm1131 = vweird.f32 %v1125
      %vm1132 = vmor %vm1130, %vm1131
      %v1133 = vsel %vm1132, %v1125, %v1129
      %v1134 = vand.u32 2147483647, %v1124
      %vm1135 = vcmp.eq.f32.partialorder %v1134, 8.507059e+37
      %v1136 = vand.u32 %v1124, 2147483648
      %v1137 = vor.u32 1.1754944e-38, %v1136
      %v1138 = vsel %vm1135, %v1137, %v1133
      %v1139 = vmul.f32 1.0, %v1138
      %1140 = vrot.lane.b32.xlu0 %v380, 32
      %v1141 = vpop.permute.xlu0 %1140
      %v1143 = vsel %vm362, %v1141, 0
      %1145 = vmatpush.bf16.msra.mxu0 0
      %1146 = vmatpush.bf16.msra.mxu0 0
      %1147 = vmatpush.bf16.msra.mxu0 0
      %1148 = vmatpush.bf16.msra.mxu0 0
      %1149 = vmatpush.bf16.msra.mxu0 0
      %1150 = vmatpush.bf16.msra.mxu0 0
      %1151 = vmatpush.bf16.msra.mxu0 %v394
      %1152 = vmatpush.bf16.msra.mxu0 %v393
      %1153 = vmatmul.bf16.gmra.mxu0 %v1143
      %v1154 = vpop.f32.mrf.mxu0
      %v1155 = vadd.f32 %v383, %v1154
      %v1156 = vpop.f32.mrf.mxu0
      %1157 = vdwg.mxu0
      %v1158 = vmax.f32 %v1155, 0.0
      %v1159 = vpack.c.bf16 %v1158, %v1158
      %v1161 = vsel %vm425, %v1159, 0
      %1163 = vmatpush.bf16.msra.mxu0 0
      %1164 = vmatpush.bf16.msra.mxu0 0
      %1165 = vmatpush.bf16.msra.mxu0 0
      %1166 = vmatpush.bf16.msra.mxu0 0
      %1167 = vmatpush.bf16.msra.mxu0 0
      %1168 = vmatpush.bf16.msra.mxu0 0
      %1169 = vmatpush.bf16.msra.mxu0 0
      %1170 = vmatpush.bf16.msra.mxu0 %v423
      %1171 = vmatmul.bf16.gmra.mxu0 %v1161
      %v1172 = vpop.f32.mrf.mxu0
      %v1173 = vadd.f32 %v417, %v1172
      %v1174 = vpop.f32.mrf.mxu0
      %1175 = vdwg.mxu0
      %v1176 = vmax.f32 %v1173, 0.0
      %v1177 = vpack.c.bf16 %v1176, %v1176
      %v1179 = vsel %vm362, %v1177, 0
      %1181 = vmatpush.bf16.msra.mxu0 0
      %1182 = vmatpush.bf16.msra.mxu0 0
      %1183 = vmatpush.bf16.msra.mxu0 0
      %1184 = vmatpush.bf16.msra.mxu0 0
      %1185 = vmatpush.bf16.msra.mxu0 0
      %1186 = vmatpush.bf16.msra.mxu0 0
      %1187 = vmatpush.bf16.msra.mxu0 %v457
      %1188 = vmatpush.bf16.msra.mxu0 %v456
      %1189 = vmatmul.bf16.gmra.mxu0 %v1179
      %v1190 = vpop.f32.mrf.mxu0
      %v1191 = vadd.f32 %v446, %v1190
      %v1192 = vpop.f32.mrf.mxu0
      %1193 = vdwg.mxu0
      %v1194 = vxor.u32 %v1191, 2147483648
      %v1195 = vmul.f32 %v1194, 1.442695
      %v1196 = vpow.pop %v1195
      %v1197 = vadd.f32 %v1196, 1.0
      %v1198 = vrcp.pop %v1197
      %v1199 = vmul.f32 %v1197, %v1198
      %v1200 = vsub.f32 1.0, %v1199
      %v1201 = vmul.f32 %v1198, %v1200
      %v1202 = vadd.f32 %v1198, %v1201
      %vm1203 = vweird.f32 %v1197
      %vm1204 = vweird.f32 %v1198
      %vm1205 = vmor %vm1203, %vm1204
      %v1206 = vsel %vm1205, %v1198, %v1202
      %v1207 = vand.u32 2147483647, %v1197
      %vm1208 = vcmp.eq.f32.partialorder %v1207, 8.507059e+37
      %v1209 = vand.u32 %v1197, 2147483648
      %v1210 = vor.u32 1.1754944e-38, %v1209
      %v1211 = vsel %vm1208, %v1210, %v1206
      %v1212 = vmul.f32 1.0, %v1211
      %1214 = vrot.lane.b32.xlu0 %v1159, 112
      %v1215 = vpop.permute.xlu0 %1214
      %v1217 = vsel %vm425, %v1215, 0
      %1219 = vmatpush.bf16.msra.mxu0 0
      %1220 = vmatpush.bf16.msra.mxu0 0
      %1221 = vmatpush.bf16.msra.mxu0 0
      %1222 = vmatpush.bf16.msra.mxu0 0
      %1223 = vmatpush.bf16.msra.mxu0 0
      %1224 = vmatpush.bf16.msra.mxu0 0
      %1225 = vmatpush.bf16.msra.mxu0 0
      %1226 = vmatpush.bf16.msra.mxu0 %v423
      %1227 = vmatmul.bf16.gmra.mxu0 %v1217
      %v1228 = vpop.f32.mrf.mxu0
      %v1229 = vadd.f32 %v417, %v1228
      %v1230 = vpop.f32.mrf.mxu0
      %1231 = vdwg.mxu0
      %v1232 = vmax.f32 %v1229, 0.0
      %v1233 = vpack.c.bf16 %v1232, %v1232
      %v1235 = vsel %vm362, %v1233, 0
      %1237 = vmatpush.bf16.msra.mxu0 0
      %1238 = vmatpush.bf16.msra.mxu0 0
      %1239 = vmatpush.bf16.msra.mxu0 0
      %1240 = vmatpush.bf16.msra.mxu0 0
      %1241 = vmatpush.bf16.msra.mxu0 0
      %1242 = vmatpush.bf16.msra.mxu0 0
      %1243 = vmatpush.bf16.msra.mxu0 %v457
      %1244 = vmatpush.bf16.msra.mxu0 %v456
      %1245 = vmatmul.bf16.gmra.mxu0 %v1235
      %v1246 = vpop.f32.mrf.mxu0
      %v1247 = vadd.f32 %v446, %v1246
      %v1248 = vpop.f32.mrf.mxu0
      %1249 = vdwg.mxu0
      %v1250 = vxor.u32 %v1247, 2147483648
      %v1251 = vmul.f32 %v1250, 1.442695
      %v1252 = vpow.pop %v1251
      %v1253 = vadd.f32 %v1252, 1.0
      %v1254 = vrcp.pop %v1253
      %v1255 = vmul.f32 %v1253, %v1254
      %v1256 = vsub.f32 1.0, %v1255
      %v1257 = vmul.f32 %v1254, %v1256
      %v1258 = vadd.f32 %v1254, %v1257
      %vm1259 = vweird.f32 %v1253
      %vm1260 = vweird.f32 %v1254
      %vm1261 = vmor %vm1259, %vm1260
      %v1262 = vsel %vm1261, %v1254, %v1258
      %v1263 = vand.u32 2147483647, %v1253
      %vm1264 = vcmp.eq.f32.partialorder %v1263, 8.507059e+37
      %v1265 = vand.u32 %v1253, 2147483648
      %v1266 = vor.u32 1.1754944e-38, %v1265
      %v1267 = vsel %vm1264, %v1266, %v1262
      %v1268 = vmul.f32 1.0, %v1267
      %1269 = vrot.lane.b32.xlu0 %v1159, 96
      %v1270 = vpop.permute.xlu0 %1269
      %v1272 = vsel %vm425, %v1270, 0
      %1274 = vmatpush.bf16.msra.mxu0 0
      %1275 = vmatpush.bf16.msra.mxu0 0
      %1276 = vmatpush.bf16.msra.mxu0 0
      %1277 = vmatpush.bf16.msra.mxu0 0
      %1278 = vmatpush.bf16.msra.mxu0 0
      %1279 = vmatpush.bf16.msra.mxu0 0
      %1280 = vmatpush.bf16.msra.mxu0 0
      %1281 = vmatpush.bf16.msra.mxu0 %v423
      %1282 = vmatmul.bf16.gmra.mxu0 %v1272
      %v1283 = vpop.f32.mrf.mxu0
      %v1284 = vadd.f32 %v417, %v1283
      %v1285 = vpop.f32.mrf.mxu0
      %1286 = vdwg.mxu0
      %v1287 = vmax.f32 %v1284, 0.0
      %v1288 = vpack.c.bf16 %v1287, %v1287
      %v1290 = vsel %vm362, %v1288, 0
      %1292 = vmatpush.bf16.msra.mxu0 0
      %1293 = vmatpush.bf16.msra.mxu0 0
      %1294 = vmatpush.bf16.msra.mxu0 0
      %1295 = vmatpush.bf16.msra.mxu0 0
      %1296 = vmatpush.bf16.msra.mxu0 0
      %1297 = vmatpush.bf16.msra.mxu0 0
      %1298 = vmatpush.bf16.msra.mxu0 %v457
      %1299 = vmatpush.bf16.msra.mxu0 %v456
      %1300 = vmatmul.bf16.gmra.mxu0 %v1290
      %v1301 = vpop.f32.mrf.mxu0
      %v1302 = vadd.f32 %v446, %v1301
      %v1303 = vpop.f32.mrf.mxu0
      %1304 = vdwg.mxu0
      %v1305 = vxor.u32 %v1302, 2147483648
      %v1306 = vmul.f32 %v1305, 1.442695
      %v1307 = vpow.pop %v1306
      %v1308 = vadd.f32 %v1307, 1.0
      %v1309 = vrcp.pop %v1308
      %v1310 = vmul.f32 %v1308, %v1309
      %v1311 = vsub.f32 1.0, %v1310
      %v1312 = vmul.f32 %v1309, %v1311
      %v1313 = vadd.f32 %v1309, %v1312
      %vm1314 = vweird.f32 %v1308
      %vm1315 = vweird.f32 %v1309
      %vm1316 = vmor %vm1314, %vm1315
      %v1317 = vsel %vm1316, %v1309, %v1313
      %v1318 = vand.u32 2147483647, %v1308
      %vm1319 = vcmp.eq.f32.partialorder %v1318, 8.507059e+37
      %v1320 = vand.u32 %v1308, 2147483648
      %v1321 = vor.u32 1.1754944e-38, %v1320
      %v1322 = vsel %vm1319, %v1321, %v1317
      %v1323 = vmul.f32 1.0, %v1322
      %1324 = vrot.lane.b32.xlu0 %v1159, 80
      %v1325 = vpop.permute.xlu0 %1324
      %v1327 = vsel %vm425, %v1325, 0
      %1329 = vmatpush.bf16.msra.mxu0 0
      %1330 = vmatpush.bf16.msra.mxu0 0
      %1331 = vmatpush.bf16.msra.mxu0 0
      %1332 = vmatpush.bf16.msra.mxu0 0
      %1333 = vmatpush.bf16.msra.mxu0 0
      %1334 = vmatpush.bf16.msra.mxu0 0
      %1335 = vmatpush.bf16.msra.mxu0 0
      %1336 = vmatpush.bf16.msra.mxu0 %v423
      %1337 = vmatmul.bf16.gmra.mxu0 %v1327
      %v1338 = vpop.f32.mrf.mxu0
      %v1339 = vadd.f32 %v417, %v1338
      %v1340 = vpop.f32.mrf.mxu0
      %1341 = vdwg.mxu0
      %v1342 = vmax.f32 %v1339, 0.0
      %v1343 = vpack.c.bf16 %v1342, %v1342
      %v1345 = vsel %vm362, %v1343, 0
      %1347 = vmatpush.bf16.msra.mxu0 0
      %1348 = vmatpush.bf16.msra.mxu0 0
      %1349 = vmatpush.bf16.msra.mxu0 0
      %1350 = vmatpush.bf16.msra.mxu0 0
      %1351 = vmatpush.bf16.msra.mxu0 0
      %1352 = vmatpush.bf16.msra.mxu0 0
      %1353 = vmatpush.bf16.msra.mxu0 %v457
      %1354 = vmatpush.bf16.msra.mxu0 %v456
      %1355 = vmatmul.bf16.gmra.mxu0 %v1345
      %v1356 = vpop.f32.mrf.mxu0
      %v1357 = vadd.f32 %v446, %v1356
      %v1358 = vpop.f32.mrf.mxu0
      %1359 = vdwg.mxu0
      %v1360 = vxor.u32 %v1357, 2147483648
      %v1361 = vmul.f32 %v1360, 1.442695
      %v1362 = vpow.pop %v1361
      %v1363 = vadd.f32 %v1362, 1.0
      %v1364 = vrcp.pop %v1363
      %v1365 = vmul.f32 %v1363, %v1364
      %v1366 = vsub.f32 1.0, %v1365
      %v1367 = vmul.f32 %v1364, %v1366
      %v1368 = vadd.f32 %v1364, %v1367
      %vm1369 = vweird.f32 %v1363
      %vm1370 = vweird.f32 %v1364
      %vm1371 = vmor %vm1369, %vm1370
      %v1372 = vsel %vm1371, %v1364, %v1368
      %v1373 = vand.u32 2147483647, %v1363
      %vm1374 = vcmp.eq.f32.partialorder %v1373, 8.507059e+37
      %v1375 = vand.u32 %v1363, 2147483648
      %v1376 = vor.u32 1.1754944e-38, %v1375
      %v1377 = vsel %vm1374, %v1376, %v1372
      %v1378 = vmul.f32 1.0, %v1377
      %1380 = vrot.lane.b32.xlu0 %v550, 12
      %v1381 = vpop.permute.xlu0 %1380
      %1384 = vrot.lane.b32.xlu0 %v605, 24
      %v1385 = vpop.permute.xlu0 %1384
      %1388 = vrot.lane.b32.xlu0 %v660, 36
      %v1389 = vpop.permute.xlu0 %1388
      %1392 = vrot.lane.b32.xlu0 %v734, 48
      %v1393 = vpop.permute.xlu0 %1392
      %1396 = vrot.lane.b32.xlu0 %v790, 60
      %v1397 = vpop.permute.xlu0 %1396
      %1400 = vrot.lane.b32.xlu0 %v845, 72
      %v1401 = vpop.permute.xlu0 %1400
      %1404 = vrot.lane.b32.xlu0 %v900, 84
      %v1405 = vpop.permute.xlu0 %1404
      %1408 = vrot.lane.b32.xlu0 %v973, 96
      %v1409 = vpop.permute.xlu0 %1408
      %1412 = vrot.lane.b32.xlu0 %v1029, 108
      %v1413 = vpop.permute.xlu0 %1412
      %1416 = vrot.lane.b32.xlu0 %v1084, 120
      %v1417 = vpop.permute.xlu0 %1416
      %1420 = vrot.lane.b32.xlu0 %v1139, 4
      %v1421 = vpop.permute.xlu0 %1420
      %1424 = vrot.lane.b32.xlu0 %v1212, 16
      %v1425 = vpop.permute.xlu0 %1424
      %1428 = vrot.lane.b32.xlu0 %v1268, 28
      %v1429 = vpop.permute.xlu0 %1428
      %1432 = vrot.lane.b32.xlu0 %v1323, 40
      %v1433 = vpop.permute.xlu0 %1432
      %1436 = vrot.lane.b32.xlu0 %v1378, 52
      %v1437 = vpop.permute.xlu0 %1436
      %vm1439 = vcmask 97280
      %v1440 = vsel %vm1439, %v494, %v1381
      %vm1441 = vcmask 195584
      %v1442 = vsel %vm1441, %v1440, %v1385
      %vm1443 = vcmask 293888
      %v1444 = vsel %vm1443, %v1442, %v1389
      %vm1445 = vcmask 392192
      %v1446 = vsel %vm1445, %v1444, %v1393
      %vm1447 = vcmask 490496
      %v1448 = vsel %vm1447, %v1446, %v1397
      %vm1449 = vcmask 588800
      %v1450 = vsel %vm1449, %v1448, %v1401
      %vm1451 = vcmask 687104
      %v1452 = vsel %vm1451, %v1450, %v1405
      %vm1453 = vcmask 785408
      %v1454 = vsel %vm1453, %v1452, %v1409
      %vm1455 = vcmask 883712
      %v1456 = vsel %vm1455, %v1454, %v1413
      %vm1457 = vcmask 982016
      %v1458 = vsel %vm1457, %v1456, %v1417
      %vm1459 = vcmask 31744
      %v1460 = vsel %vm1459, %v1417, %v1421
      %v1461 = vsel %vm425, %v1460, %v1425
      %vm1462 = vcmask 228352
      %v1463 = vsel %vm1462, %v1461, %v1429
      %vm1464 = vcmask 326656
      %v1465 = vsel %vm1464, %v1463, %v1433
      %vm1466 = vcmask 424960
      %v1467 = vsel %vm1466, %v1465, %v1437
      %v1470 = vrot.slane %v1467, 4
      %vm1471 = vcmask 1043456
      %v1472 = vsel %vm1471, %v1458, %v1470
      %vm1474 = vcmask 523268
      %vm1475 = vmor %vm1474, %vm1471
      %1476 = vst.msk [vmem:[%s329] sm:$0xff] %vm1475, %v1472
      %p1477 = scmp.lt.s32.totalorder %s20, 1
      %s1478 = scalar_select %p1477, %s20, 1
      %s1479 = smul.addr %s1478, 2
      %s1480 = smul.addr %s1479, 4
      %s1481 = scalar_lea.vmem %s9, %s1480
      // Predicated region
      $region57: #{mixture_vae_forward.3} parent=55 // pred_check
        %p1482 = pneg %p232
      $region58: #{mixture_vae_forward.3} parent=55 // pred_check_branch
        %1484 = sbr.rel (%p1482) target = $region60
      $region59: #{mixture_vae_forward.3} parent=55 // pred_region
        _
      $region60: #{mixture_vae_forward.3} parent=55 // pred_fallthru
        _
    $region56: #{mixture_vae_forward.3} parent=5 // pred_fallthru
      _
    %p1485 = scmp.le.s32.totalorder 2, %s15
    // Predicated region
    $region61: #{mixture_vae_forward.3} parent=5 // pred_check
      %p1486 = pneg %p1485
    $region62: #{mixture_vae_forward.3} parent=5 // pred_check_branch
      %1488 = sbr.rel (%p1486) target = $region64
    $region63: #{mixture_vae_forward.3} parent=5 // pred_region
      %s1489 = ssub.s32 %s15, 2
      // Predicated region
      $region65: #{mixture_vae_forward.3} parent=63 // pred_check
        %p1490 = pneg %p238
      $region66: #{mixture_vae_forward.3} parent=63 // pred_check_branch
        %1492 = sbr.rel (%p1490) target = $region68
      $region67: #{mixture_vae_forward.3} parent=63 // pred_region
        %p1493 = scmp.lt.s32.totalorder %s21, 1
        %s1494 = scalar_select %p1493, %s21, 1
        %s1495 = smul.addr %s1494, 2
        %s1496 = smul.addr %s1495, 4
        %s1497 = scalar_lea.vmem %s9, %s1496
      $region68: #{mixture_vae_forward.3} parent=63 // pred_fallthru
        _
    $region64: #{mixture_vae_forward.3} parent=5 // pred_fallthru
      _
  $region6: #{mixture_vae_forward.3} parent=0 // loop_footer
    %s19 = sadd.s32 1, %s15
  $region7: #{mixture_vae_forward.3} parent=0 // loop_footer_branch
    %14 = sbr.rel target = $region3
  $region8: #{mixture_vae_forward.3} parent=0 // loop_exit
    _

</llo_original>
